<compile_context>
chip_gen: v7x
topology: tpu7x:2x2x1
jax: 0.10.0
libtpu: 0.0.40
codegen_flags: <defaults>
</compile_context>

<pallas_src>
import jax
import jax.numpy as jnp
from jax import lax
from jax.experimental import pallas as pl
from jax.experimental.pallas import tpu as pltpu

EPS = 1e-5
VMEM_LIMIT = 32 * 1024 * 1024


def _round_up(n, m):
    return ((n + m - 1) // m) * m


def _choose_tile(n, max_tile):
    # Largest tile <= ~max_tile that is a multiple of 16 (bf16 sublane packing);
    # small inputs get a single block.
    return min(_round_up(max_tile, 16), _round_up(n, 16))


def _pad_rows(a, rows, value=0):
    pad = rows - a.shape[0]
    if pad == 0:
        return a
    cfg = [(0, pad)] + [(0, 0)] * (a.ndim - 1)
    return jnp.pad(a, cfg, constant_values=value)


# ----------------------------------------------------------------------------
# Kernel 1: per-node dual projection (hoisted first EdgeConv Linear), with the
# previous layer's BN(ReLU(.)) affine fused in front of the matmul.
#   x' = ReLU(x)*scale + shift            (identity for the first layer)
#   [r | q] = x' @ concat([Wa-Wb, Wb])    (single MXU dot)
#   r += b1                               ;  edge pre-act = r[dst] + q[src]
# r/q are emitted in bf16 (halves the HBM streams + gathers).
# ----------------------------------------------------------------------------
def node_proj(x, wcat, b1, scale, shift, *, tile_n, f1):
    n, fin = x.shape
    fuse = scale is not None

    def kernel(*refs):
        if fuse:
            x_ref, sc_ref, sh_ref, w_ref, b1_ref, r_ref, q_ref = refs
            xv = jnp.maximum(x_ref[...], 0.0) * sc_ref[...] + sh_ref[...]
        else:
            x_ref, w_ref, b1_ref, r_ref, q_ref = refs
            xv = x_ref[...]
        out = jnp.dot(xv.astype(w_ref.dtype), w_ref[...],
                      preferred_element_type=jnp.float32)
        r_ref[...] = (out[:, :f1] + b1_ref[...]).astype(r_ref.dtype)
        q_ref[...] = out[:, f1:].astype(q_ref.dtype)

    in_specs = [pl.BlockSpec((tile_n, fin), lambda i: (i, 0))]
    args = [x]
    if fuse:
        in_specs += [pl.BlockSpec((1, fin), lambda i: (0, 0)),
                     pl.BlockSpec((1, fin), lambda i: (0, 0))]
        args += [scale, shift]
    in_specs += [pl.BlockSpec((fin, 2 * f1), lambda i: (0, 0)),
                 pl.BlockSpec((1, f1), lambda i: (0, 0))]
    args += [wcat, b1]

    return pl.pallas_call(
        kernel,
        out_shape=(jax.ShapeDtypeStruct((n, f1), jnp.bfloat16),
                   jax.ShapeDtypeStruct((n, f1), jnp.bfloat16)),
        grid=(n // tile_n,),
        in_specs=in_specs,
        out_specs=(pl.BlockSpec((tile_n, f1), lambda i: (i, 0)),
                   pl.BlockSpec((tile_n, f1), lambda i: (i, 0))),
        compiler_params=pltpu.CompilerParams(
            dimension_semantics=("parallel",),
            vmem_limit_bytes=VMEM_LIMIT),
    )(*args)


# ----------------------------------------------------------------------------
# Kernel 2: per-edge tail of the EdgeConv MLP, tiled over edges.
#   h = ReLU(r[dst] + q[src]);  out = h @ W2 + b2     (bf16 in, f32 out)
# Weights / biases use constant index_maps and stay resident in VMEM.
# ----------------------------------------------------------------------------
def edge_mlp_kernel(rg_ref, qg_ref, w2_ref, b2_ref, out_ref):
    pre = rg_ref[...].astype(jnp.float32) + qg_ref[...].astype(jnp.float32)
    h = jnp.maximum(pre, 0.0).astype(w2_ref.dtype)
    out_ref[...] = (jnp.dot(h, w2_ref[...], preferred_element_type=jnp.float32)
                    + b2_ref[...])


def edge_mlp(rg, qg, w2, b2, tile_e):
    e, f1 = rg.shape
    f2 = w2.shape[1]
    cost = pl.CostEstimate(
        flops=2 * e * f1 * f2 + 3 * e * f1,
        transcendentals=0,
        bytes_accessed=2 * e * f1 * rg.dtype.itemsize + e * f2 * 4
        + f1 * f2 * w2.dtype.itemsize + f2 * 4)
    return pl.pallas_call(
        edge_mlp_kernel,
        out_shape=jax.ShapeDtypeStruct((e, f2), jnp.float32),
        grid=(e // tile_e,),
        in_specs=[pl.BlockSpec((tile_e, f1), lambda i: (i, 0)),
                  pl.BlockSpec((tile_e, f1), lambda i: (i, 0)),
                  pl.BlockSpec((f1, f2), lambda i: (0, 0)),
                  pl.BlockSpec((1, f2), lambda i: (0, 0))],
        out_specs=pl.BlockSpec((tile_e, f2), lambda i: (i, 0)),
        compiler_params=pltpu.CompilerParams(
            dimension_semantics=("parallel",),
            vmem_limit_bytes=VMEM_LIMIT),
        cost_estimate=cost,
    )(rg, qg, w2, b2)


# ----------------------------------------------------------------------------
# Kernel 3: streaming BN statistics of ReLU(x) over node rows, tiled.
# Each grid step writes its own [2, C] partial (parallel across tiles / cores);
# the tiny [T, 2, C] -> [2, C] reduce is done in XLA.
# ----------------------------------------------------------------------------
def relu_stats_kernel(x_ref, out_ref):
    x = jnp.maximum(x_ref[...], 0.0)
    s = jnp.sum(x, axis=0, keepdims=True)
    ss = jnp.sum(x * x, axis=0, keepdims=True)
    out_ref[...] = jnp.concatenate([s, ss], axis=0)[None]


def relu_stats(x, tile_n):
    n, c = x.shape
    t = n // tile_n
    parts = pl.pallas_call(
        relu_stats_kernel,
        out_shape=jax.ShapeDtypeStruct((t, 2, c), jnp.float32),
        grid=(t,),
        in_specs=[pl.BlockSpec((tile_n, c), lambda i: (i, 0))],
        out_specs=pl.BlockSpec((1, 2, c), lambda i: (i, 0, 0)),
        compiler_params=pltpu.CompilerParams(
            dimension_semantics=("parallel",),
            vmem_limit_bytes=VMEM_LIMIT),
    )(x)
    return jnp.sum(parts, axis=0)          # tiny [2, C] reduce in XLA


# ----------------------------------------------------------------------------
# Kernel 4a: global_add_pool as per-tile masked segment-sum partials, with the
# last layer's BN(ReLU(.)) affine fused in.  Parallel across node tiles.
# Kernel 4b: reduce the partials and apply bn8 (training-mode BatchNorm over
# the G graph rows) in a single small finalize step.
# ----------------------------------------------------------------------------
def pool_partials(x, scale, shift, bid, num_graphs, tile_n):
    n, c = x.shape
    t = n // tile_n
    use_dot = num_graphs > 8

    def kernel(x_ref, sc_ref, sh_ref, bid_ref, out_ref):
        y = jnp.maximum(x_ref[...], 0.0) * sc_ref[...] + sh_ref[...]
        bid = bid_ref[...]                               # [tile_n, 1] int32
        if use_dot:                                      # MXU one-hot path
            gids = lax.broadcasted_iota(jnp.int32, (y.shape[0], num_graphs), 1)
            onehot = (bid == gids).astype(jnp.float32)   # [tile_n, G]
            part = lax.dot_general(onehot, y, (((0,), (0,)), ((), ())),
                                   preferred_element_type=jnp.float32)
        else:                                            # tiny-G unrolled path
            part = jnp.concatenate(
                [jnp.sum(jnp.where(bid == gi, y, 0.0), axis=0, keepdims=True)
                 for gi in range(num_graphs)], axis=0)
        out_ref[...] = part[None]

    return pl.pallas_call(
        kernel,
        out_shape=jax.ShapeDtypeStruct((t, num_graphs, c), jnp.float32),
        grid=(t,),
        in_specs=[pl.BlockSpec((tile_n, c), lambda i: (i, 0)),
                  pl.BlockSpec((1, c), lambda i: (0, 0)),
                  pl.BlockSpec((1, c), lambda i: (0, 0)),
                  pl.BlockSpec((tile_n, 1), lambda i: (i, 0))],
        out_specs=pl.BlockSpec((1, num_graphs, c), lambda i: (i, 0, 0)),
        compiler_params=pltpu.CompilerParams(
            dimension_semantics=("parallel",),
            vmem_limit_bytes=VMEM_LIMIT),
    )(x, scale, shift, bid)


def pool_bn_kernel(part_ref, gamma_ref, beta_ref, out_ref):
    pooled = jnp.sum(part_ref[...], axis=0)              # [G, C]
    g = pooled.shape[0]
    mean = jnp.sum(pooled, axis=0, keepdims=True) / g
    diff = pooled - mean
    var = jnp.sum(diff * diff, axis=0, keepdims=True) / g
    out_ref[...] = (gamma_ref[...] * diff * lax.rsqrt(var + EPS)
                    + beta_ref[...]).astype(out_ref.dtype)


def pool_bn_finalize(partials, gamma, beta):
    t, g, c = partials.shape
    return pl.pallas_call(
        pool_bn_kernel,
        out_shape=jax.ShapeDtypeStruct((g, c), jnp.float32),
        grid=(1,),
        in_specs=[pl.BlockSpec((t, g, c), lambda i: (0, 0, 0)),
                  pl.BlockSpec((1, c), lambda i: (0, 0)),
                  pl.BlockSpec((1, c), lambda i: (0, 0))],
        out_specs=pl.BlockSpec((g, c), lambda i: (0, 0)),
        compiler_params=pltpu.CompilerParams(
            dimension_semantics=("arbitrary",)),
    )(partials, gamma, beta)


# ----------------------------------------------------------------------------
# EdgeConv (PyG: message = nn([x_i, x_j - x_i]), aggr='max' at dst) + ReLU +
# training-mode BatchNorm1d.  The BN output is *not* materialized: we return
# (agg, scale, shift) so the affine fuses into the next consumer kernel.
# ----------------------------------------------------------------------------
def edge_conv_layer(x, scale, shift, src_pad, dst_pad, n_real, e_real, n_pad,
                    has_edge, lin_params, bn_params, tile_n, tile_e):
    w1, b1, w2, b2 = lin_params
    gamma, beta = bn_params
    fin = w1.shape[0] // 2
    f1 = w1.shape[1]

    # Hoist the first Linear from E edge rows to N node rows:
    #   nn([x_i, x_j-x_i]) @ W1 + b1 = (x_i @ (Wa-Wb) + b1) + x_j @ Wb
    mm_dtype = jnp.bfloat16 if fin >= 128 else jnp.float32
    wa, wb = w1[:fin], w1[fin:]
    wcat = jnp.concatenate([wa - wb, wb], axis=1).astype(mm_dtype)

    r, q = node_proj(x, wcat, b1, scale, shift, tile_n=tile_n, f1=f1)  # bf16

    rg = r[dst_pad]                                    # x_i side (XLA gather, bf16)
    qg = q[src_pad]                                    # x_j side
    h = edge_mlp(rg, qg, w2.astype(jnp.bfloat16), b2, tile_e)          # f32 [Ep,F2]

    # TODO(synk): fuse gather + edge MLP + max-aggregation over dst-sorted edges
    # via PrefetchScalarGridSpec segment offsets so rg/qg/h never hit HBM.
    agg = jax.ops.segment_max(h[:e_real], dst_pad[:e_real], num_segments=n_pad)
    agg = jnp.where(has_edge, agg, 0.0)                # nodes w/o incoming edges -> 0

    stats = relu_stats(agg, tile_n)                    # [2, F2]
    mean = stats[0:1] / n_real
    # TODO(synk): E[x^2]-mean^2 can cancel for large-mean activations; a shifted /
    # Welford accumulation would be safer for very large N.
    var = jnp.maximum(stats[1:2] / n_real - mean * mean, 0.0)
    new_scale = gamma * lax.rsqrt(var + EPS)
    new_shift = beta - mean * new_scale
    return agg, new_scale, new_shift


def gin_convnet_forward(data_x, pos, src, dst, batch, num_graphs, params, func,
                        max_tile_n=2048, max_tile_e=4096):
    # x = data.x[:, :-3]  -- computed for fidelity, but dead in the original forward
    _ = data_x[:, :-3]
    _ = func

    n, e = pos.shape[0], src.shape[0]
    tile_n = _choose_tile(n, max_tile_n)
    tile_e = _choose_tile(e, max_tile_e)
    n_pad = _round_up(n, tile_n)
    e_pad = _round_up(e, tile_e)

    x = _pad_rows(pos, n_pad)
    src_p = _pad_rows(src, e_pad)          # padded edges point at node 0 ...
    dst_p = _pad_rows(dst, e_pad)          # ... and are sliced off before aggregation

    # Nodes with at least one incoming edge (shared by all four layers).
    deg = jax.ops.segment_sum(jnp.ones((e,), jnp.float32), dst, num_segments=n_pad)
    has_edge = (deg > 0.0)[:, None]

    agg, sc, sh = edge_conv_layer(x, None, None, src_p, dst_p, n, e, n_pad,
                                  has_edge, params["ec1"], params["bn1"],
                                  tile_n, tile_e)
    agg, sc, sh = edge_conv_layer(agg, sc, sh, src_p, dst_p, n, e, n_pad,
                                  has_edge, params["ec2"], params["bn2"],
                                  tile_n, tile_e)
    agg, sc, sh = edge_conv_layer(agg, sc, sh, src_p, dst_p, n, e, n_pad,
                                  has_edge, params["ec3"], params["bn3"],
                                  tile_n, tile_e)
    agg, sc, sh = edge_conv_layer(agg, sc, sh, src_p, dst_p, n, e, n_pad,
                                  has_edge, params["ec4"], params["bn4"],
                                  tile_n, tile_e)

    # global_add_pool (with bn4's ReLU+affine fused) + bn8.
    # Padded rows carry batch id == num_graphs -> masked out.
    bid = _pad_rows(batch, n_pad, value=num_graphs)[:, None]
    # TODO(synk): original module declares bn8 = BatchNorm1d(128) but applies it to
    # 256-dim pooled features (would raise in PyTorch); we use 256 features here.
    gamma8, beta8 = params["bn8"]
    partials = pool_partials(agg, sc, sh, bid, num_graphs, tile_n)
    return pool_bn_finalize(partials, gamma8, beta8)


# ----------------------------------------------------------------------------
# Deterministic parameter init (PyTorch-Linear-style uniform bounds)
# ----------------------------------------------------------------------------
def init_linear(key, fan_in, fan_out):
    k1, k2 = jax.random.split(key)
    bound = 1.0 / (fan_in ** 0.5)
    w = jax.random.uniform(k1, (fan_in, fan_out), jnp.float32, -bound, bound)
    b = jax.random.uniform(k2, (1, fan_out), jnp.float32, -bound, bound)
    return w, b


def init_bn(f):
    return jnp.ones((1, f), jnp.float32), jnp.zeros((1, f), jnp.float32)


if __name__ == "__main__":
    key = jax.random.PRNGKey(0)
    keys = jax.random.split(key, 16)

    N = 44            # nodes (not a multiple of the node tile -> exercises padding)
    G = 2             # graphs in the batch
    POINT = 256

    # bidirectional ring graph: every node has incoming edges
    idx = jnp.arange(N, dtype=jnp.int32)
    nxt = (idx + 1) % N
    src = jnp.concatenate([idx, nxt])          # edge_index[0]  (source j)
    dst = jnp.concatenate([nxt, idx])          # edge_index[1]  (target i)
    batch = jnp.repeat(jnp.arange(G, dtype=jnp.int32), N // G)

    pos = jax.random.normal(keys[0], (N, 3), jnp.float32)          # data1.x (3D coords)
    data_x = jax.random.normal(keys[1], (N, 52), jnp.float32)      # data.x (dead after slice)
    func = jax.random.normal(keys[2], (G, 127), jnp.float32)       # unused in forward

    params = {
        # EdgeConv1: Linear(6,128) -> ReLU -> Linear(128,128), bn1=BN(128)
        "ec1": (*init_linear(keys[3], 6, 128), *init_linear(keys[4], 128, 128)),
        "bn1": init_bn(128),
        # EdgeConv2: Linear(256,256) -> ReLU -> Linear(256,256), bn2=BN(256)
        "ec2": (*init_linear(keys[5], 256, 256), *init_linear(keys[6], 256, 256)),
        "bn2": init_bn(256),
        # EdgeConv3: Linear(512,256) -> ReLU -> Linear(256,256), bn3=BN(256)
        "ec3": (*init_linear(keys[7], 2 * POINT, POINT), *init_linear(keys[8], POINT, POINT)),
        "bn3": init_bn(POINT),
        # EdgeConv4: same shapes as EdgeConv3, bn4=BN(256)
        "ec4": (*init_linear(keys[9], 2 * POINT, POINT), *init_linear(keys[10], POINT, POINT)),
        "bn4": init_bn(POINT),
        # bn8 applied to the 256-dim pooled vector (see TODO in forward)
        "bn8": init_bn(POINT),
    }

    fwd = jax.jit(gin_convnet_forward, static_argnums=(5, 8, 9))
    # Small tile caps so the tiny demo still exercises multi-step grids,
    # pipelining, and the per-tile parallel-partial reduction paths.
    out = fwd(data_x, pos, src, dst, batch, G, params, func, 16, 32)
    out = jax.block_until_ready(out)
    assert out.shape == (G, POINT) and out.dtype == jnp.float32
    assert bool(jnp.all(jnp.isfinite(out)))
    print("KERNEL_OK")
</pallas_src>

<mosaic_0001>
module attributes {stable_mosaic.version = 11 : i64} {
  func.func @kernel(%arg0: i32, %arg1: memref<16x3xf32, #tpu.memory_space<vmem>>, %arg2: memref<3x256xf32, #tpu.memory_space<vmem>>, %arg3: memref<1x128xf32, #tpu.memory_space<vmem>>, %arg4: memref<16x128xbf16, #tpu.memory_space<vmem>>, %arg5: memref<16x128xbf16, #tpu.memory_space<vmem>>) attributes {dimension_semantics = [#tpu.dimension_semantics<parallel>], iteration_bounds = array<i64: 3>, scalar_prefetch = 0 : i64, scratch_operands = 0 : i64, tpu.core_type = #tpu.core_type<tc>, window_params = [{transform_indices = @transform_0, window_bounds = array<i64: 16, 3>}, {pipeline_mode = #tpu.pipeline_mode<synchronous>, transform_indices = @transform_1, window_bounds = array<i64: 3, 256>}, {pipeline_mode = #tpu.pipeline_mode<synchronous>, transform_indices = @transform_2, window_bounds = array<i64: 1, 128>}, {transform_indices = @transform_3, window_bounds = array<i64: 16, 128>}, {transform_indices = @transform_4, window_bounds = array<i64: 16, 128>}]} {
    %c0 = arith.constant 0 : index
    %c0_0 = arith.constant 0 : index
    %0 = vector.load %arg1[%c0, %c0_0] : memref<16x3xf32, #tpu.memory_space<vmem>>, vector<16x3xf32>
    %c0_1 = arith.constant 0 : index
    %c0_2 = arith.constant 0 : index
    %1 = vector.load %arg2[%c0_1, %c0_2] : memref<3x256xf32, #tpu.memory_space<vmem>>, vector<3x256xf32>
    %cst = arith.constant dense<0.000000e+00> : vector<16x256xf32>
    %2 = tpu.matmul %0, %1, %cst {dimension_numbers = #tpu.dot_dimension_numbers<[1], [0], [0], [1], [0, 0, 1, 1], [], []>} : vector<16x3xf32>, vector<3x256xf32>, vector<16x256xf32> -> vector<16x256xf32>
    %3 = vector.extract_strided_slice %2 {offsets = [0, 0], sizes = [16, 128], strides = [1, 1]} : vector<16x256xf32> to vector<16x128xf32>
    %c0_3 = arith.constant 0 : index
    %c0_4 = arith.constant 0 : index
    %4 = vector.load %arg3[%c0_3, %c0_4] : memref<1x128xf32, #tpu.memory_space<vmem>>, vector<1x128xf32>
    %5 = vector.broadcast %4 : vector<1x128xf32> to vector<16x128xf32>
    %6 = arith.addf %3, %5 : vector<16x128xf32>
    %7 = arith.truncf %6 : vector<16x128xf32> to vector<16x128xbf16>
    %c0_5 = arith.constant 0 : index
    %c0_6 = arith.constant 0 : index
    %8 = vector.load %arg4[%c0_5, %c0_6] : memref<16x128xbf16, #tpu.memory_space<vmem>>, vector<16x128xbf16>
    tpu.vector_store %arg4[%c0_5, %c0_6], %7 {strides = array<i32>} : memref<16x128xbf16, #tpu.memory_space<vmem>>, vector<16x128xbf16>,
    %9 = vector.extract_strided_slice %2 {offsets = [0, 128], sizes = [16, 128], strides = [1, 1]} : vector<16x256xf32> to vector<16x128xf32>
    %10 = arith.truncf %9 : vector<16x128xf32> to vector<16x128xbf16>
    %c0_7 = arith.constant 0 : index
    %c0_8 = arith.constant 0 : index
    %11 = vector.load %arg5[%c0_7, %c0_8] : memref<16x128xbf16, #tpu.memory_space<vmem>>, vector<16x128xbf16>
    tpu.vector_store %arg5[%c0_7, %c0_8], %10 {strides = array<i32>} : memref<16x128xbf16, #tpu.memory_space<vmem>>, vector<16x128xbf16>,
    return
  }
  func.func @transform_0(%arg0: i32) -> (i32, i32) {
    %c0_i32 = arith.constant 0 : i32
    %c0_i32_0 = arith.constant 0 : i32
    return %arg0, %c0_i32 : i32, i32
  }
  func.func @transform_1(%arg0: i32) -> (i32, i32) {
    %c0_i32 = arith.constant 0 : i32
    %c0_i32_0 = arith.constant 0 : i32
    %c0_i32_1 = arith.constant 0 : i32
    return %c0_i32, %c0_i32_0 : i32, i32
  }
  func.func @transform_2(%arg0: i32) -> (i32, i32) {
    %c0_i32 = arith.constant 0 : i32
    %c0_i32_0 = arith.constant 0 : i32
    %c0_i32_1 = arith.constant 0 : i32
    return %c0_i32, %c0_i32_0 : i32, i32
  }
  func.func @transform_3(%arg0: i32) -> (i32, i32) {
    %c0_i32 = arith.constant 0 : i32
    %c0_i32_0 = arith.constant 0 : i32
    return %arg0, %c0_i32 : i32, i32
  }
  func.func @transform_4(%arg0: i32) -> (i32, i32) {
    %c0_i32 = arith.constant 0 : i32
    %c0_i32_0 = arith.constant 0 : i32
    return %arg0, %c0_i32 : i32, i32
  }
}

module attributes {stable_mosaic.version = 11 : i64} {
  func.func @edge_mlp_kernel(%arg0: i32, %arg1: memref<32x128xbf16, #tpu.memory_space<vmem>>, %arg2: memref<32x128xbf16, #tpu.memory_space<vmem>>, %arg3: memref<128x128xbf16, #tpu.memory_space<vmem>>, %arg4: memref<1x128xf32, #tpu.memory_space<vmem>>, %arg5: memref<32x128xf32, #tpu.memory_space<vmem>>) attributes {dimension_semantics = [#tpu.dimension_semantics<parallel>], iteration_bounds = array<i64: 3>, scalar_prefetch = 0 : i64, scratch_operands = 0 : i64, tpu.core_type = #tpu.core_type<tc>, window_params = [{transform_indices = @transform_0, window_bounds = array<i64: 32, 128>}, {transform_indices = @transform_1, window_bounds = array<i64: 32, 128>}, {pipeline_mode = #tpu.pipeline_mode<synchronous>, transform_indices = @transform_2, window_bounds = array<i64: 128, 128>}, {pipeline_mode = #tpu.pipeline_mode<synchronous>, transform_indices = @transform_3, window_bounds = array<i64: 1, 128>}, {transform_indices = @transform_4, window_bounds = array<i64: 32, 128>}]} {
    %c0 = arith.constant 0 : index
    %c0_0 = arith.constant 0 : index
    %0 = vector.load %arg1[%c0, %c0_0] : memref<32x128xbf16, #tpu.memory_space<vmem>>, vector<32x128xbf16>
    %1 = arith.extf %0 : vector<32x128xbf16> to vector<32x128xf32>
    %c0_1 = arith.constant 0 : index
    %c0_2 = arith.constant 0 : index
    %2 = vector.load %arg2[%c0_1, %c0_2] : memref<32x128xbf16, #tpu.memory_space<vmem>>, vector<32x128xbf16>
    %3 = arith.extf %2 : vector<32x128xbf16> to vector<32x128xf32>
    %4 = arith.addf %1, %3 : vector<32x128xf32>
    %cst = arith.constant 0.000000e+00 : f32
    %5 = vector.broadcast %cst : f32 to vector<32x128xf32>
    %6 = arith.maximumf %4, %5 : vector<32x128xf32>
    %7 = arith.truncf %6 : vector<32x128xf32> to vector<32x128xbf16>
    %c0_3 = arith.constant 0 : index
    %c0_4 = arith.constant 0 : index
    %8 = vector.load %arg3[%c0_3, %c0_4] : memref<128x128xbf16, #tpu.memory_space<vmem>>, vector<128x128xbf16>
    %cst_5 = arith.constant dense<0.000000e+00> : vector<32x128xf32>
    %9 = tpu.matmul %7, %8, %cst_5 {dimension_numbers = #tpu.dot_dimension_numbers<[1], [0], [0], [1], [0, 0, 1, 1], [], []>} : vector<32x128xbf16>, vector<128x128xbf16>, vector<32x128xf32> -> vector<32x128xf32>
    %c0_6 = arith.constant 0 : index
    %c0_7 = arith.constant 0 : index
    %10 = vector.load %arg4[%c0_6, %c0_7] : memref<1x128xf32, #tpu.memory_space<vmem>>, vector<1x128xf32>
    %11 = vector.broadcast %10 : vector<1x128xf32> to vector<32x128xf32>
    %12 = arith.addf %9, %11 : vector<32x128xf32>
    %c0_8 = arith.constant 0 : index
    %c0_9 = arith.constant 0 : index
    %13 = vector.load %arg5[%c0_8, %c0_9] : memref<32x128xf32, #tpu.memory_space<vmem>>, vector<32x128xf32>
    tpu.vector_store %arg5[%c0_8, %c0_9], %12 {strides = array<i32>} : memref<32x128xf32, #tpu.memory_space<vmem>>, vector<32x128xf32>,
    return
  }
  func.func @transform_0(%arg0: i32) -> (i32, i32) {
    %c0_i32 = arith.constant 0 : i32
    %c0_i32_0 = arith.constant 0 : i32
    return %arg0, %c0_i32 : i32, i32
  }
  func.func @transform_1(%arg0: i32) -> (i32, i32) {
    %c0_i32 = arith.constant 0 : i32
    %c0_i32_0 = arith.constant 0 : i32
    return %arg0, %c0_i32 : i32, i32
  }
  func.func @transform_2(%arg0: i32) -> (i32, i32) {
    %c0_i32 = arith.constant 0 : i32
    %c0_i32_0 = arith.constant 0 : i32
    %c0_i32_1 = arith.constant 0 : i32
    return %c0_i32, %c0_i32_0 : i32, i32
  }
  func.func @transform_3(%arg0: i32) -> (i32, i32) {
    %c0_i32 = arith.constant 0 : i32
    %c0_i32_0 = arith.constant 0 : i32
    %c0_i32_1 = arith.constant 0 : i32
    return %c0_i32, %c0_i32_0 : i32, i32
  }
  func.func @transform_4(%arg0: i32) -> (i32, i32) {
    %c0_i32 = arith.constant 0 : i32
    %c0_i32_0 = arith.constant 0 : i32
    return %arg0, %c0_i32 : i32, i32
  }
}

module attributes {stable_mosaic.version = 11 : i64} {
  func.func @relu_stats_kernel(%arg0: i32, %arg1: memref<16x128xf32, #tpu.memory_space<vmem>>, %arg2: memref<1x2x128xf32, #tpu.memory_space<vmem>>) attributes {dimension_semantics = [#tpu.dimension_semantics<parallel>], iteration_bounds = array<i64: 3>, scalar_prefetch = 0 : i64, scratch_operands = 0 : i64, tpu.core_type = #tpu.core_type<tc>, window_params = [{transform_indices = @transform_0, window_bounds = array<i64: 16, 128>}, {transform_indices = @transform_1, window_bounds = array<i64: 1, 2, 128>}]} {
    %c0 = arith.constant 0 : index
    %c0_0 = arith.constant 0 : index
    %0 = vector.load %arg1[%c0, %c0_0] : memref<16x128xf32, #tpu.memory_space<vmem>>, vector<16x128xf32>
    %cst = arith.constant 0.000000e+00 : f32
    %1 = vector.broadcast %cst : f32 to vector<16x128xf32>
    %2 = arith.maximumf %0, %1 : vector<16x128xf32>
    %cst_1 = arith.constant dense<0.000000e+00> : vector<128xf32>
    %3 = vector.multi_reduction <add>, %2, %cst_1 [0] : vector<16x128xf32> to vector<128xf32>
    %4 = vector.shape_cast %3 : vector<128xf32> to vector<1x128xf32>
    %5 = arith.mulf %2, %2 : vector<16x128xf32>
    %cst_2 = arith.constant dense<0.000000e+00> : vector<128xf32>
    %6 = vector.multi_reduction <add>, %5, %cst_2 [0] : vector<16x128xf32> to vector<128xf32>
    %7 = vector.shape_cast %6 : vector<128xf32> to vector<1x128xf32>
    %8 = tpu.concatenate %4, %7 in 0 : vector<1x128xf32>, vector<1x128xf32> -> vector<2x128xf32>
    %9 = vector.shape_cast %8 : vector<2x128xf32> to vector<1x2x128xf32>
    %c0_3 = arith.constant 0 : index
    %c0_4 = arith.constant 0 : index
    %c0_5 = arith.constant 0 : index
    %10 = vector.load %arg2[%c0_3, %c0_4, %c0_5] : memref<1x2x128xf32, #tpu.memory_space<vmem>>, vector<1x2x128xf32>
    tpu.vector_store %arg2[%c0_3, %c0_4, %c0_5], %9 {strides = array<i32>} : memref<1x2x128xf32, #tpu.memory_space<vmem>>, vector<1x2x128xf32>,
    return
  }
  func.func @transform_0(%arg0: i32) -> (i32, i32) {
    %c0_i32 = arith.constant 0 : i32
    %c0_i32_0 = arith.constant 0 : i32
    return %arg0, %c0_i32 : i32, i32
  }
  func.func @transform_1(%arg0: i32) -> (i32, i32, i32) {
    %c0_i32 = arith.constant 0 : i32
    %c0_i32_0 = arith.constant 0 : i32
    %c0_i32_1 = arith.constant 0 : i32
    return %arg0, %c0_i32, %c0_i32_0 : i32, i32, i32
  }
}

module attributes {stable_mosaic.version = 11 : i64} {
  func.func @kernel(%arg0: i32, %arg1: memref<16x128xf32, #tpu.memory_space<vmem>>, %arg2: memref<1x128xf32, #tpu.memory_space<vmem>>, %arg3: memref<1x128xf32, #tpu.memory_space<vmem>>, %arg4: memref<128x512xbf16, #tpu.memory_space<vmem>>, %arg5: memref<1x256xf32, #tpu.memory_space<vmem>>, %arg6: memref<16x256xbf16, #tpu.memory_space<vmem>>, %arg7: memref<16x256xbf16, #tpu.memory_space<vmem>>) attributes {dimension_semantics = [#tpu.dimension_semantics<parallel>], iteration_bounds = array<i64: 3>, scalar_prefetch = 0 : i64, scratch_operands = 0 : i64, tpu.core_type = #tpu.core_type<tc>, window_params = [{transform_indices = @transform_0, window_bounds = array<i64: 16, 128>}, {pipeline_mode = #tpu.pipeline_mode<synchronous>, transform_indices = @transform_1, window_bounds = array<i64: 1, 128>}, {pipeline_mode = #tpu.pipeline_mode<synchronous>, transform_indices = @transform_2, window_bounds = array<i64: 1, 128>}, {pipeline_mode = #tpu.pipeline_mode<synchronous>, transform_indices = @transform_3, window_bounds = array<i64: 128, 512>}, {pipeline_mode = #tpu.pipeline_mode<synchronous>, transform_indices = @transform_4, window_bounds = array<i64: 1, 256>}, {transform_indices = @transform_5, window_bounds = array<i64: 16, 256>}, {transform_indices = @transform_6, window_bounds = array<i64: 16, 256>}]} {
    %c0 = arith.constant 0 : index
    %c0_0 = arith.constant 0 : index
    %0 = vector.load %arg1[%c0, %c0_0] : memref<16x128xf32, #tpu.memory_space<vmem>>, vector<16x128xf32>
    %cst = arith.constant 0.000000e+00 : f32
    %1 = vector.broadcast %cst : f32 to vector<16x128xf32>
    %2 = arith.maximumf %0, %1 : vector<16x128xf32>
    %c0_1 = arith.constant 0 : index
    %c0_2 = arith.constant 0 : index
    %3 = vector.load %arg2[%c0_1, %c0_2] : memref<1x128xf32, #tpu.memory_space<vmem>>, vector<1x128xf32>
    %4 = vector.broadcast %3 : vector<1x128xf32> to vector<16x128xf32>
    %5 = arith.mulf %2, %4 : vector<16x128xf32>
    %c0_3 = arith.constant 0 : index
    %c0_4 = arith.constant 0 : index
    %6 = vector.load %arg3[%c0_3, %c0_4] : memref<1x128xf32, #tpu.memory_space<vmem>>, vector<1x128xf32>
    %7 = vector.broadcast %6 : vector<1x128xf32> to vector<16x128xf32>
    %8 = arith.addf %5, %7 : vector<16x128xf32>
    %9 = arith.truncf %8 : vector<16x128xf32> to vector<16x128xbf16>
    %c0_5 = arith.constant 0 : index
    %c0_6 = arith.constant 0 : index
    %10 = vector.load %arg4[%c0_5, %c0_6] : memref<128x512xbf16, #tpu.memory_space<vmem>>, vector<128x512xbf16>
    %cst_7 = arith.constant dense<0.000000e+00> : vector<16x512xf32>
    %11 = tpu.matmul %9, %10, %cst_7 {dimension_numbers = #tpu.dot_dimension_numbers<[1], [0], [0], [1], [0, 0, 1, 1], [], []>} : vector<16x128xbf16>, vector<128x512xbf16>, vector<16x512xf32> -> vector<16x512xf32>
    %12 = vector.extract_strided_slice %11 {offsets = [0, 0], sizes = [16, 256], strides = [1, 1]} : vector<16x512xf32> to vector<16x256xf32>
    %c0_8 = arith.constant 0 : index
    %c0_9 = arith.constant 0 : index
    %13 = vector.load %arg5[%c0_8, %c0_9] : memref<1x256xf32, #tpu.memory_space<vmem>>, vector<1x256xf32>
    %14 = vector.broadcast %13 : vector<1x256xf32> to vector<16x256xf32>
    %15 = arith.addf %12, %14 : vector<16x256xf32>
    %16 = arith.truncf %15 : vector<16x256xf32> to vector<16x256xbf16>
    %c0_10 = arith.constant 0 : index
    %c0_11 = arith.constant 0 : index
    %17 = vector.load %arg6[%c0_10, %c0_11] : memref<16x256xbf16, #tpu.memory_space<vmem>>, vector<16x256xbf16>
    tpu.vector_store %arg6[%c0_10, %c0_11], %16 {strides = array<i32>} : memref<16x256xbf16, #tpu.memory_space<vmem>>, vector<16x256xbf16>,
    %18 = vector.extract_strided_slice %11 {offsets = [0, 256], sizes = [16, 256], strides = [1, 1]} : vector<16x512xf32> to vector<16x256xf32>
    %19 = arith.truncf %18 : vector<16x256xf32> to vector<16x256xbf16>
    %c0_12 = arith.constant 0 : index
    %c0_13 = arith.constant 0 : index
    %20 = vector.load %arg7[%c0_12, %c0_13] : memref<16x256xbf16, #tpu.memory_space<vmem>>, vector<16x256xbf16>
    tpu.vector_store %arg7[%c0_12, %c0_13], %19 {strides = array<i32>} : memref<16x256xbf16, #tpu.memory_space<vmem>>, vector<16x256xbf16>,
    return
  }
  func.func @transform_0(%arg0: i32) -> (i32, i32) {
    %c0_i32 = arith.constant 0 : i32
    %c0_i32_0 = arith.constant 0 : i32
    return %arg0, %c0_i32 : i32, i32
  }
  func.func @transform_1(%arg0: i32) -> (i32, i32) {
    %c0_i32 = arith.constant 0 : i32
    %c0_i32_0 = arith.constant 0 : i32
    %c0_i32_1 = arith.constant 0 : i32
    return %c0_i32, %c0_i32_0 : i32, i32
  }
  func.func @transform_2(%arg0: i32) -> (i32, i32) {
    %c0_i32 = arith.constant 0 : i32
    %c0_i32_0 = arith.constant 0 : i32
    %c0_i32_1 = arith.constant 0 : i32
    return %c0_i32, %c0_i32_0 : i32, i32
  }
  func.func @transform_3(%arg0: i32) -> (i32, i32) {
    %c0_i32 = arith.constant 0 : i32
    %c0_i32_0 = arith.constant 0 : i32
    %c0_i32_1 = arith.constant 0 : i32
    return %c0_i32, %c0_i32_0 : i32, i32
  }
  func.func @transform_4(%arg0: i32) -> (i32, i32) {
    %c0_i32 = arith.constant 0 : i32
    %c0_i32_0 = arith.constant 0 : i32
    %c0_i32_1 = arith.constant 0 : i32
    return %c0_i32, %c0_i32_0 : i32, i32
  }
  func.func @transform_5(%arg0: i32) -> (i32, i32) {
    %c0_i32 = arith.constant 0 : i32
    %c0_i32_0 = arith.constant 0 : i32
    return %arg0, %c0_i32 : i32, i32
  }
  func.func @transform_6(%arg0: i32) -> (i32, i32) {
    %c0_i32 = arith.constant 0 : i32
    %c0_i32_0 = arith.constant 0 : i32
    return %arg0, %c0_i32 : i32, i32
  }
}

module attributes {stable_mosaic.version = 11 : i64} {
  func.func @edge_mlp_kernel(%arg0: i32, %arg1: memref<32x256xbf16, #tpu.memory_space<vmem>>, %arg2: memref<32x256xbf16, #tpu.memory_space<vmem>>, %arg3: memref<256x256xbf16, #tpu.memory_space<vmem>>, %arg4: memref<1x256xf32, #tpu.memory_space<vmem>>, %arg5: memref<32x256xf32, #tpu.memory_space<vmem>>) attributes {dimension_semantics = [#tpu.dimension_semantics<parallel>], iteration_bounds = array<i64: 3>, scalar_prefetch = 0 : i64, scratch_operands = 0 : i64, tpu.core_type = #tpu.core_type<tc>, window_params = [{transform_indices = @transform_0, window_bounds = array<i64: 32, 256>}, {transform_indices = @transform_1, window_bounds = array<i64: 32, 256>}, {pipeline_mode = #tpu.pipeline_mode<synchronous>, transform_indices = @transform_2, window_bounds = array<i64: 256, 256>}, {pipeline_mode = #tpu.pipeline_mode<synchronous>, transform_indices = @transform_3, window_bounds = array<i64: 1, 256>}, {transform_indices = @transform_4, window_bounds = array<i64: 32, 256>}]} {
    %c0 = arith.constant 0 : index
    %c0_0 = arith.constant 0 : index
    %0 = vector.load %arg1[%c0, %c0_0] : memref<32x256xbf16, #tpu.memory_space<vmem>>, vector<32x256xbf16>
    %1 = arith.extf %0 : vector<32x256xbf16> to vector<32x256xf32>
    %c0_1 = arith.constant 0 : index
    %c0_2 = arith.constant 0 : index
    %2 = vector.load %arg2[%c0_1, %c0_2] : memref<32x256xbf16, #tpu.memory_space<vmem>>, vector<32x256xbf16>
    %3 = arith.extf %2 : vector<32x256xbf16> to vector<32x256xf32>
    %4 = arith.addf %1, %3 : vector<32x256xf32>
    %cst = arith.constant 0.000000e+00 : f32
    %5 = vector.broadcast %cst : f32 to vector<32x256xf32>
    %6 = arith.maximumf %4, %5 : vector<32x256xf32>
    %7 = arith.truncf %6 : vector<32x256xf32> to vector<32x256xbf16>
    %c0_3 = arith.constant 0 : index
    %c0_4 = arith.constant 0 : index
    %8 = vector.load %arg3[%c0_3, %c0_4] : memref<256x256xbf16, #tpu.memory_space<vmem>>, vector<256x256xbf16>
    %cst_5 = arith.constant dense<0.000000e+00> : vector<32x256xf32>
    %9 = tpu.matmul %7, %8, %cst_5 {dimension_numbers = #tpu.dot_dimension_numbers<[1], [0], [0], [1], [0, 0, 1, 1], [], []>} : vector<32x256xbf16>, vector<256x256xbf16>, vector<32x256xf32> -> vector<32x256xf32>
    %c0_6 = arith.constant 0 : index
    %c0_7 = arith.constant 0 : index
    %10 = vector.load %arg4[%c0_6, %c0_7] : memref<1x256xf32, #tpu.memory_space<vmem>>, vector<1x256xf32>
    %11 = vector.broadcast %10 : vector<1x256xf32> to vector<32x256xf32>
    %12 = arith.addf %9, %11 : vector<32x256xf32>
    %c0_8 = arith.constant 0 : index
    %c0_9 = arith.constant 0 : index
    %13 = vector.load %arg5[%c0_8, %c0_9] : memref<32x256xf32, #tpu.memory_space<vmem>>, vector<32x256xf32>
    tpu.vector_store %arg5[%c0_8, %c0_9], %12 {strides = array<i32>} : memref<32x256xf32, #tpu.memory_space<vmem>>, vector<32x256xf32>,
    return
  }
  func.func @transform_0(%arg0: i32) -> (i32, i32) {
    %c0_i32 = arith.constant 0 : i32
    %c0_i32_0 = arith.constant 0 : i32
    return %arg0, %c0_i32 : i32, i32
  }
  func.func @transform_1(%arg0: i32) -> (i32, i32) {
    %c0_i32 = arith.constant 0 : i32
    %c0_i32_0 = arith.constant 0 : i32
    return %arg0, %c0_i32 : i32, i32
  }
  func.func @transform_2(%arg0: i32) -> (i32, i32) {
    %c0_i32 = arith.constant 0 : i32
    %c0_i32_0 = arith.constant 0 : i32
    %c0_i32_1 = arith.constant 0 : i32
    return %c0_i32, %c0_i32_0 : i32, i32
  }
  func.func @transform_3(%arg0: i32) -> (i32, i32) {
    %c0_i32 = arith.constant 0 : i32
    %c0_i32_0 = arith.constant 0 : i32
    %c0_i32_1 = arith.constant 0 : i32
    return %c0_i32, %c0_i32_0 : i32, i32
  }
  func.func @transform_4(%arg0: i32) -> (i32, i32) {
    %c0_i32 = arith.constant 0 : i32
    %c0_i32_0 = arith.constant 0 : i32
    return %arg0, %c0_i32 : i32, i32
  }
}

module attributes {stable_mosaic.version = 11 : i64} {
  func.func @relu_stats_kernel(%arg0: i32, %arg1: memref<16x256xf32, #tpu.memory_space<vmem>>, %arg2: memref<1x2x256xf32, #tpu.memory_space<vmem>>) attributes {dimension_semantics = [#tpu.dimension_semantics<parallel>], iteration_bounds = array<i64: 3>, scalar_prefetch = 0 : i64, scratch_operands = 0 : i64, tpu.core_type = #tpu.core_type<tc>, window_params = [{transform_indices = @transform_0, window_bounds = array<i64: 16, 256>}, {transform_indices = @transform_1, window_bounds = array<i64: 1, 2, 256>}]} {
    %c0 = arith.constant 0 : index
    %c0_0 = arith.constant 0 : index
    %0 = vector.load %arg1[%c0, %c0_0] : memref<16x256xf32, #tpu.memory_space<vmem>>, vector<16x256xf32>
    %cst = arith.constant 0.000000e+00 : f32
    %1 = vector.broadcast %cst : f32 to vector<16x256xf32>
    %2 = arith.maximumf %0, %1 : vector<16x256xf32>
    %cst_1 = arith.constant dense<0.000000e+00> : vector<256xf32>
    %3 = vector.multi_reduction <add>, %2, %cst_1 [0] : vector<16x256xf32> to vector<256xf32>
    %4 = vector.shape_cast %3 : vector<256xf32> to vector<1x256xf32>
    %5 = arith.mulf %2, %2 : vector<16x256xf32>
    %cst_2 = arith.constant dense<0.000000e+00> : vector<256xf32>
    %6 = vector.multi_reduction <add>, %5, %cst_2 [0] : vector<16x256xf32> to vector<256xf32>
    %7 = vector.shape_cast %6 : vector<256xf32> to vector<1x256xf32>
    %8 = tpu.concatenate %4, %7 in 0 : vector<1x256xf32>, vector<1x256xf32> -> vector<2x256xf32>
    %9 = vector.shape_cast %8 : vector<2x256xf32> to vector<1x2x256xf32>
    %c0_3 = arith.constant 0 : index
    %c0_4 = arith.constant 0 : index
    %c0_5 = arith.constant 0 : index
    %10 = vector.load %arg2[%c0_3, %c0_4, %c0_5] : memref<1x2x256xf32, #tpu.memory_space<vmem>>, vector<1x2x256xf32>
    tpu.vector_store %arg2[%c0_3, %c0_4, %c0_5], %9 {strides = array<i32>} : memref<1x2x256xf32, #tpu.memory_space<vmem>>, vector<1x2x256xf32>,
    return
  }
  func.func @transform_0(%arg0: i32) -> (i32, i32) {
    %c0_i32 = arith.constant 0 : i32
    %c0_i32_0 = arith.constant 0 : i32
    return %arg0, %c0_i32 : i32, i32
  }
  func.func @transform_1(%arg0: i32) -> (i32, i32, i32) {
    %c0_i32 = arith.constant 0 : i32
    %c0_i32_0 = arith.constant 0 : i32
    %c0_i32_1 = arith.constant 0 : i32
    return %arg0, %c0_i32, %c0_i32_0 : i32, i32, i32
  }
}

module attributes {stable_mosaic.version = 11 : i64} {
  func.func @kernel(%arg0: i32, %arg1: memref<16x256xf32, #tpu.memory_space<vmem>>, %arg2: memref<1x256xf32, #tpu.memory_space<vmem>>, %arg3: memref<1x256xf32, #tpu.memory_space<vmem>>, %arg4: memref<256x512xbf16, #tpu.memory_space<vmem>>, %arg5: memref<1x256xf32, #tpu.memory_space<vmem>>, %arg6: memref<16x256xbf16, #tpu.memory_space<vmem>>, %arg7: memref<16x256xbf16, #tpu.memory_space<vmem>>) attributes {dimension_semantics = [#tpu.dimension_semantics<parallel>], iteration_bounds = array<i64: 3>, scalar_prefetch = 0 : i64, scratch_operands = 0 : i64, tpu.core_type = #tpu.core_type<tc>, window_params = [{transform_indices = @transform_0, window_bounds = array<i64: 16, 256>}, {pipeline_mode = #tpu.pipeline_mode<synchronous>, transform_indices = @transform_1, window_bounds = array<i64: 1, 256>}, {pipeline_mode = #tpu.pipeline_mode<synchronous>, transform_indices = @transform_2, window_bounds = array<i64: 1, 256>}, {pipeline_mode = #tpu.pipeline_mode<synchronous>, transform_indices = @transform_3, window_bounds = array<i64: 256, 512>}, {pipeline_mode = #tpu.pipeline_mode<synchronous>, transform_indices = @transform_4, window_bounds = array<i64: 1, 256>}, {transform_indices = @transform_5, window_bounds = array<i64: 16, 256>}, {transform_indices = @transform_6, window_bounds = array<i64: 16, 256>}]} {
    %c0 = arith.constant 0 : index
    %c0_0 = arith.constant 0 : index
    %0 = vector.load %arg1[%c0, %c0_0] : memref<16x256xf32, #tpu.memory_space<vmem>>, vector<16x256xf32>
    %cst = arith.constant 0.000000e+00 : f32
    %1 = vector.broadcast %cst : f32 to vector<16x256xf32>
    %2 = arith.maximumf %0, %1 : vector<16x256xf32>
    %c0_1 = arith.constant 0 : index
    %c0_2 = arith.constant 0 : index
    %3 = vector.load %arg2[%c0_1, %c0_2] : memref<1x256xf32, #tpu.memory_space<vmem>>, vector<1x256xf32>
    %4 = vector.broadcast %3 : vector<1x256xf32> to vector<16x256xf32>
    %5 = arith.mulf %2, %4 : vector<16x256xf32>
    %c0_3 = arith.constant 0 : index
    %c0_4 = arith.constant 0 : index
    %6 = vector.load %arg3[%c0_3, %c0_4] : memref<1x256xf32, #tpu.memory_space<vmem>>, vector<1x256xf32>
    %7 = vector.broadcast %6 : vector<1x256xf32> to vector<16x256xf32>
    %8 = arith.addf %5, %7 : vector<16x256xf32>
    %9 = arith.truncf %8 : vector<16x256xf32> to vector<16x256xbf16>
    %c0_5 = arith.constant 0 : index
    %c0_6 = arith.constant 0 : index
    %10 = vector.load %arg4[%c0_5, %c0_6] : memref<256x512xbf16, #tpu.memory_space<vmem>>, vector<256x512xbf16>
    %cst_7 = arith.constant dense<0.000000e+00> : vector<16x512xf32>
    %11 = tpu.matmul %9, %10, %cst_7 {dimension_numbers = #tpu.dot_dimension_numbers<[1], [0], [0], [1], [0, 0, 1, 1], [], []>} : vector<16x256xbf16>, vector<256x512xbf16>, vector<16x512xf32> -> vector<16x512xf32>
    %12 = vector.extract_strided_slice %11 {offsets = [0, 0], sizes = [16, 256], strides = [1, 1]} : vector<16x512xf32> to vector<16x256xf32>
    %c0_8 = arith.constant 0 : index
    %c0_9 = arith.constant 0 : index
    %13 = vector.load %arg5[%c0_8, %c0_9] : memref<1x256xf32, #tpu.memory_space<vmem>>, vector<1x256xf32>
    %14 = vector.broadcast %13 : vector<1x256xf32> to vector<16x256xf32>
    %15 = arith.addf %12, %14 : vector<16x256xf32>
    %16 = arith.truncf %15 : vector<16x256xf32> to vector<16x256xbf16>
    %c0_10 = arith.constant 0 : index
    %c0_11 = arith.constant 0 : index
    %17 = vector.load %arg6[%c0_10, %c0_11] : memref<16x256xbf16, #tpu.memory_space<vmem>>, vector<16x256xbf16>
    tpu.vector_store %arg6[%c0_10, %c0_11], %16 {strides = array<i32>} : memref<16x256xbf16, #tpu.memory_space<vmem>>, vector<16x256xbf16>,
    %18 = vector.extract_strided_slice %11 {offsets = [0, 256], sizes = [16, 256], strides = [1, 1]} : vector<16x512xf32> to vector<16x256xf32>
    %19 = arith.truncf %18 : vector<16x256xf32> to vector<16x256xbf16>
    %c0_12 = arith.constant 0 : index
    %c0_13 = arith.constant 0 : index
    %20 = vector.load %arg7[%c0_12, %c0_13] : memref<16x256xbf16, #tpu.memory_space<vmem>>, vector<16x256xbf16>
    tpu.vector_store %arg7[%c0_12, %c0_13], %19 {strides = array<i32>} : memref<16x256xbf16, #tpu.memory_space<vmem>>, vector<16x256xbf16>,
    return
  }
  func.func @transform_0(%arg0: i32) -> (i32, i32) {
    %c0_i32 = arith.constant 0 : i32
    %c0_i32_0 = arith.constant 0 : i32
    return %arg0, %c0_i32 : i32, i32
  }
  func.func @transform_1(%arg0: i32) -> (i32, i32) {
    %c0_i32 = arith.constant 0 : i32
    %c0_i32_0 = arith.constant 0 : i32
    %c0_i32_1 = arith.constant 0 : i32
    return %c0_i32, %c0_i32_0 : i32, i32
  }
  func.func @transform_2(%arg0: i32) -> (i32, i32) {
    %c0_i32 = arith.constant 0 : i32
    %c0_i32_0 = arith.constant 0 : i32
    %c0_i32_1 = arith.constant 0 : i32
    return %c0_i32, %c0_i32_0 : i32, i32
  }
  func.func @transform_3(%arg0: i32) -> (i32, i32) {
    %c0_i32 = arith.constant 0 : i32
    %c0_i32_0 = arith.constant 0 : i32
    %c0_i32_1 = arith.constant 0 : i32
    return %c0_i32, %c0_i32_0 : i32, i32
  }
  func.func @transform_4(%arg0: i32) -> (i32, i32) {
    %c0_i32 = arith.constant 0 : i32
    %c0_i32_0 = arith.constant 0 : i32
    %c0_i32_1 = arith.constant 0 : i32
    return %c0_i32, %c0_i32_0 : i32, i32
  }
  func.func @transform_5(%arg0: i32) -> (i32, i32) {
    %c0_i32 = arith.constant 0 : i32
    %c0_i32_0 = arith.constant 0 : i32
    return %arg0, %c0_i32 : i32, i32
  }
  func.func @transform_6(%arg0: i32) -> (i32, i32) {
    %c0_i32 = arith.constant 0 : i32
    %c0_i32_0 = arith.constant 0 : i32
    return %arg0, %c0_i32 : i32, i32
  }
}

module attributes {stable_mosaic.version = 11 : i64} {
  func.func @pool_bn_kernel(%arg0: i32, %arg1: memref<3x2x256xf32, #tpu.memory_space<vmem>>, %arg2: memref<1x256xf32, #tpu.memory_space<vmem>>, %arg3: memref<1x256xf32, #tpu.memory_space<vmem>>, %arg4: memref<2x256xf32, #tpu.memory_space<vmem>>) attributes {dimension_semantics = [#tpu.dimension_semantics<arbitrary>], iteration_bounds = array<i64: 1>, scalar_prefetch = 0 : i64, scratch_operands = 0 : i64, tpu.core_type = #tpu.core_type<tc>, window_params = [{pipeline_mode = #tpu.pipeline_mode<synchronous>, transform_indices = @transform_0, window_bounds = array<i64: 3, 2, 256>}, {pipeline_mode = #tpu.pipeline_mode<synchronous>, transform_indices = @transform_1, window_bounds = array<i64: 1, 256>}, {pipeline_mode = #tpu.pipeline_mode<synchronous>, transform_indices = @transform_2, window_bounds = array<i64: 1, 256>}, {pipeline_mode = #tpu.pipeline_mode<synchronous>, transform_indices = @transform_3, window_bounds = array<i64: 2, 256>}]} {
    %c0 = arith.constant 0 : index
    %c0_0 = arith.constant 0 : index
    %c0_1 = arith.constant 0 : index
    %0 = vector.load %arg1[%c0, %c0_0, %c0_1] : memref<3x2x256xf32, #tpu.memory_space<vmem>>, vector<3x2x256xf32>
    %cst = arith.constant dense<0.000000e+00> : vector<2x256xf32>
    %1 = vector.multi_reduction <add>, %0, %cst [0] : vector<3x2x256xf32> to vector<2x256xf32>
    %cst_2 = arith.constant dense<0.000000e+00> : vector<256xf32>
    %2 = vector.multi_reduction <add>, %1, %cst_2 [0] : vector<2x256xf32> to vector<256xf32>
    %3 = vector.shape_cast %2 : vector<256xf32> to vector<1x256xf32>
    %cst_3 = arith.constant 2.000000e+00 : f32
    %4 = vector.broadcast %cst_3 : f32 to vector<1x256xf32>
    %5 = arith.divf %3, %4 : vector<1x256xf32>
    %6 = vector.broadcast %5 : vector<1x256xf32> to vector<2x256xf32>
    %7 = arith.subf %1, %6 : vector<2x256xf32>
    %8 = arith.mulf %7, %7 : vector<2x256xf32>
    %cst_4 = arith.constant dense<0.000000e+00> : vector<256xf32>
    %9 = vector.multi_reduction <add>, %8, %cst_4 [0] : vector<2x256xf32> to vector<256xf32>
    %10 = vector.shape_cast %9 : vector<256xf32> to vector<1x256xf32>
    %cst_5 = arith.constant 2.000000e+00 : f32
    %11 = vector.broadcast %cst_5 : f32 to vector<1x256xf32>
    %12 = arith.divf %10, %11 : vector<1x256xf32>
    %c0_6 = arith.constant 0 : index
    %c0_7 = arith.constant 0 : index
    %13 = vector.load %arg2[%c0_6, %c0_7] : memref<1x256xf32, #tpu.memory_space<vmem>>, vector<1x256xf32>
    %14 = vector.broadcast %13 : vector<1x256xf32> to vector<2x256xf32>
    %15 = arith.mulf %14, %7 : vector<2x256xf32>
    %cst_8 = arith.constant 9.99999974E-6 : f32
    %16 = vector.broadcast %cst_8 : f32 to vector<1x256xf32>
    %17 = arith.addf %12, %16 : vector<1x256xf32>
    %18 = math.rsqrt %17 : vector<1x256xf32>
    %19 = vector.broadcast %18 : vector<1x256xf32> to vector<2x256xf32>
    %20 = arith.mulf %15, %19 : vector<2x256xf32>
    %c0_9 = arith.constant 0 : index
    %c0_10 = arith.constant 0 : index
    %21 = vector.load %arg3[%c0_9, %c0_10] : memref<1x256xf32, #tpu.memory_space<vmem>>, vector<1x256xf32>
    %22 = vector.broadcast %21 : vector<1x256xf32> to vector<2x256xf32>
    %23 = arith.addf %20, %22 : vector<2x256xf32>
    %c0_11 = arith.constant 0 : index
    %c0_12 = arith.constant 0 : index
    %24 = vector.load %arg4[%c0_11, %c0_12] : memref<2x256xf32, #tpu.memory_space<vmem>>, vector<2x256xf32>
    tpu.vector_store %arg4[%c0_11, %c0_12], %23 {strides = array<i32>} : memref<2x256xf32, #tpu.memory_space<vmem>>, vector<2x256xf32>,
    return
  }
  func.func @transform_0(%arg0: i32) -> (i32, i32, i32) {
    %c0_i32 = arith.constant 0 : i32
    %c0_i32_0 = arith.constant 0 : i32
    %c0_i32_1 = arith.constant 0 : i32
    %c0_i32_2 = arith.constant 0 : i32
    return %c0_i32, %c0_i32_0, %c0_i32_1 : i32, i32, i32
  }
  func.func @transform_1(%arg0: i32) -> (i32, i32) {
    %c0_i32 = arith.constant 0 : i32
    %c0_i32_0 = arith.constant 0 : i32
    %c0_i32_1 = arith.constant 0 : i32
    return %c0_i32, %c0_i32_0 : i32, i32
  }
  func.func @transform_2(%arg0: i32) -> (i32, i32) {
    %c0_i32 = arith.constant 0 : i32
    %c0_i32_0 = arith.constant 0 : i32
    %c0_i32_1 = arith.constant 0 : i32
    return %c0_i32, %c0_i32_0 : i32, i32
  }
  func.func @transform_3(%arg0: i32) -> (i32, i32) {
    %c0_i32 = arith.constant 0 : i32
    %c0_i32_0 = arith.constant 0 : i32
    %c0_i32_1 = arith.constant 0 : i32
    return %c0_i32, %c0_i32_0 : i32, i32
  }
}

module attributes {stable_mosaic.version = 11 : i64} {
  func.func @kernel(%arg0: i32, %arg1: memref<16x256xf32, #tpu.memory_space<vmem>>, %arg2: memref<1x256xf32, #tpu.memory_space<vmem>>, %arg3: memref<1x256xf32, #tpu.memory_space<vmem>>, %arg4: memref<16x1xi32, #tpu.memory_space<vmem>>, %arg5: memref<1x2x256xf32, #tpu.memory_space<vmem>>) attributes {dimension_semantics = [#tpu.dimension_semantics<parallel>], iteration_bounds = array<i64: 3>, scalar_prefetch = 0 : i64, scratch_operands = 0 : i64, tpu.core_type = #tpu.core_type<tc>, window_params = [{transform_indices = @transform_0, window_bounds = array<i64: 16, 256>}, {pipeline_mode = #tpu.pipeline_mode<synchronous>, transform_indices = @transform_1, window_bounds = array<i64: 1, 256>}, {pipeline_mode = #tpu.pipeline_mode<synchronous>, transform_indices = @transform_2, window_bounds = array<i64: 1, 256>}, {transform_indices = @transform_3, window_bounds = array<i64: 16, 1>}, {transform_indices = @transform_4, window_bounds = array<i64: 1, 2, 256>}]} {
    %c0 = arith.constant 0 : index
    %c0_0 = arith.constant 0 : index
    %0 = vector.load %arg1[%c0, %c0_0] : memref<16x256xf32, #tpu.memory_space<vmem>>, vector<16x256xf32>
    %cst = arith.constant 0.000000e+00 : f32
    %1 = vector.broadcast %cst : f32 to vector<16x256xf32>
    %2 = arith.maximumf %0, %1 : vector<16x256xf32>
    %c0_1 = arith.constant 0 : index
    %c0_2 = arith.constant 0 : index
    %3 = vector.load %arg2[%c0_1, %c0_2] : memref<1x256xf32, #tpu.memory_space<vmem>>, vector<1x256xf32>
    %4 = vector.broadcast %3 : vector<1x256xf32> to vector<16x256xf32>
    %5 = arith.mulf %2, %4 : vector<16x256xf32>
    %c0_3 = arith.constant 0 : index
    %c0_4 = arith.constant 0 : index
    %6 = vector.load %arg3[%c0_3, %c0_4] : memref<1x256xf32, #tpu.memory_space<vmem>>, vector<1x256xf32>
    %7 = vector.broadcast %6 : vector<1x256xf32> to vector<16x256xf32>
    %8 = arith.addf %5, %7 : vector<16x256xf32>
    %c0_5 = arith.constant 0 : index
    %c0_6 = arith.constant 0 : index
    %9 = vector.load %arg4[%c0_5, %c0_6] : memref<16x1xi32, #tpu.memory_space<vmem>>, vector<16x1xi32>
    %c0_i32 = arith.constant 0 : i32
    %10 = vector.broadcast %c0_i32 : i32 to vector<16x1xi32>
    %11 = arith.cmpi eq, %9, %10 : vector<16x1xi32>
    %cst_7 = arith.constant 0.000000e+00 : f32
    %12 = vector.shape_cast %11 : vector<16x1xi1> to vector<16x1xi1>
    %13 = vector.broadcast %12 : vector<16x1xi1> to vector<16x256xi1>
    %14 = vector.broadcast %cst_7 : f32 to vector<16x256xf32>
    %15 = arith.select %13, %8, %14 : vector<16x256xi1>, vector<16x256xf32>
    %cst_8 = arith.constant dense<0.000000e+00> : vector<256xf32>
    %16 = vector.multi_reduction <add>, %15, %cst_8 [0] : vector<16x256xf32> to vector<256xf32>
    %17 = vector.shape_cast %16 : vector<256xf32> to vector<1x256xf32>
    %c1_i32 = arith.constant 1 : i32
    %18 = vector.broadcast %c1_i32 : i32 to vector<16x1xi32>
    %19 = arith.cmpi eq, %9, %18 : vector<16x1xi32>
    %cst_9 = arith.constant 0.000000e+00 : f32
    %20 = vector.shape_cast %19 : vector<16x1xi1> to vector<16x1xi1>
    %21 = vector.broadcast %20 : vector<16x1xi1> to vector<16x256xi1>
    %22 = vector.broadcast %cst_9 : f32 to vector<16x256xf32>
    %23 = arith.select %21, %8, %22 : vector<16x256xi1>, vector<16x256xf32>
    %cst_10 = arith.constant dense<0.000000e+00> : vector<256xf32>
    %24 = vector.multi_reduction <add>, %23, %cst_10 [0] : vector<16x256xf32> to vector<256xf32>
    %25 = vector.shape_cast %24 : vector<256xf32> to vector<1x256xf32>
    %26 = tpu.concatenate %17, %25 in 0 : vector<1x256xf32>, vector<1x256xf32> -> vector<2x256xf32>
    %27 = vector.shape_cast %26 : vector<2x256xf32> to vector<1x2x256xf32>
    %c0_11 = arith.constant 0 : index
    %c0_12 = arith.constant 0 : index
    %c0_13 = arith.constant 0 : index
    %28 = vector.load %arg5[%c0_11, %c0_12, %c0_13] : memref<1x2x256xf32, #tpu.memory_space<vmem>>, vector<1x2x256xf32>
    tpu.vector_store %arg5[%c0_11, %c0_12, %c0_13], %27 {strides = array<i32>} : memref<1x2x256xf32, #tpu.memory_space<vmem>>, vector<1x2x256xf32>,
    return
  }
  func.func @transform_0(%arg0: i32) -> (i32, i32) {
    %c0_i32 = arith.constant 0 : i32
    %c0_i32_0 = arith.constant 0 : i32
    return %arg0, %c0_i32 : i32, i32
  }
  func.func @transform_1(%arg0: i32) -> (i32, i32) {
    %c0_i32 = arith.constant 0 : i32
    %c0_i32_0 = arith.constant 0 : i32
    %c0_i32_1 = arith.constant 0 : i32
    return %c0_i32, %c0_i32_0 : i32, i32
  }
  func.func @transform_2(%arg0: i32) -> (i32, i32) {
    %c0_i32 = arith.constant 0 : i32
    %c0_i32_0 = arith.constant 0 : i32
    %c0_i32_1 = arith.constant 0 : i32
    return %c0_i32, %c0_i32_0 : i32, i32
  }
  func.func @transform_3(%arg0: i32) -> (i32, i32) {
    %c0_i32 = arith.constant 0 : i32
    %c0_i32_0 = arith.constant 0 : i32
    return %arg0, %c0_i32 : i32, i32
  }
  func.func @transform_4(%arg0: i32) -> (i32, i32, i32) {
    %c0_i32 = arith.constant 0 : i32
    %c0_i32_0 = arith.constant 0 : i32
    %c0_i32_1 = arith.constant 0 : i32
    return %arg0, %c0_i32, %c0_i32_0 : i32, i32, i32
  }
}

</mosaic_0001>

<llo_original>
// kernel: gin_convnet_forward.14
$region0: #{gin_convnet_forward.14}
  #allocation0 [shape = 'u32[]', space=smem, size = 0x4, offset = 0x4, fixed_abs, tag = 'smem constant byte address 0x4 - core index']
  #allocation1 [shape = 'u32[144,128]{1,0:T(1,128)}', space=vmem, size = 0x12000, scoped, tag = 'internal scratch']
  %s0 = inlined_call_operand.vmem [shape: f32[48,3], index: 0, kind: input, shape index: {}]
  %s1 = inlined_call_operand.vmem [shape: f32[3,256], index: 1, kind: input, shape index: {}]
  %s2 = inlined_call_operand.vmem [shape: f32[1,128], index: 2, kind: input, shape index: {}]
  %s3 = inlined_call_operand.vmem [shape: bf16[48,128], index: 3, kind: output, shape index: {0}]
  %s4 = inlined_call_operand.vmem [shape: bf16[48,128], index: 4, kind: output, shape index: {1}]
  %5 = xla_tuple %s3, %s4
  %s6 = sld [smem:[#allocation0]]
  $region53: #{gin_convnet_forward.14} parent=0
    _
  %s8 = ssub.s32 1, %s6
  %s9 = scalar_select 0, %s8, %s6
  loop: start=0, step=1, limit=5
  $region2: #{gin_convnet_forward.14} parent=0 // loop_pre_header
    _
  $region3: #{gin_convnet_forward.14} parent=0 // loop_header
    %s11 = sphi 0, %s15
    %p12 = scmp.ge.s32.totalorder %s11, 5
    %s21 = sphi 0, %s23
    %s24 = sphi 0, %s21
    %s25 = sphi 0, %s24
    %s41 = sphi 0, %s25
    %s45 = sphi 0, %s45
    %s47 = sphi 0, %s45
    %s48 = sphi 0, %s47
    %s62 = sphi 0, %s48
    %s66 = sphi 0, %s66
    %s68 = sphi 0, %s66
    %s69 = sphi 0, %s68
    %s83 = sphi 0, %s69
    %s89 = sphi 0, %s91
    %s92 = sphi 0, %s89
    %s93 = sphi 0, %s92
    %s109 = sphi 0, %s93
    %s115 = sphi 0, %s117
    %s118 = sphi 0, %s115
    %s119 = sphi 0, %s118
    %s135 = sphi 0, %s119
  $region4: #{gin_convnet_forward.14} parent=0 // loop_header_branch
    %14 = sbr.rel (%p12) target = $region8
  $region5: #{gin_convnet_forward.14} parent=0 // loop_body
    %s16 = ssub.s32 %s11, 1
    %s17 = ssub.s32 %s11, 2
    %s18 = sadd.s32 %s11, 1
    %s19 = ssub.s32 %s11, %s18
    %p20 = scmp.eq.s32.totalorder %s19, 0
    %s22 = sadd.s32 %s21, 1
    %s23 = scalar_select %p20, %s21, %s22
    %p26 = pneg %p20
    %p27 = scmp.eq.s32.totalorder %s11, 2
    %p28 = por %p26, %p27
    %p29 = scmp.ne.s32.totalorder %s21, %s24
    %p30 = scmp.eq.s32.totalorder %s11, 0
    %p31 = por %p29, %p30
    %p32 = scmp.ne.s32.totalorder %s21, %s24
    %p33 = scmp.eq.s32.totalorder %s16, 2
    %p34 = por %p32, %p33
    %p35 = scmp.ne.s32.totalorder %s24, %s25
    %p36 = scmp.eq.s32.totalorder %s16, 0
    %p37 = por %p35, %p36
    %p38 = scmp.ne.s32.totalorder %s24, %s25
    %p39 = scmp.eq.s32.totalorder %s17, 2
    %p40 = por %p38, %p39
    %p42 = scmp.ne.s32.totalorder %s25, %s41
    %p43 = scmp.eq.s32.totalorder %s17, 0
    %p44 = por %p42, %p43
    %s46 = sadd.s32 %s45, 1
    %p49 = scmp.eq.s32.totalorder %s11, 2
    %p50 = scmp.ne.s32.totalorder %s45, %s47
    %p51 = scmp.eq.s32.totalorder %s11, 0
    %p52 = por %p50, %p51
    %p53 = scmp.ne.s32.totalorder %s45, %s47
    %p54 = scmp.eq.s32.totalorder %s16, 2
    %p55 = por %p53, %p54
    %p56 = scmp.ne.s32.totalorder %s47, %s48
    %p57 = scmp.eq.s32.totalorder %s16, 0
    %p58 = por %p56, %p57
    %p59 = scmp.ne.s32.totalorder %s47, %s48
    %p60 = scmp.eq.s32.totalorder %s17, 2
    %p61 = por %p59, %p60
    %p63 = scmp.ne.s32.totalorder %s48, %s62
    %p64 = scmp.eq.s32.totalorder %s17, 0
    %p65 = por %p63, %p64
    %s67 = sadd.s32 %s66, 1
    %p70 = scmp.eq.s32.totalorder %s11, 2
    %p71 = scmp.ne.s32.totalorder %s66, %s68
    %p72 = scmp.eq.s32.totalorder %s11, 0
    %p73 = por %p71, %p72
    %p74 = scmp.ne.s32.totalorder %s66, %s68
    %p75 = scmp.eq.s32.totalorder %s16, 2
    %p76 = por %p74, %p75
    %p77 = scmp.ne.s32.totalorder %s68, %s69
    %p78 = scmp.eq.s32.totalorder %s16, 0
    %p79 = por %p77, %p78
    %p80 = scmp.ne.s32.totalorder %s68, %s69
    %p81 = scmp.eq.s32.totalorder %s17, 2
    %p82 = por %p80, %p81
    %p84 = scmp.ne.s32.totalorder %s69, %s83
    %p85 = scmp.eq.s32.totalorder %s17, 0
    %p86 = por %p84, %p85
    %s87 = ssub.s32 %s11, %s18
    %p88 = scmp.eq.s32.totalorder %s87, 0
    %s90 = sadd.s32 %s89, 1
    %s91 = scalar_select %p88, %s89, %s90
    %p94 = pneg %p88
    %p95 = scmp.eq.s32.totalorder %s11, 2
    %p96 = por %p94, %p95
    %p97 = scmp.ne.s32.totalorder %s89, %s92
    %p98 = scmp.eq.s32.totalorder %s11, 0
    %p99 = por %p97, %p98
    %p100 = scmp.ne.s32.totalorder %s89, %s92
    %p101 = scmp.eq.s32.totalorder %s16, 2
    %p102 = por %p100, %p101
    %p103 = scmp.ne.s32.totalorder %s92, %s93
    %p104 = scmp.eq.s32.totalorder %s16, 0
    %p105 = por %p103, %p104
    %p106 = scmp.ne.s32.totalorder %s92, %s93
    %p107 = scmp.eq.s32.totalorder %s17, 2
    %p108 = por %p106, %p107
    %p110 = scmp.ne.s32.totalorder %s93, %s109
    %p111 = scmp.eq.s32.totalorder %s17, 0
    %p112 = por %p110, %p111
    %s113 = ssub.s32 %s11, %s18
    %p114 = scmp.eq.s32.totalorder %s113, 0
    %s116 = sadd.s32 %s115, 1
    %s117 = scalar_select %p114, %s115, %s116
    %p120 = pneg %p114
    %p121 = scmp.eq.s32.totalorder %s11, 2
    %p122 = por %p120, %p121
    %p123 = scmp.ne.s32.totalorder %s115, %s118
    %p124 = scmp.eq.s32.totalorder %s11, 0
    %p125 = por %p123, %p124
    %p126 = scmp.ne.s32.totalorder %s115, %s118
    %p127 = scmp.eq.s32.totalorder %s16, 2
    %p128 = por %p126, %p127
    %p129 = scmp.ne.s32.totalorder %s118, %s119
    %p130 = scmp.eq.s32.totalorder %s16, 0
    %p131 = por %p129, %p130
    %p132 = scmp.ne.s32.totalorder %s118, %s119
    %p133 = scmp.eq.s32.totalorder %s17, 2
    %p134 = por %p132, %p133
    %p136 = scmp.ne.s32.totalorder %s119, %s135
    %p137 = scmp.eq.s32.totalorder %s17, 0
    %p138 = por %p136, %p137
    %p139 = scmp.le.s32.totalorder 1, %s11
    %p140 = scmp.lt.s32.totalorder %s11, 4
    %p141 = pnand %p139, %p140
    %p142 = pneg %p141
    // Predicated region
    $region9: #{gin_convnet_forward.14} parent=5 // pred_check
      _
    $region10: #{gin_convnet_forward.14} parent=5 // pred_check_branch
      %144 = sbr.rel (%p141) target = $region12
    $region11: #{gin_convnet_forward.14} parent=5 // pred_region
      %s145 = ssub.s32 %s11, 1
      // Predicated region
      $region13: #{gin_convnet_forward.14} parent=11 // pred_check
        %p146 = pneg %p58
      $region14: #{gin_convnet_forward.14} parent=11 // pred_check_branch
        %148 = sbr.rel (%p146) target = $region16
      $region15: #{gin_convnet_forward.14} parent=11 // pred_region
        _
      $region16: #{gin_convnet_forward.14} parent=11 // pred_fallthru
        _
      // Predicated region
      $region17: #{gin_convnet_forward.14} parent=11 // pred_check
        %p149 = pneg %p79
      $region18: #{gin_convnet_forward.14} parent=11 // pred_check_branch
        %151 = sbr.rel (%p149) target = $region20
      $region19: #{gin_convnet_forward.14} parent=11 // pred_region
        _
      $region20: #{gin_convnet_forward.14} parent=11 // pred_fallthru
        _
    $region12: #{gin_convnet_forward.14} parent=5 // pred_fallthru
      _
    %p152 = scmp.lt.s32.totalorder %s11, 3
    // Predicated region
    $region21: #{gin_convnet_forward.14} parent=5 // pred_check
      %p153 = pneg %p152
    $region22: #{gin_convnet_forward.14} parent=5 // pred_check_branch
      %155 = sbr.rel (%p153) target = $region24
    $region23: #{gin_convnet_forward.14} parent=5 // pred_region
      // Predicated region
      $region25: #{gin_convnet_forward.14} parent=23 // pred_check
        %p156 = pneg %p31
      $region26: #{gin_convnet_forward.14} parent=23 // pred_check_branch
        %158 = sbr.rel (%p156) target = $region28
      $region27: #{gin_convnet_forward.14} parent=23 // pred_region
        %s159 = smul.u32 2, %s11
        %p160 = scmp.lt.s32.totalorder %s159, 5
        %s161 = scalar_select %p160, %s159, 5
        %s162 = smul.addr %s161, 8
        %s163 = scalar_lea.vmem %s0, %s162
        %s164 = smul.u32 2, %s11
      $region28: #{gin_convnet_forward.14} parent=23 // pred_fallthru
        _
    $region24: #{gin_convnet_forward.14} parent=5 // pred_fallthru
      _
    %p165 = scmp.le.s32.totalorder 1, %s11
    %p166 = scmp.lt.s32.totalorder %s11, 4
    %p167 = pnand %p165, %p166
    %p168 = pneg %p167
    // Predicated region
    $region29: #{gin_convnet_forward.14} parent=5 // pred_check
      _
    $region30: #{gin_convnet_forward.14} parent=5 // pred_check_branch
      %170 = sbr.rel (%p167) target = $region32
    $region31: #{gin_convnet_forward.14} parent=5 // pred_region
      %s171 = ssub.s32 %s11, 1
      %s172 = smul.u32 2, %s16
      %p173 = scmp.lt.s32.totalorder %s172, 5
      %s174 = scalar_select %p173, %s172, 5
      %s175 = smul.addr %s174, 8
      %s176 = scalar_lea.vmem %s0, %s175
      %p177 = pneg %p37
      %p178 = pneg %p34
      %p179 = pneg %p58
      %p180 = pneg %p55
      %p181 = pneg %p79
      %p182 = pneg %p76
      %p183 = pneg %p105
      %p184 = pneg %p102
      %s185 = smul.u32 2, %s16
      %p186 = scmp.lt.s32.totalorder %s185, 5
      %s187 = scalar_select %p186, %s185, 5
      %s188 = smul.addr %s187, 4
      %s189 = scalar_lea.vmem %s3, %s188
      %p190 = pneg %p131
      %p191 = pneg %p128
      %s192 = smul.u32 2, %s16
      %p193 = scmp.lt.s32.totalorder %s192, 5
      %s194 = scalar_select %p193, %s192, 5
      %s195 = smul.addr %s194, 4
      %s196 = scalar_lea.vmem %s4, %s195
      %s197 = smul.u32 2, %s16
      %p198 = scmp.lt.s32.totalorder %s197, 5
      %s199 = scalar_select %p198, %s197, 5
      %s200 = smul.addr %s199, 8
      %s201 = scalar_lea.vmem %s0, %s200
      %s202 = smul.u32 2, %s16
      %s203 = smul.u32 2, %s16
      %p204 = scmp.lt.s32.totalorder %s203, 5
      %s205 = scalar_select %p204, %s203, 5
      %s206 = smul.addr %s205, 4
      %s207 = scalar_lea.vmem %s3, %s206
      %s208 = smul.u32 2, %s16
      %s209 = smul.u32 2, %s16
      %p210 = scmp.lt.s32.totalorder %s209, 5
      %s211 = scalar_select %p210, %s209, 5
      %s212 = smul.addr %s211, 4
      %s213 = scalar_lea.vmem %s4, %s212
      %s214 = smul.u32 2, %s16
      %v215 = vld [vmem:[%s201] sm:$0xff]
      %v216 = vld [vmem:[%s201 + $0x8] sm:$0xff]
      %v217 = vld [vmem:[%s1] sm:$0x77]
      %v219 = vcombine.high %v217, %v217
      %vm220 = vcmask 23552
      %v222 = vsel %vm220, %v215, 0
      %v225 = vsel %vm220, %v216, 0
      %vm227 = vcmask 1042432
      %v228 = vsel %vm227, %v217, 0
      %v230 = vsel %vm227, %v219, 0
      %232 = vmatprep.subr.mxu0 %v230
      %233 = vmatpush1.msra.mxu0 %v228
      %234 = vmatprep.subr.mxu0 0.0
      %235 = vmatpush1.msra.mxu0 0.0
      %236 = vmatprep.subr.mxu0 0.0
      %237 = vmatpush1.msra.mxu0 0.0
      %238 = vmatprep.subr.mxu0 0.0
      %239 = vmatpush1.msra.mxu0 0.0
      %240 = vmatprep.subr.mxu0 0.0
      %241 = vmatpush1.msra.mxu0 0.0
      %242 = vmatprep.subr.mxu0 0.0
      %243 = vmatpush1.msra.mxu0 0.0
      %244 = vmatprep.subr.mxu0 0.0
      %245 = vmatpush1.msra.mxu0 0.0
      %246 = vmatprep.subr.mxu0 0.0
      %247 = vmatpush1.msra.mxu0 0.0
      %248 = vmatprep.subr.mxu0 0.0
      %249 = vmatpush1.msra.mxu0 0.0
      %250 = vmatprep.subr.mxu0 0.0
      %251 = vmatpush1.msra.mxu0 0.0
      %252 = vmatprep.subr.mxu0 0.0
      %253 = vmatpush1.msra.mxu0 0.0
      %254 = vmatprep.subr.mxu0 0.0
      %255 = vmatpush1.msra.mxu0 0.0
      %256 = vmatprep.subr.mxu0 0.0
      %257 = vmatpush1.msra.mxu0 0.0
      %258 = vmatprep.subr.mxu0 0.0
      %259 = vmatpush1.msra.mxu0 0.0
      %260 = vmatprep.subr.mxu0 0.0
      %261 = vmatpush1.msra.mxu0 0.0
      %262 = vmatprep.subr.mxu0 0.0
      %263 = vmatpush1.msra.mxu0 0.0
      %264 = vmatprep.subr.mxu0 0.0
      %265 = vmatpush1.msra.mxu0 0.0
      %266 = vmatprep.subr.mxu0 0.0
      %267 = vmatpush1.msra.mxu0 0.0
      %268 = vmatprep.subr.mxu0 0.0
      %269 = vmatpush1.msra.mxu0 0.0
      %270 = vmatprep.subr.mxu0 0.0
      %271 = vmatpush1.msra.mxu0 0.0
      %272 = vmatprep.subr.mxu0 0.0
      %273 = vmatpush1.msra.mxu0 0.0
      %274 = vmatprep.subr.mxu0 0.0
      %275 = vmatpush1.msra.mxu0 0.0
      %276 = vmatprep.subr.mxu0 0.0
      %277 = vmatpush1.msra.mxu0 0.0
      %278 = vmatprep.subr.mxu0 0.0
      %279 = vmatpush1.msra.mxu0 0.0
      %280 = vmatprep.subr.mxu0 0.0
      %281 = vmatpush1.msra.mxu0 0.0
      %282 = vmatprep.subr.mxu0 0.0
      %283 = vmatpush1.msra.mxu0 0.0
      %284 = vmatprep.subr.mxu0 0.0
      %285 = vmatpush1.msra.mxu0 0.0
      %286 = vmatprep.subr.mxu0 0.0
      %287 = vmatpush1.msra.mxu0 0.0
      %288 = vmatprep.subr.mxu0 0.0
      %289 = vmatpush1.msra.mxu0 0.0
      %290 = vmatprep.subr.mxu0 0.0
      %291 = vmatpush1.msra.mxu0 0.0
      %292 = vmatprep.subr.mxu0 0.0
      %293 = vmatpush1.msra.mxu0 0.0
      %294 = vmatprep.subr.mxu0 0.0
      %295 = vmatpush1.msra.mxu0 0.0
      %296 = vmatprep.mubr.f32.mxu0 0.0
      %297 = vmatmul.mubr.f32.gmra.mrb[0].mxu0 %v222
      %v298 = vpop.f32.mrb[0].mxu0
      %v299 = vadd.f32 0.0, %v298
      %v300 = vpop.f32.mrb[0].mxu0
      %v301 = vadd.f32 0.0, %v300
      %302 = vmatprep.mubr.f32.mxu0 0.0
      %303 = vmatmul.mubr.f32.gmra.mrb[0].mxu0 %v225
      %v304 = vpop.f32.mrb[0].mxu0
      %v305 = vadd.f32 0.0, %v304
      %v306 = vpop.f32.mrb[0].mxu0
      %v307 = vadd.f32 0.0, %v306
      %308 = vdwg.mxu0
      %v309 = vld [vmem:[%s2] sm:$0x1]
      %v311 = vlaneseq
      %v312 = vshrl.u32 %v311, 7
      %v313 = vsub.s32 0, %v312
      %v314 = vrot.slane %v309, %v313
      %v316 = vadd.f32 %v299, %v314
      %v317 = vadd.f32 %v305, %v314
      %v318 = vpack.c.bf16 %v317, %v316
      %v320 = vunpack.c.l.b16 %v318
      %v321 = vunpack.c.h.b16 %v318
      %v322 = vpack.c.b16 %v320, %v320
      %v323 = vpack.c.b16 %v321, %v321
      %326 = vst [vmem:[%s207] sm:$0xf] %v322
      %327 = vst [vmem:[%s207 + $0x4] sm:$0xf] %v323
      %v328 = vpack.c.bf16 %v307, %v301
      %v330 = vunpack.c.l.b16 %v328
      %v331 = vunpack.c.h.b16 %v328
      %v332 = vpack.c.b16 %v330, %v330
      %v333 = vpack.c.b16 %v331, %v331
      %336 = vst [vmem:[%s213] sm:$0xf] %v332
      %337 = vst [vmem:[%s213 + $0x4] sm:$0xf] %v333
      %s338 = smul.u32 2, %s16
      %p339 = scmp.lt.s32.totalorder %s338, 5
      %s340 = scalar_select %p339, %s338, 5
      %s341 = smul.addr %s340, 4
      %s342 = scalar_lea.vmem %s3, %s341
      %s343 = smul.u32 2, %s16
      %p344 = scmp.lt.s32.totalorder %s343, 5
      %s345 = scalar_select %p344, %s343, 5
      %s346 = smul.addr %s345, 4
      %s347 = scalar_lea.vmem %s4, %s346
      // Predicated region
      $region33: #{gin_convnet_forward.14} parent=31 // pred_check
        %p348 = pneg %p102
      $region34: #{gin_convnet_forward.14} parent=31 // pred_check_branch
        %350 = sbr.rel (%p348) target = $region36
      $region35: #{gin_convnet_forward.14} parent=31 // pred_region
        %s351 = smul.u32 2, %s16
      $region36: #{gin_convnet_forward.14} parent=31 // pred_fallthru
        _
      // Predicated region
      $region37: #{gin_convnet_forward.14} parent=31 // pred_check
        %p352 = pneg %p128
      $region38: #{gin_convnet_forward.14} parent=31 // pred_check_branch
        %354 = sbr.rel (%p352) target = $region40
      $region39: #{gin_convnet_forward.14} parent=31 // pred_region
        %s355 = smul.u32 2, %s16
      $region40: #{gin_convnet_forward.14} parent=31 // pred_fallthru
        _
    $region32: #{gin_convnet_forward.14} parent=5 // pred_fallthru
      _
    %p356 = scmp.le.s32.totalorder 2, %s11
    // Predicated region
    $region41: #{gin_convnet_forward.14} parent=5 // pred_check
      %p357 = pneg %p356
    $region42: #{gin_convnet_forward.14} parent=5 // pred_check_branch
      %359 = sbr.rel (%p357) target = $region44
    $region43: #{gin_convnet_forward.14} parent=5 // pred_region
      %s360 = ssub.s32 %s11, 2
      // Predicated region
      $region45: #{gin_convnet_forward.14} parent=43 // pred_check
        %p361 = pneg %p108
      $region46: #{gin_convnet_forward.14} parent=43 // pred_check_branch
        %363 = sbr.rel (%p361) target = $region48
      $region47: #{gin_convnet_forward.14} parent=43 // pred_region
        %s364 = smul.u32 2, %s17
        %p365 = scmp.lt.s32.totalorder %s364, 5
        %s366 = scalar_select %p365, %s364, 5
        %s367 = smul.addr %s366, 4
        %s368 = scalar_lea.vmem %s3, %s367
      $region48: #{gin_convnet_forward.14} parent=43 // pred_fallthru
        _
      // Predicated region
      $region49: #{gin_convnet_forward.14} parent=43 // pred_check
        %p369 = pneg %p134
      $region50: #{gin_convnet_forward.14} parent=43 // pred_check_branch
        %371 = sbr.rel (%p369) target = $region52
      $region51: #{gin_convnet_forward.14} parent=43 // pred_region
        %s372 = smul.u32 2, %s17
        %p373 = scmp.lt.s32.totalorder %s372, 5
        %s374 = scalar_select %p373, %s372, 5
        %s375 = smul.addr %s374, 4
        %s376 = scalar_lea.vmem %s4, %s375
      $region52: #{gin_convnet_forward.14} parent=43 // pred_fallthru
        _
    $region44: #{gin_convnet_forward.14} parent=5 // pred_fallthru
      _
  $region6: #{gin_convnet_forward.14} parent=0 // loop_footer
    %s15 = sadd.s32 1, %s11
  $region7: #{gin_convnet_forward.14} parent=0 // loop_footer_branch
    %10 = sbr.rel target = $region3
  $region8: #{gin_convnet_forward.14} parent=0 // loop_exit
    _

// kernel: gin_convnet_forward.15
$region0: #{gin_convnet_forward.15}
  #allocation0 [shape = 'u32[]', space=smem, size = 0x4, offset = 0x4, fixed_abs, tag = 'smem constant byte address 0x4 - core index']
  #allocation1 [shape = 'u32[144,128]{1,0:T(1,128)}', space=vmem, size = 0x12000, scoped, tag = 'internal scratch']
  %s0 = inlined_call_operand.vmem [shape: bf16[96,128], index: 0, kind: input, shape index: {}]
  %s1 = inlined_call_operand.vmem [shape: bf16[96,128], index: 1, kind: input, shape index: {}]
  %s2 = inlined_call_operand.vmem [shape: bf16[128,128], index: 2, kind: input, shape index: {}]
  %s3 = inlined_call_operand.vmem [shape: f32[1,128], index: 3, kind: input, shape index: {}]
  %s4 = inlined_call_operand.vmem [shape: f32[96,128], index: 4, kind: output, shape index: {}]
  %s5 = sld [smem:[#allocation0]]
  $region49: #{gin_convnet_forward.15} parent=0
    _
  %s7 = ssub.s32 1, %s5
  %s8 = scalar_select 0, %s7, %s5
  loop: start=0, step=1, limit=5
  $region2: #{gin_convnet_forward.15} parent=0 // loop_pre_header
    _
  $region3: #{gin_convnet_forward.15} parent=0 // loop_header
    %s10 = sphi 0, %s14
    %p11 = scmp.ge.s32.totalorder %s10, 5
    %s20 = sphi 0, %s22
    %s23 = sphi 0, %s20
    %s24 = sphi 0, %s23
    %s40 = sphi 0, %s24
    %s46 = sphi 0, %s48
    %s49 = sphi 0, %s46
    %s50 = sphi 0, %s49
    %s66 = sphi 0, %s50
    %s70 = sphi 0, %s70
    %s72 = sphi 0, %s70
    %s73 = sphi 0, %s72
    %s87 = sphi 0, %s73
    %s91 = sphi 0, %s91
    %s93 = sphi 0, %s91
    %s94 = sphi 0, %s93
    %s108 = sphi 0, %s94
    %s114 = sphi 0, %s116
    %s117 = sphi 0, %s114
    %s118 = sphi 0, %s117
    %s134 = sphi 0, %s118
  $region4: #{gin_convnet_forward.15} parent=0 // loop_header_branch
    %13 = sbr.rel (%p11) target = $region8
  $region5: #{gin_convnet_forward.15} parent=0 // loop_body
    %s15 = ssub.s32 %s10, 1
    %s16 = ssub.s32 %s10, 2
    %s17 = sadd.s32 %s10, 1
    %s18 = ssub.s32 %s10, %s17
    %p19 = scmp.eq.s32.totalorder %s18, 0
    %s21 = sadd.s32 %s20, 1
    %s22 = scalar_select %p19, %s20, %s21
    %p25 = pneg %p19
    %p26 = scmp.eq.s32.totalorder %s10, 2
    %p27 = por %p25, %p26
    %p28 = scmp.ne.s32.totalorder %s20, %s23
    %p29 = scmp.eq.s32.totalorder %s10, 0
    %p30 = por %p28, %p29
    %p31 = scmp.ne.s32.totalorder %s20, %s23
    %p32 = scmp.eq.s32.totalorder %s15, 2
    %p33 = por %p31, %p32
    %p34 = scmp.ne.s32.totalorder %s23, %s24
    %p35 = scmp.eq.s32.totalorder %s15, 0
    %p36 = por %p34, %p35
    %p37 = scmp.ne.s32.totalorder %s23, %s24
    %p38 = scmp.eq.s32.totalorder %s16, 2
    %p39 = por %p37, %p38
    %p41 = scmp.ne.s32.totalorder %s24, %s40
    %p42 = scmp.eq.s32.totalorder %s16, 0
    %p43 = por %p41, %p42
    %s44 = ssub.s32 %s10, %s17
    %p45 = scmp.eq.s32.totalorder %s44, 0
    %s47 = sadd.s32 %s46, 1
    %s48 = scalar_select %p45, %s46, %s47
    %p51 = pneg %p45
    %p52 = scmp.eq.s32.totalorder %s10, 2
    %p53 = por %p51, %p52
    %p54 = scmp.ne.s32.totalorder %s46, %s49
    %p55 = scmp.eq.s32.totalorder %s10, 0
    %p56 = por %p54, %p55
    %p57 = scmp.ne.s32.totalorder %s46, %s49
    %p58 = scmp.eq.s32.totalorder %s15, 2
    %p59 = por %p57, %p58
    %p60 = scmp.ne.s32.totalorder %s49, %s50
    %p61 = scmp.eq.s32.totalorder %s15, 0
    %p62 = por %p60, %p61
    %p63 = scmp.ne.s32.totalorder %s49, %s50
    %p64 = scmp.eq.s32.totalorder %s16, 2
    %p65 = por %p63, %p64
    %p67 = scmp.ne.s32.totalorder %s50, %s66
    %p68 = scmp.eq.s32.totalorder %s16, 0
    %p69 = por %p67, %p68
    %s71 = sadd.s32 %s70, 1
    %p74 = scmp.eq.s32.totalorder %s10, 2
    %p75 = scmp.ne.s32.totalorder %s70, %s72
    %p76 = scmp.eq.s32.totalorder %s10, 0
    %p77 = por %p75, %p76
    %p78 = scmp.ne.s32.totalorder %s70, %s72
    %p79 = scmp.eq.s32.totalorder %s15, 2
    %p80 = por %p78, %p79
    %p81 = scmp.ne.s32.totalorder %s72, %s73
    %p82 = scmp.eq.s32.totalorder %s15, 0
    %p83 = por %p81, %p82
    %p84 = scmp.ne.s32.totalorder %s72, %s73
    %p85 = scmp.eq.s32.totalorder %s16, 2
    %p86 = por %p84, %p85
    %p88 = scmp.ne.s32.totalorder %s73, %s87
    %p89 = scmp.eq.s32.totalorder %s16, 0
    %p90 = por %p88, %p89
    %s92 = sadd.s32 %s91, 1
    %p95 = scmp.eq.s32.totalorder %s10, 2
    %p96 = scmp.ne.s32.totalorder %s91, %s93
    %p97 = scmp.eq.s32.totalorder %s10, 0
    %p98 = por %p96, %p97
    %p99 = scmp.ne.s32.totalorder %s91, %s93
    %p100 = scmp.eq.s32.totalorder %s15, 2
    %p101 = por %p99, %p100
    %p102 = scmp.ne.s32.totalorder %s93, %s94
    %p103 = scmp.eq.s32.totalorder %s15, 0
    %p104 = por %p102, %p103
    %p105 = scmp.ne.s32.totalorder %s93, %s94
    %p106 = scmp.eq.s32.totalorder %s16, 2
    %p107 = por %p105, %p106
    %p109 = scmp.ne.s32.totalorder %s94, %s108
    %p110 = scmp.eq.s32.totalorder %s16, 0
    %p111 = por %p109, %p110
    %s112 = ssub.s32 %s10, %s17
    %p113 = scmp.eq.s32.totalorder %s112, 0
    %s115 = sadd.s32 %s114, 1
    %s116 = scalar_select %p113, %s114, %s115
    %p119 = pneg %p113
    %p120 = scmp.eq.s32.totalorder %s10, 2
    %p121 = por %p119, %p120
    %p122 = scmp.ne.s32.totalorder %s114, %s117
    %p123 = scmp.eq.s32.totalorder %s10, 0
    %p124 = por %p122, %p123
    %p125 = scmp.ne.s32.totalorder %s114, %s117
    %p126 = scmp.eq.s32.totalorder %s15, 2
    %p127 = por %p125, %p126
    %p128 = scmp.ne.s32.totalorder %s117, %s118
    %p129 = scmp.eq.s32.totalorder %s15, 0
    %p130 = por %p128, %p129
    %p131 = scmp.ne.s32.totalorder %s117, %s118
    %p132 = scmp.eq.s32.totalorder %s16, 2
    %p133 = por %p131, %p132
    %p135 = scmp.ne.s32.totalorder %s118, %s134
    %p136 = scmp.eq.s32.totalorder %s16, 0
    %p137 = por %p135, %p136
    %p138 = scmp.le.s32.totalorder 1, %s10
    %p139 = scmp.lt.s32.totalorder %s10, 4
    %p140 = pnand %p138, %p139
    %p141 = pneg %p140
    // Predicated region
    $region9: #{gin_convnet_forward.15} parent=5 // pred_check
      _
    $region10: #{gin_convnet_forward.15} parent=5 // pred_check_branch
      %143 = sbr.rel (%p140) target = $region12
    $region11: #{gin_convnet_forward.15} parent=5 // pred_region
      %s144 = ssub.s32 %s10, 1
      // Predicated region
      $region13: #{gin_convnet_forward.15} parent=11 // pred_check
        %p145 = pneg %p83
      $region14: #{gin_convnet_forward.15} parent=11 // pred_check_branch
        %147 = sbr.rel (%p145) target = $region16
      $region15: #{gin_convnet_forward.15} parent=11 // pred_region
        _
      $region16: #{gin_convnet_forward.15} parent=11 // pred_fallthru
        _
      // Predicated region
      $region17: #{gin_convnet_forward.15} parent=11 // pred_check
        %p148 = pneg %p104
      $region18: #{gin_convnet_forward.15} parent=11 // pred_check_branch
        %150 = sbr.rel (%p148) target = $region20
      $region19: #{gin_convnet_forward.15} parent=11 // pred_region
        _
      $region20: #{gin_convnet_forward.15} parent=11 // pred_fallthru
        _
    $region12: #{gin_convnet_forward.15} parent=5 // pred_fallthru
      _
    %p151 = scmp.lt.s32.totalorder %s10, 3
    // Predicated region
    $region21: #{gin_convnet_forward.15} parent=5 // pred_check
      %p152 = pneg %p151
    $region22: #{gin_convnet_forward.15} parent=5 // pred_check_branch
      %154 = sbr.rel (%p152) target = $region24
    $region23: #{gin_convnet_forward.15} parent=5 // pred_region
      // Predicated region
      $region25: #{gin_convnet_forward.15} parent=23 // pred_check
        %p155 = pneg %p30
      $region26: #{gin_convnet_forward.15} parent=23 // pred_check_branch
        %157 = sbr.rel (%p155) target = $region28
      $region27: #{gin_convnet_forward.15} parent=23 // pred_region
        %s158 = smul.u32 4, %s10
        %p159 = scmp.lt.s32.totalorder %s158, 11
        %s160 = scalar_select %p159, %s158, 11
        %s161 = smul.addr %s160, 4
        %s162 = scalar_lea.vmem %s0, %s161
        %s163 = smul.u32 4, %s10
      $region28: #{gin_convnet_forward.15} parent=23 // pred_fallthru
        _
      // Predicated region
      $region29: #{gin_convnet_forward.15} parent=23 // pred_check
        %p164 = pneg %p56
      $region30: #{gin_convnet_forward.15} parent=23 // pred_check_branch
        %166 = sbr.rel (%p164) target = $region32
      $region31: #{gin_convnet_forward.15} parent=23 // pred_region
        %s167 = smul.u32 4, %s10
        %p168 = scmp.lt.s32.totalorder %s167, 11
        %s169 = scalar_select %p168, %s167, 11
        %s170 = smul.addr %s169, 4
        %s171 = scalar_lea.vmem %s1, %s170
        %s172 = smul.u32 4, %s10
      $region32: #{gin_convnet_forward.15} parent=23 // pred_fallthru
        _
    $region24: #{gin_convnet_forward.15} parent=5 // pred_fallthru
      _
    %p173 = scmp.le.s32.totalorder 1, %s10
    %p174 = scmp.lt.s32.totalorder %s10, 4
    %p175 = pnand %p173, %p174
    %p176 = pneg %p175
    // Predicated region
    $region33: #{gin_convnet_forward.15} parent=5 // pred_check
      _
    $region34: #{gin_convnet_forward.15} parent=5 // pred_check_branch
      %178 = sbr.rel (%p175) target = $region36
    $region35: #{gin_convnet_forward.15} parent=5 // pred_region
      %s179 = ssub.s32 %s10, 1
      %s180 = smul.u32 4, %s15
      %p181 = scmp.lt.s32.totalorder %s180, 11
      %s182 = scalar_select %p181, %s180, 11
      %s183 = smul.addr %s182, 4
      %s184 = scalar_lea.vmem %s0, %s183
      %p185 = pneg %p36
      %p186 = pneg %p33
      %s187 = smul.u32 4, %s15
      %p188 = scmp.lt.s32.totalorder %s187, 11
      %s189 = scalar_select %p188, %s187, 11
      %s190 = smul.addr %s189, 4
      %s191 = scalar_lea.vmem %s1, %s190
      %p192 = pneg %p62
      %p193 = pneg %p59
      %p194 = pneg %p83
      %p195 = pneg %p80
      %p196 = pneg %p104
      %p197 = pneg %p101
      %p198 = pneg %p130
      %p199 = pneg %p127
      %s200 = smul.u32 4, %s15
      %p201 = scmp.lt.s32.totalorder %s200, 11
      %s202 = scalar_select %p201, %s200, 11
      %s203 = smul.addr %s202, 8
      %s204 = scalar_lea.vmem %s4, %s203
      %s205 = smul.u32 4, %s15
      %p206 = scmp.lt.s32.totalorder %s205, 11
      %s207 = scalar_select %p206, %s205, 11
      %s208 = smul.addr %s207, 4
      %s209 = scalar_lea.vmem %s0, %s208
      %s210 = smul.u32 4, %s15
      %s211 = smul.u32 4, %s15
      %p212 = scmp.lt.s32.totalorder %s211, 11
      %s213 = scalar_select %p212, %s211, 11
      %s214 = smul.addr %s213, 4
      %s215 = scalar_lea.vmem %s1, %s214
      %s216 = smul.u32 4, %s15
      %s217 = smul.u32 4, %s15
      %p218 = scmp.lt.s32.totalorder %s217, 11
      %s219 = scalar_select %p218, %s217, 11
      %s220 = smul.addr %s219, 8
      %s221 = scalar_lea.vmem %s4, %s220
      %s222 = smul.u32 4, %s15
      %v224 = vld [vmem:[%s209] sm:$0xf]
      %v225 = vld [vmem:[%s209 + $0x4] sm:$0xf]
      %v226 = vld [vmem:[%s209 + $0x8] sm:$0xf]
      %v227 = vld [vmem:[%s209 + $0xc] sm:$0xf]
      %v228 = vunpack.c.l.bf16 %v224
      %v229 = vunpack.c.l.bf16 %v225
      %v230 = vunpack.c.l.bf16 %v226
      %v231 = vunpack.c.l.bf16 %v227
      %v232 = vld [vmem:[%s215] sm:$0xf]
      %v233 = vld [vmem:[%s215 + $0x4] sm:$0xf]
      %v234 = vld [vmem:[%s215 + $0x8] sm:$0xf]
      %v235 = vld [vmem:[%s215 + $0xc] sm:$0xf]
      %v236 = vunpack.c.l.bf16 %v232
      %v237 = vunpack.c.l.bf16 %v233
      %v238 = vunpack.c.l.bf16 %v234
      %v239 = vunpack.c.l.bf16 %v235
      %v240 = vadd.f32 %v228, %v236
      %v241 = vadd.f32 %v229, %v237
      %v242 = vadd.f32 %v230, %v238
      %v243 = vadd.f32 %v231, %v239
      %v244 = vmax.f32 %v240, 0.0
      %v245 = vmax.f32 %v241, 0.0
      %v246 = vmax.f32 %v242, 0.0
      %v247 = vmax.f32 %v243, 0.0
      %v248 = vpack.c.bf16 %v245, %v244
      %v249 = vpack.c.bf16 %v247, %v246
      %v250 = vld [vmem:[%s2] sm:$0xf]
      %v251 = vld [vmem:[%s2 + $0x4] sm:$0xf]
      %v252 = vld [vmem:[%s2 + $0x8] sm:$0xf]
      %v253 = vld [vmem:[%s2 + $0xc] sm:$0xf]
      %v254 = vld [vmem:[%s2 + $0x10] sm:$0xf]
      %v255 = vld [vmem:[%s2 + $0x14] sm:$0xf]
      %v256 = vld [vmem:[%s2 + $0x18] sm:$0xf]
      %v257 = vld [vmem:[%s2 + $0x1c] sm:$0xf]
      %v258 = vld [vmem:[%s2 + $0x20] sm:$0xf]
      %v259 = vld [vmem:[%s2 + $0x24] sm:$0xf]
      %v260 = vld [vmem:[%s2 + $0x28] sm:$0xf]
      %v261 = vld [vmem:[%s2 + $0x2c] sm:$0xf]
      %v262 = vld [vmem:[%s2 + $0x30] sm:$0xf]
      %v263 = vld [vmem:[%s2 + $0x34] sm:$0xf]
      %v264 = vld [vmem:[%s2 + $0x38] sm:$0xf]
      %v265 = vld [vmem:[%s2 + $0x3c] sm:$0xf]
      %v266 = vld [vmem:[%s3] sm:$0x1]
      %v268 = vlaneseq
      %v269 = vshrl.u32 %v268, 7
      %v270 = vsub.s32 0, %v269
      %v271 = vrot.slane %v266, %v270
      %v289 = vunpack.c.l.b16 %v250
      %v290 = vunpack.c.l.b16 %v251
      %v291 = vunpack.c.l.b16 %v252
      %v292 = vunpack.c.l.b16 %v253
      %v293 = vunpack.c.l.b16 %v254
      %v294 = vunpack.c.l.b16 %v255
      %v295 = vunpack.c.l.b16 %v256
      %v296 = vunpack.c.l.b16 %v257
      %v297 = vunpack.c.l.b16 %v258
      %v298 = vunpack.c.l.b16 %v259
      %v299 = vunpack.c.l.b16 %v260
      %v300 = vunpack.c.l.b16 %v261
      %v301 = vunpack.c.l.b16 %v262
      %v302 = vunpack.c.l.b16 %v263
      %v303 = vunpack.c.l.b16 %v264
      %v304 = vunpack.c.l.b16 %v265
      %v305 = vpack.c.b16 %v290, %v289
      %v306 = vpack.c.b16 %v292, %v291
      %v307 = vpack.c.b16 %v294, %v293
      %v308 = vpack.c.b16 %v296, %v295
      %v309 = vpack.c.b16 %v298, %v297
      %v310 = vpack.c.b16 %v300, %v299
      %v311 = vpack.c.b16 %v302, %v301
      %v312 = vpack.c.b16 %v304, %v303
      %321 = vmatprep.subr.bf16.mxu0 0
      %322 = vmatpush1.bf16.msra.mxu0 %v305
      %323 = vmatprep.subr.bf16.mxu0 0
      %324 = vmatpush1.bf16.msra.mxu0 %v306
      %325 = vmatprep.subr.bf16.mxu0 0
      %326 = vmatpush1.bf16.msra.mxu0 %v307
      %327 = vmatprep.subr.bf16.mxu0 0
      %328 = vmatpush1.bf16.msra.mxu0 %v308
      %329 = vmatprep.subr.bf16.mxu0 0
      %330 = vmatpush1.bf16.msra.mxu0 %v309
      %331 = vmatprep.subr.bf16.mxu0 0
      %332 = vmatpush1.bf16.msra.mxu0 %v310
      %333 = vmatprep.subr.bf16.mxu0 0
      %334 = vmatpush1.bf16.msra.mxu0 %v311
      %335 = vmatprep.subr.bf16.mxu0 0
      %336 = vmatpush1.bf16.msra.mxu0 %v312
      %337 = vmatprep.subr.bf16.mxu0 0
      %338 = vmatpush1.bf16.msra.mxu0 0
      %339 = vmatprep.subr.bf16.mxu0 0
      %340 = vmatpush1.bf16.msra.mxu0 0
      %341 = vmatprep.subr.bf16.mxu0 0
      %342 = vmatpush1.bf16.msra.mxu0 0
      %343 = vmatprep.subr.bf16.mxu0 0
      %344 = vmatpush1.bf16.msra.mxu0 0
      %345 = vmatprep.subr.bf16.mxu0 0
      %346 = vmatpush1.bf16.msra.mxu0 0
      %347 = vmatprep.subr.bf16.mxu0 0
      %348 = vmatpush1.bf16.msra.mxu0 0
      %349 = vmatprep.subr.bf16.mxu0 0
      %350 = vmatpush1.bf16.msra.mxu0 0
      %351 = vmatprep.subr.bf16.mxu0 0
      %352 = vmatpush1.bf16.msra.mxu0 0
      %353 = vmatprep.mubr.bf16.mxu0 0
      %354 = vmatmul.mubr.bf16.gmra.mrb[0].mxu0 %v248
      %v355 = vpop.f32.mrb[0].mxu0
      %v356 = vadd.f32 %v271, %v355
      %v357 = vpop.f32.mrb[0].mxu0
      %v358 = vpop.f32.mrb[0].mxu0
      %v359 = vadd.f32 %v271, %v358
      %v360 = vpop.f32.mrb[0].mxu0
      %361 = vmatprep.mubr.bf16.mxu0 0
      %362 = vmatmul.mubr.bf16.gmra.mrb[0].mxu0 %v249
      %v363 = vpop.f32.mrb[0].mxu0
      %v364 = vadd.f32 %v271, %v363
      %v365 = vpop.f32.mrb[0].mxu0
      %v366 = vpop.f32.mrb[0].mxu0
      %v367 = vadd.f32 %v271, %v366
      %v368 = vpop.f32.mrb[0].mxu0
      %369 = vdwg.mxu0
      %370 = vst [vmem:[%s221] sm:$0xff] %v356
      %371 = vst [vmem:[%s221 + $0x8] sm:$0xff] %v359
      %372 = vst [vmem:[%s221 + $0x10] sm:$0xff] %v364
      %373 = vst [vmem:[%s221 + $0x18] sm:$0xff] %v367
      %s374 = smul.u32 4, %s15
      %p375 = scmp.lt.s32.totalorder %s374, 11
      %s376 = scalar_select %p375, %s374, 11
      %s377 = smul.addr %s376, 8
      %s378 = scalar_lea.vmem %s4, %s377
      // Predicated region
      $region37: #{gin_convnet_forward.15} parent=35 // pred_check
        %p379 = pneg %p127
      $region38: #{gin_convnet_forward.15} parent=35 // pred_check_branch
        %381 = sbr.rel (%p379) target = $region40
      $region39: #{gin_convnet_forward.15} parent=35 // pred_region
        %s382 = smul.u32 4, %s15
      $region40: #{gin_convnet_forward.15} parent=35 // pred_fallthru
        _
    $region36: #{gin_convnet_forward.15} parent=5 // pred_fallthru
      _
    %p383 = scmp.le.s32.totalorder 2, %s10
    // Predicated region
    $region41: #{gin_convnet_forward.15} parent=5 // pred_check
      %p384 = pneg %p383
    $region42: #{gin_convnet_forward.15} parent=5 // pred_check_branch
      %386 = sbr.rel (%p384) target = $region44
    $region43: #{gin_convnet_forward.15} parent=5 // pred_region
      %s387 = ssub.s32 %s10, 2
      // Predicated region
      $region45: #{gin_convnet_forward.15} parent=43 // pred_check
        %p388 = pneg %p133
      $region46: #{gin_convnet_forward.15} parent=43 // pred_check_branch
        %390 = sbr.rel (%p388) target = $region48
      $region47: #{gin_convnet_forward.15} parent=43 // pred_region
        %s391 = smul.u32 4, %s16
        %p392 = scmp.lt.s32.totalorder %s391, 11
        %s393 = scalar_select %p392, %s391, 11
        %s394 = smul.addr %s393, 8
        %s395 = scalar_lea.vmem %s4, %s394
      $region48: #{gin_convnet_forward.15} parent=43 // pred_fallthru
        _
    $region44: #{gin_convnet_forward.15} parent=5 // pred_fallthru
      _
  $region6: #{gin_convnet_forward.15} parent=0 // loop_footer
    %s14 = sadd.s32 1, %s10
  $region7: #{gin_convnet_forward.15} parent=0 // loop_footer_branch
    %9 = sbr.rel target = $region3
  $region8: #{gin_convnet_forward.15} parent=0 // loop_exit
    _

// kernel: gin_convnet_forward.16
$region0: #{gin_convnet_forward.16}
  #allocation0 [shape = 'u32[]', space=smem, size = 0x4, offset = 0x4, fixed_abs, tag = 'smem constant byte address 0x4 - core index']
  #allocation1 [shape = 'u32[144,128]{1,0:T(1,128)}', space=vmem, size = 0x12000, scoped, tag = 'internal scratch']
  %s0 = inlined_call_operand.vmem [shape: f32[48,128], index: 0, kind: input, shape index: {}]
  %s1 = inlined_call_operand.vmem [shape: f32[3,2,128], index: 1, kind: output, shape index: {}]
  %s2 = sld [smem:[#allocation0]]
  $region37: #{gin_convnet_forward.16} parent=0
    _
  %s4 = ssub.s32 1, %s2
  %s5 = scalar_select 0, %s4, %s2
  loop: start=0, step=1, limit=5
  $region2: #{gin_convnet_forward.16} parent=0 // loop_pre_header
    _
  $region3: #{gin_convnet_forward.16} parent=0 // loop_header
    %s7 = sphi 0, %s11
    %p8 = scmp.ge.s32.totalorder %s7, 5
    %s17 = sphi 0, %s19
    %s20 = sphi 0, %s17
    %s21 = sphi 0, %s20
    %s37 = sphi 0, %s21
    %s43 = sphi 0, %s45
    %s46 = sphi 0, %s43
    %s47 = sphi 0, %s46
    %s63 = sphi 0, %s47
  $region4: #{gin_convnet_forward.16} parent=0 // loop_header_branch
    %10 = sbr.rel (%p8) target = $region8
  $region5: #{gin_convnet_forward.16} parent=0 // loop_body
    %s12 = ssub.s32 %s7, 1
    %s13 = ssub.s32 %s7, 2
    %s14 = sadd.s32 %s7, 1
    %s15 = ssub.s32 %s7, %s14
    %p16 = scmp.eq.s32.totalorder %s15, 0
    %s18 = sadd.s32 %s17, 1
    %s19 = scalar_select %p16, %s17, %s18
    %p22 = pneg %p16
    %p23 = scmp.eq.s32.totalorder %s7, 2
    %p24 = por %p22, %p23
    %p25 = scmp.ne.s32.totalorder %s17, %s20
    %p26 = scmp.eq.s32.totalorder %s7, 0
    %p27 = por %p25, %p26
    %p28 = scmp.ne.s32.totalorder %s17, %s20
    %p29 = scmp.eq.s32.totalorder %s12, 2
    %p30 = por %p28, %p29
    %p31 = scmp.ne.s32.totalorder %s20, %s21
    %p32 = scmp.eq.s32.totalorder %s12, 0
    %p33 = por %p31, %p32
    %p34 = scmp.ne.s32.totalorder %s20, %s21
    %p35 = scmp.eq.s32.totalorder %s13, 2
    %p36 = por %p34, %p35
    %p38 = scmp.ne.s32.totalorder %s21, %s37
    %p39 = scmp.eq.s32.totalorder %s13, 0
    %p40 = por %p38, %p39
    %s41 = ssub.s32 %s7, %s14
    %p42 = scmp.eq.s32.totalorder %s41, 0
    %s44 = sadd.s32 %s43, 1
    %s45 = scalar_select %p42, %s43, %s44
    %p48 = pneg %p42
    %p49 = scmp.eq.s32.totalorder %s7, 2
    %p50 = por %p48, %p49
    %p51 = scmp.ne.s32.totalorder %s43, %s46
    %p52 = scmp.eq.s32.totalorder %s7, 0
    %p53 = por %p51, %p52
    %p54 = scmp.ne.s32.totalorder %s43, %s46
    %p55 = scmp.eq.s32.totalorder %s12, 2
    %p56 = por %p54, %p55
    %p57 = scmp.ne.s32.totalorder %s46, %s47
    %p58 = scmp.eq.s32.totalorder %s12, 0
    %p59 = por %p57, %p58
    %p60 = scmp.ne.s32.totalorder %s46, %s47
    %p61 = scmp.eq.s32.totalorder %s13, 2
    %p62 = por %p60, %p61
    %p64 = scmp.ne.s32.totalorder %s47, %s63
    %p65 = scmp.eq.s32.totalorder %s13, 0
    %p66 = por %p64, %p65
    %p67 = scmp.le.s32.totalorder 1, %s7
    %p68 = scmp.lt.s32.totalorder %s7, 4
    %p69 = pnand %p67, %p68
    %p70 = pneg %p69
    // Predicated region
    $region9: #{gin_convnet_forward.16} parent=5 // pred_check
      _
    $region10: #{gin_convnet_forward.16} parent=5 // pred_check_branch
      %72 = sbr.rel (%p69) target = $region12
    $region11: #{gin_convnet_forward.16} parent=5 // pred_region
      %s73 = ssub.s32 %s7, 1
    $region12: #{gin_convnet_forward.16} parent=5 // pred_fallthru
      _
    %p74 = scmp.lt.s32.totalorder %s7, 3
    // Predicated region
    $region13: #{gin_convnet_forward.16} parent=5 // pred_check
      %p75 = pneg %p74
    $region14: #{gin_convnet_forward.16} parent=5 // pred_check_branch
      %77 = sbr.rel (%p75) target = $region16
    $region15: #{gin_convnet_forward.16} parent=5 // pred_region
      // Predicated region
      $region17: #{gin_convnet_forward.16} parent=15 // pred_check
        %p78 = pneg %p27
      $region18: #{gin_convnet_forward.16} parent=15 // pred_check_branch
        %80 = sbr.rel (%p78) target = $region20
      $region19: #{gin_convnet_forward.16} parent=15 // pred_region
        %s81 = smul.u32 2, %s7
        %p82 = scmp.lt.s32.totalorder %s81, 5
        %s83 = scalar_select %p82, %s81, 5
        %s84 = smul.addr %s83, 8
        %s85 = scalar_lea.vmem %s0, %s84
        %s86 = smul.u32 2, %s7
      $region20: #{gin_convnet_forward.16} parent=15 // pred_fallthru
        _
    $region16: #{gin_convnet_forward.16} parent=5 // pred_fallthru
      _
    %p87 = scmp.le.s32.totalorder 1, %s7
    %p88 = scmp.lt.s32.totalorder %s7, 4
    %p89 = pnand %p87, %p88
    %p90 = pneg %p89
    // Predicated region
    $region21: #{gin_convnet_forward.16} parent=5 // pred_check
      _
    $region22: #{gin_convnet_forward.16} parent=5 // pred_check_branch
      %92 = sbr.rel (%p89) target = $region24
    $region23: #{gin_convnet_forward.16} parent=5 // pred_region
      %s93 = ssub.s32 %s7, 1
      %s94 = smul.u32 2, %s12
      %p95 = scmp.lt.s32.totalorder %s94, 5
      %s96 = scalar_select %p95, %s94, 5
      %s97 = smul.addr %s96, 8
      %s98 = scalar_lea.vmem %s0, %s97
      %p99 = pneg %p33
      %p100 = pneg %p30
      %p101 = pneg %p59
      %p102 = pneg %p56
      %p103 = scmp.lt.s32.totalorder %s12, 2
      %s104 = scalar_select %p103, %s12, 2
      %s105 = smul.addr %s104, 2
      %s106 = scalar_lea.vmem %s1, %s105
      %s107 = smul.u32 2, %s12
      %p108 = scmp.lt.s32.totalorder %s107, 5
      %s109 = scalar_select %p108, %s107, 5
      %s110 = smul.addr %s109, 8
      %s111 = scalar_lea.vmem %s0, %s110
      %s112 = smul.u32 2, %s12
      %p113 = scmp.lt.s32.totalorder %s12, 2
      %s114 = scalar_select %p113, %s12, 2
      %s115 = smul.addr %s114, 2
      %s116 = scalar_lea.vmem %s1, %s115
      %v117 = vld [vmem:[%s111] sm:$0xff]
      %v118 = vld [vmem:[%s111 + $0x8] sm:$0xff]
      %v119 = vmax.f32 %v117, 0.0
      %v120 = vmax.f32 %v118, 0.0
      %v121 = vadd.f32 %v119, %v120
      %v122 = vrot.slane %v121, 4
      %v123 = vadd.f32 %v121, %v122
      %v124 = vrot.slane %v123, 2
      %v125 = vadd.f32 %v123, %v124
      %v126 = vrot.slane %v125, 1
      %v127 = vadd.f32 %v125, %v126
      %v128 = vmul.f32 %v119, %v119
      %v129 = vmul.f32 %v120, %v120
      %v130 = vadd.f32 %v128, %v129
      %v131 = vrot.slane %v130, 4
      %v132 = vadd.f32 %v130, %v131
      %v133 = vrot.slane %v132, 2
      %v134 = vadd.f32 %v132, %v133
      %v135 = vrot.slane %v134, 1
      %v136 = vadd.f32 %v134, %v135
      %vm137 = vcmask 1040384
      %v138 = vsel %vm137, %v127, %v136
      %139 = vst [vmem:[%s116] sm:$0x3] %v138
      %p140 = scmp.lt.s32.totalorder %s12, 2
      %s141 = scalar_select %p140, %s12, 2
      %s142 = smul.addr %s141, 2
      %s143 = scalar_lea.vmem %s1, %s142
      // Predicated region
      $region25: #{gin_convnet_forward.16} parent=23 // pred_check
        %p144 = pneg %p56
      $region26: #{gin_convnet_forward.16} parent=23 // pred_check_branch
        %146 = sbr.rel (%p144) target = $region28
      $region27: #{gin_convnet_forward.16} parent=23 // pred_region
        _
      $region28: #{gin_convnet_forward.16} parent=23 // pred_fallthru
        _
    $region24: #{gin_convnet_forward.16} parent=5 // pred_fallthru
      _
    %p147 = scmp.le.s32.totalorder 2, %s7
    // Predicated region
    $region29: #{gin_convnet_forward.16} parent=5 // pred_check
      %p148 = pneg %p147
    $region30: #{gin_convnet_forward.16} parent=5 // pred_check_branch
      %150 = sbr.rel (%p148) target = $region32
    $region31: #{gin_convnet_forward.16} parent=5 // pred_region
      %s151 = ssub.s32 %s7, 2
      // Predicated region
      $region33: #{gin_convnet_forward.16} parent=31 // pred_check
        %p152 = pneg %p62
      $region34: #{gin_convnet_forward.16} parent=31 // pred_check_branch
        %154 = sbr.rel (%p152) target = $region36
      $region35: #{gin_convnet_forward.16} parent=31 // pred_region
        %p155 = scmp.lt.s32.totalorder %s13, 2
        %s156 = scalar_select %p155, %s13, 2
        %s157 = smul.addr %s156, 2
        %s158 = scalar_lea.vmem %s1, %s157
      $region36: #{gin_convnet_forward.16} parent=31 // pred_fallthru
        _
    $region32: #{gin_convnet_forward.16} parent=5 // pred_fallthru
      _
  $region6: #{gin_convnet_forward.16} parent=0 // loop_footer
    %s11 = sadd.s32 1, %s7
  $region7: #{gin_convnet_forward.16} parent=0 // loop_footer_branch
    %6 = sbr.rel target = $region3
  $region8: #{gin_convnet_forward.16} parent=0 // loop_exit
    _

// kernel: gin_convnet_forward.17
$region0: #{gin_convnet_forward.17}
  #allocation0 [shape = 'u32[]', space=smem, size = 0x4, offset = 0x4, fixed_abs, tag = 'smem constant byte address 0x4 - core index']
  #allocation1 [shape = 'u32[144,128]{1,0:T(1,128)}', space=vmem, size = 0x12000, scoped, tag = 'internal scratch']
  %s0 = inlined_call_operand.vmem [shape: f32[48,128], index: 0, kind: input, shape index: {}]
  %s1 = inlined_call_operand.vmem [shape: f32[1,128], index: 1, kind: input, shape index: {}]
  %s2 = inlined_call_operand.vmem [shape: f32[1,128], index: 2, kind: input, shape index: {}]
  %s3 = inlined_call_operand.vmem [shape: bf16[128,512], index: 3, kind: input, shape index: {}]
  %s4 = inlined_call_operand.vmem [shape: f32[1,256], index: 4, kind: input, shape index: {}]
  %s5 = inlined_call_operand.vmem [shape: bf16[48,256], index: 5, kind: output, shape index: {0}]
  %s6 = inlined_call_operand.vmem [shape: bf16[48,256], index: 6, kind: output, shape index: {1}]
  %7 = xla_tuple %s5, %s6
  %s8 = sld [smem:[#allocation0]]
  $region61: #{gin_convnet_forward.17} parent=0
    _
  %s10 = ssub.s32 1, %s8
  %s11 = scalar_select 0, %s10, %s8
  loop: start=0, step=1, limit=5
  $region2: #{gin_convnet_forward.17} parent=0 // loop_pre_header
    _
  $region3: #{gin_convnet_forward.17} parent=0 // loop_header
    %s13 = sphi 0, %s17
    %p14 = scmp.ge.s32.totalorder %s13, 5
    %s23 = sphi 0, %s25
    %s26 = sphi 0, %s23
    %s27 = sphi 0, %s26
    %s43 = sphi 0, %s27
    %s47 = sphi 0, %s47
    %s49 = sphi 0, %s47
    %s50 = sphi 0, %s49
    %s64 = sphi 0, %s50
    %s68 = sphi 0, %s68
    %s70 = sphi 0, %s68
    %s71 = sphi 0, %s70
    %s85 = sphi 0, %s71
    %s89 = sphi 0, %s89
    %s91 = sphi 0, %s89
    %s92 = sphi 0, %s91
    %s106 = sphi 0, %s92
    %s110 = sphi 0, %s110
    %s112 = sphi 0, %s110
    %s113 = sphi 0, %s112
    %s127 = sphi 0, %s113
    %s133 = sphi 0, %s135
    %s136 = sphi 0, %s133
    %s137 = sphi 0, %s136
    %s153 = sphi 0, %s137
    %s159 = sphi 0, %s161
    %s162 = sphi 0, %s159
    %s163 = sphi 0, %s162
    %s179 = sphi 0, %s163
  $region4: #{gin_convnet_forward.17} parent=0 // loop_header_branch
    %16 = sbr.rel (%p14) target = $region8
  $region5: #{gin_convnet_forward.17} parent=0 // loop_body
    %s18 = ssub.s32 %s13, 1
    %s19 = ssub.s32 %s13, 2
    %s20 = sadd.s32 %s13, 1
    %s21 = ssub.s32 %s13, %s20
    %p22 = scmp.eq.s32.totalorder %s21, 0
    %s24 = sadd.s32 %s23, 1
    %s25 = scalar_select %p22, %s23, %s24
    %p28 = pneg %p22
    %p29 = scmp.eq.s32.totalorder %s13, 2
    %p30 = por %p28, %p29
    %p31 = scmp.ne.s32.totalorder %s23, %s26
    %p32 = scmp.eq.s32.totalorder %s13, 0
    %p33 = por %p31, %p32
    %p34 = scmp.ne.s32.totalorder %s23, %s26
    %p35 = scmp.eq.s32.totalorder %s18, 2
    %p36 = por %p34, %p35
    %p37 = scmp.ne.s32.totalorder %s26, %s27
    %p38 = scmp.eq.s32.totalorder %s18, 0
    %p39 = por %p37, %p38
    %p40 = scmp.ne.s32.totalorder %s26, %s27
    %p41 = scmp.eq.s32.totalorder %s19, 2
    %p42 = por %p40, %p41
    %p44 = scmp.ne.s32.totalorder %s27, %s43
    %p45 = scmp.eq.s32.totalorder %s19, 0
    %p46 = por %p44, %p45
    %s48 = sadd.s32 %s47, 1
    %p51 = scmp.eq.s32.totalorder %s13, 2
    %p52 = scmp.ne.s32.totalorder %s47, %s49
    %p53 = scmp.eq.s32.totalorder %s13, 0
    %p54 = por %p52, %p53
    %p55 = scmp.ne.s32.totalorder %s47, %s49
    %p56 = scmp.eq.s32.totalorder %s18, 2
    %p57 = por %p55, %p56
    %p58 = scmp.ne.s32.totalorder %s49, %s50
    %p59 = scmp.eq.s32.totalorder %s18, 0
    %p60 = por %p58, %p59
    %p61 = scmp.ne.s32.totalorder %s49, %s50
    %p62 = scmp.eq.s32.totalorder %s19, 2
    %p63 = por %p61, %p62
    %p65 = scmp.ne.s32.totalorder %s50, %s64
    %p66 = scmp.eq.s32.totalorder %s19, 0
    %p67 = por %p65, %p66
    %s69 = sadd.s32 %s68, 1
    %p72 = scmp.eq.s32.totalorder %s13, 2
    %p73 = scmp.ne.s32.totalorder %s68, %s70
    %p74 = scmp.eq.s32.totalorder %s13, 0
    %p75 = por %p73, %p74
    %p76 = scmp.ne.s32.totalorder %s68, %s70
    %p77 = scmp.eq.s32.totalorder %s18, 2
    %p78 = por %p76, %p77
    %p79 = scmp.ne.s32.totalorder %s70, %s71
    %p80 = scmp.eq.s32.totalorder %s18, 0
    %p81 = por %p79, %p80
    %p82 = scmp.ne.s32.totalorder %s70, %s71
    %p83 = scmp.eq.s32.totalorder %s19, 2
    %p84 = por %p82, %p83
    %p86 = scmp.ne.s32.totalorder %s71, %s85
    %p87 = scmp.eq.s32.totalorder %s19, 0
    %p88 = por %p86, %p87
    %s90 = sadd.s32 %s89, 1
    %p93 = scmp.eq.s32.totalorder %s13, 2
    %p94 = scmp.ne.s32.totalorder %s89, %s91
    %p95 = scmp.eq.s32.totalorder %s13, 0
    %p96 = por %p94, %p95
    %p97 = scmp.ne.s32.totalorder %s89, %s91
    %p98 = scmp.eq.s32.totalorder %s18, 2
    %p99 = por %p97, %p98
    %p100 = scmp.ne.s32.totalorder %s91, %s92
    %p101 = scmp.eq.s32.totalorder %s18, 0
    %p102 = por %p100, %p101
    %p103 = scmp.ne.s32.totalorder %s91, %s92
    %p104 = scmp.eq.s32.totalorder %s19, 2
    %p105 = por %p103, %p104
    %p107 = scmp.ne.s32.totalorder %s92, %s106
    %p108 = scmp.eq.s32.totalorder %s19, 0
    %p109 = por %p107, %p108
    %s111 = sadd.s32 %s110, 1
    %p114 = scmp.eq.s32.totalorder %s13, 2
    %p115 = scmp.ne.s32.totalorder %s110, %s112
    %p116 = scmp.eq.s32.totalorder %s13, 0
    %p117 = por %p115, %p116
    %p118 = scmp.ne.s32.totalorder %s110, %s112
    %p119 = scmp.eq.s32.totalorder %s18, 2
    %p120 = por %p118, %p119
    %p121 = scmp.ne.s32.totalorder %s112, %s113
    %p122 = scmp.eq.s32.totalorder %s18, 0
    %p123 = por %p121, %p122
    %p124 = scmp.ne.s32.totalorder %s112, %s113
    %p125 = scmp.eq.s32.totalorder %s19, 2
    %p126 = por %p124, %p125
    %p128 = scmp.ne.s32.totalorder %s113, %s127
    %p129 = scmp.eq.s32.totalorder %s19, 0
    %p130 = por %p128, %p129
    %s131 = ssub.s32 %s13, %s20
    %p132 = scmp.eq.s32.totalorder %s131, 0
    %s134 = sadd.s32 %s133, 1
    %s135 = scalar_select %p132, %s133, %s134
    %p138 = pneg %p132
    %p139 = scmp.eq.s32.totalorder %s13, 2
    %p140 = por %p138, %p139
    %p141 = scmp.ne.s32.totalorder %s133, %s136
    %p142 = scmp.eq.s32.totalorder %s13, 0
    %p143 = por %p141, %p142
    %p144 = scmp.ne.s32.totalorder %s133, %s136
    %p145 = scmp.eq.s32.totalorder %s18, 2
    %p146 = por %p144, %p145
    %p147 = scmp.ne.s32.totalorder %s136, %s137
    %p148 = scmp.eq.s32.totalorder %s18, 0
    %p149 = por %p147, %p148
    %p150 = scmp.ne.s32.totalorder %s136, %s137
    %p151 = scmp.eq.s32.totalorder %s19, 2
    %p152 = por %p150, %p151
    %p154 = scmp.ne.s32.totalorder %s137, %s153
    %p155 = scmp.eq.s32.totalorder %s19, 0
    %p156 = por %p154, %p155
    %s157 = ssub.s32 %s13, %s20
    %p158 = scmp.eq.s32.totalorder %s157, 0
    %s160 = sadd.s32 %s159, 1
    %s161 = scalar_select %p158, %s159, %s160
    %p164 = pneg %p158
    %p165 = scmp.eq.s32.totalorder %s13, 2
    %p166 = por %p164, %p165
    %p167 = scmp.ne.s32.totalorder %s159, %s162
    %p168 = scmp.eq.s32.totalorder %s13, 0
    %p169 = por %p167, %p168
    %p170 = scmp.ne.s32.totalorder %s159, %s162
    %p171 = scmp.eq.s32.totalorder %s18, 2
    %p172 = por %p170, %p171
    %p173 = scmp.ne.s32.totalorder %s162, %s163
    %p174 = scmp.eq.s32.totalorder %s18, 0
    %p175 = por %p173, %p174
    %p176 = scmp.ne.s32.totalorder %s162, %s163
    %p177 = scmp.eq.s32.totalorder %s19, 2
    %p178 = por %p176, %p177
    %p180 = scmp.ne.s32.totalorder %s163, %s179
    %p181 = scmp.eq.s32.totalorder %s19, 0
    %p182 = por %p180, %p181
    %p183 = scmp.le.s32.totalorder 1, %s13
    %p184 = scmp.lt.s32.totalorder %s13, 4
    %p185 = pnand %p183, %p184
    %p186 = pneg %p185
    // Predicated region
    $region9: #{gin_convnet_forward.17} parent=5 // pred_check
      _
    $region10: #{gin_convnet_forward.17} parent=5 // pred_check_branch
      %188 = sbr.rel (%p185) target = $region12
    $region11: #{gin_convnet_forward.17} parent=5 // pred_region
      %s189 = ssub.s32 %s13, 1
      // Predicated region
      $region13: #{gin_convnet_forward.17} parent=11 // pred_check
        %p190 = pneg %p60
      $region14: #{gin_convnet_forward.17} parent=11 // pred_check_branch
        %192 = sbr.rel (%p190) target = $region16
      $region15: #{gin_convnet_forward.17} parent=11 // pred_region
        _
      $region16: #{gin_convnet_forward.17} parent=11 // pred_fallthru
        _
      // Predicated region
      $region17: #{gin_convnet_forward.17} parent=11 // pred_check
        %p193 = pneg %p81
      $region18: #{gin_convnet_forward.17} parent=11 // pred_check_branch
        %195 = sbr.rel (%p193) target = $region20
      $region19: #{gin_convnet_forward.17} parent=11 // pred_region
        _
      $region20: #{gin_convnet_forward.17} parent=11 // pred_fallthru
        _
      // Predicated region
      $region21: #{gin_convnet_forward.17} parent=11 // pred_check
        %p196 = pneg %p102
      $region22: #{gin_convnet_forward.17} parent=11 // pred_check_branch
        %198 = sbr.rel (%p196) target = $region24
      $region23: #{gin_convnet_forward.17} parent=11 // pred_region
        _
      $region24: #{gin_convnet_forward.17} parent=11 // pred_fallthru
        _
      // Predicated region
      $region25: #{gin_convnet_forward.17} parent=11 // pred_check
        %p199 = pneg %p123
      $region26: #{gin_convnet_forward.17} parent=11 // pred_check_branch
        %201 = sbr.rel (%p199) target = $region28
      $region27: #{gin_convnet_forward.17} parent=11 // pred_region
        _
      $region28: #{gin_convnet_forward.17} parent=11 // pred_fallthru
        _
    $region12: #{gin_convnet_forward.17} parent=5 // pred_fallthru
      _
    %p202 = scmp.lt.s32.totalorder %s13, 3
    // Predicated region
    $region29: #{gin_convnet_forward.17} parent=5 // pred_check
      %p203 = pneg %p202
    $region30: #{gin_convnet_forward.17} parent=5 // pred_check_branch
      %205 = sbr.rel (%p203) target = $region32
    $region31: #{gin_convnet_forward.17} parent=5 // pred_region
      // Predicated region
      $region33: #{gin_convnet_forward.17} parent=31 // pred_check
        %p206 = pneg %p33
      $region34: #{gin_convnet_forward.17} parent=31 // pred_check_branch
        %208 = sbr.rel (%p206) target = $region36
      $region35: #{gin_convnet_forward.17} parent=31 // pred_region
        %s209 = smul.u32 2, %s13
        %p210 = scmp.lt.s32.totalorder %s209, 5
        %s211 = scalar_select %p210, %s209, 5
        %s212 = smul.addr %s211, 8
        %s213 = scalar_lea.vmem %s0, %s212
        %s214 = smul.u32 2, %s13
      $region36: #{gin_convnet_forward.17} parent=31 // pred_fallthru
        _
    $region32: #{gin_convnet_forward.17} parent=5 // pred_fallthru
      _
    %p215 = scmp.le.s32.totalorder 1, %s13
    %p216 = scmp.lt.s32.totalorder %s13, 4
    %p217 = pnand %p215, %p216
    %p218 = pneg %p217
    // Predicated region
    $region37: #{gin_convnet_forward.17} parent=5 // pred_check
      _
    $region38: #{gin_convnet_forward.17} parent=5 // pred_check_branch
      %220 = sbr.rel (%p217) target = $region40
    $region39: #{gin_convnet_forward.17} parent=5 // pred_region
      %s221 = ssub.s32 %s13, 1
      %s222 = smul.u32 2, %s18
      %p223 = scmp.lt.s32.totalorder %s222, 5
      %s224 = scalar_select %p223, %s222, 5
      %s225 = smul.addr %s224, 8
      %s226 = scalar_lea.vmem %s0, %s225
      %p227 = pneg %p39
      %p228 = pneg %p36
      %p229 = pneg %p60
      %p230 = pneg %p57
      %p231 = pneg %p81
      %p232 = pneg %p78
      %p233 = pneg %p102
      %p234 = pneg %p99
      %p235 = pneg %p123
      %p236 = pneg %p120
      %p237 = pneg %p149
      %p238 = pneg %p146
      %s239 = smul.u32 2, %s18
      %p240 = scmp.lt.s32.totalorder %s239, 5
      %s241 = scalar_select %p240, %s239, 5
      %s242 = smul.addr %s241, 2
      %s243 = smul.addr %s242, 4
      %s244 = scalar_lea.vmem %s5, %s243
      %p245 = pneg %p175
      %p246 = pneg %p172
      %s247 = smul.u32 2, %s18
      %p248 = scmp.lt.s32.totalorder %s247, 5
      %s249 = scalar_select %p248, %s247, 5
      %s250 = smul.addr %s249, 2
      %s251 = smul.addr %s250, 4
      %s252 = scalar_lea.vmem %s6, %s251
      %s253 = smul.u32 2, %s18
      %p254 = scmp.lt.s32.totalorder %s253, 5
      %s255 = scalar_select %p254, %s253, 5
      %s256 = smul.addr %s255, 8
      %s257 = scalar_lea.vmem %s0, %s256
      %s258 = smul.u32 2, %s18
      %s259 = smul.u32 2, %s18
      %p260 = scmp.lt.s32.totalorder %s259, 5
      %s261 = scalar_select %p260, %s259, 5
      %s262 = smul.addr %s261, 2
      %s263 = smul.addr %s262, 4
      %s264 = scalar_lea.vmem %s5, %s263
      %s265 = smul.u32 2, %s18
      %s266 = smul.u32 2, %s18
      %p267 = scmp.lt.s32.totalorder %s266, 5
      %s268 = scalar_select %p267, %s266, 5
      %s269 = smul.addr %s268, 2
      %s270 = smul.addr %s269, 4
      %s271 = scalar_lea.vmem %s6, %s270
      %s272 = smul.u32 2, %s18
      %v274 = vld [vmem:[%s257] sm:$0xff]
      %v275 = vld [vmem:[%s257 + $0x8] sm:$0xff]
      %v276 = vmax.f32 %v274, 0.0
      %v277 = vmax.f32 %v275, 0.0
      %v278 = vld [vmem:[%s1] sm:$0x1]
      %v280 = vlaneseq
      %v281 = vshrl.u32 %v280, 7
      %v282 = vsub.s32 0, %v281
      %v283 = vrot.slane %v278, %v282
      %v285 = vmul.f32 %v276, %v283
      %v286 = vmul.f32 %v277, %v283
      %v287 = vld [vmem:[%s2] sm:$0x1]
      %v289 = vlaneseq
      %v290 = vshrl.u32 %v289, 7
      %v291 = vsub.s32 0, %v290
      %v292 = vrot.slane %v287, %v291
      %v294 = vadd.f32 %v285, %v292
      %v295 = vadd.f32 %v286, %v292
      %v296 = vpack.c.bf16 %v295, %v294
      %v297 = vld [vmem:[%s3] sm:$0xff]
      %v298 = vld [vmem:[%s3 + $0x8] sm:$0xff]
      %v299 = vld [vmem:[%s3 + $0x10] sm:$0xff]
      %v300 = vld [vmem:[%s3 + $0x18] sm:$0xff]
      %v301 = vld [vmem:[%s3 + $0x20] sm:$0xff]
      %v302 = vld [vmem:[%s3 + $0x28] sm:$0xff]
      %v303 = vld [vmem:[%s3 + $0x30] sm:$0xff]
      %v304 = vld [vmem:[%s3 + $0x38] sm:$0xff]
      %v305 = vld [vmem:[%s3 + $0x40] sm:$0xff]
      %v306 = vld [vmem:[%s3 + $0x48] sm:$0xff]
      %v307 = vld [vmem:[%s3 + $0x50] sm:$0xff]
      %v308 = vld [vmem:[%s3 + $0x58] sm:$0xff]
      %v309 = vld [vmem:[%s3 + $0x60] sm:$0xff]
      %v310 = vld [vmem:[%s3 + $0x68] sm:$0xff]
      %v311 = vld [vmem:[%s3 + $0x70] sm:$0xff]
      %v312 = vld [vmem:[%s3 + $0x78] sm:$0xff]
      %v313 = vld [vmem:[%s3 + $0x80] sm:$0xff]
      %v314 = vld [vmem:[%s3 + $0x88] sm:$0xff]
      %v315 = vld [vmem:[%s3 + $0x90] sm:$0xff]
      %v316 = vld [vmem:[%s3 + $0x98] sm:$0xff]
      %v317 = vld [vmem:[%s3 + $0xa0] sm:$0xff]
      %v318 = vld [vmem:[%s3 + $0xa8] sm:$0xff]
      %v319 = vld [vmem:[%s3 + $0xb0] sm:$0xff]
      %v320 = vld [vmem:[%s3 + $0xb8] sm:$0xff]
      %v321 = vld [vmem:[%s3 + $0xc0] sm:$0xff]
      %v322 = vld [vmem:[%s3 + $0xc8] sm:$0xff]
      %v323 = vld [vmem:[%s3 + $0xd0] sm:$0xff]
      %v324 = vld [vmem:[%s3 + $0xd8] sm:$0xff]
      %v325 = vld [vmem:[%s3 + $0xe0] sm:$0xff]
      %v326 = vld [vmem:[%s3 + $0xe8] sm:$0xff]
      %v327 = vld [vmem:[%s3 + $0xf0] sm:$0xff]
      %v328 = vld [vmem:[%s3 + $0xf8] sm:$0xff]
      %v361 = vunpack.c.l.b16 %v297
      %v362 = vunpack.c.h.b16 %v297
      %v363 = vunpack.c.l.b16 %v298
      %v364 = vunpack.c.h.b16 %v298
      %v365 = vunpack.c.l.b16 %v299
      %v366 = vunpack.c.h.b16 %v299
      %v367 = vunpack.c.l.b16 %v300
      %v368 = vunpack.c.h.b16 %v300
      %v369 = vunpack.c.l.b16 %v301
      %v370 = vunpack.c.h.b16 %v301
      %v371 = vunpack.c.l.b16 %v302
      %v372 = vunpack.c.h.b16 %v302
      %v373 = vunpack.c.l.b16 %v303
      %v374 = vunpack.c.h.b16 %v303
      %v375 = vunpack.c.l.b16 %v304
      %v376 = vunpack.c.h.b16 %v304
      %v377 = vunpack.c.l.b16 %v305
      %v378 = vunpack.c.h.b16 %v305
      %v379 = vunpack.c.l.b16 %v306
      %v380 = vunpack.c.h.b16 %v306
      %v381 = vunpack.c.l.b16 %v307
      %v382 = vunpack.c.h.b16 %v307
      %v383 = vunpack.c.l.b16 %v308
      %v384 = vunpack.c.h.b16 %v308
      %v385 = vunpack.c.l.b16 %v309
      %v386 = vunpack.c.h.b16 %v309
      %v387 = vunpack.c.l.b16 %v310
      %v388 = vunpack.c.h.b16 %v310
      %v389 = vunpack.c.l.b16 %v311
      %v390 = vunpack.c.h.b16 %v311
      %v391 = vunpack.c.l.b16 %v312
      %v392 = vunpack.c.h.b16 %v312
      %v393 = vunpack.c.l.b16 %v313
      %v394 = vunpack.c.h.b16 %v313
      %v395 = vunpack.c.l.b16 %v314
      %v396 = vunpack.c.h.b16 %v314
      %v397 = vunpack.c.l.b16 %v315
      %v398 = vunpack.c.h.b16 %v315
      %v399 = vunpack.c.l.b16 %v316
      %v400 = vunpack.c.h.b16 %v316
      %v401 = vunpack.c.l.b16 %v317
      %v402 = vunpack.c.h.b16 %v317
      %v403 = vunpack.c.l.b16 %v318
      %v404 = vunpack.c.h.b16 %v318
      %v405 = vunpack.c.l.b16 %v319
      %v406 = vunpack.c.h.b16 %v319
      %v407 = vunpack.c.l.b16 %v320
      %v408 = vunpack.c.h.b16 %v320
      %v409 = vunpack.c.l.b16 %v321
      %v410 = vunpack.c.h.b16 %v321
      %v411 = vunpack.c.l.b16 %v322
      %v412 = vunpack.c.h.b16 %v322
      %v413 = vunpack.c.l.b16 %v323
      %v414 = vunpack.c.h.b16 %v323
      %v415 = vunpack.c.l.b16 %v324
      %v416 = vunpack.c.h.b16 %v324
      %v417 = vunpack.c.l.b16 %v325
      %v418 = vunpack.c.h.b16 %v325
      %v419 = vunpack.c.l.b16 %v326
      %v420 = vunpack.c.h.b16 %v326
      %v421 = vunpack.c.l.b16 %v327
      %v422 = vunpack.c.h.b16 %v327
      %v423 = vunpack.c.l.b16 %v328
      %v424 = vunpack.c.h.b16 %v328
      %v425 = vpack.c.b16 %v365, %v361
      %v426 = vpack.c.b16 %v366, %v362
      %v427 = vpack.c.b16 %v367, %v363
      %v428 = vpack.c.b16 %v368, %v364
      %v429 = vpack.c.b16 %v373, %v369
      %v430 = vpack.c.b16 %v374, %v370
      %v431 = vpack.c.b16 %v375, %v371
      %v432 = vpack.c.b16 %v376, %v372
      %v433 = vpack.c.b16 %v381, %v377
      %v434 = vpack.c.b16 %v382, %v378
      %v435 = vpack.c.b16 %v383, %v379
      %v436 = vpack.c.b16 %v384, %v380
      %v437 = vpack.c.b16 %v389, %v385
      %v438 = vpack.c.b16 %v390, %v386
      %v439 = vpack.c.b16 %v391, %v387
      %v440 = vpack.c.b16 %v392, %v388
      %v441 = vpack.c.b16 %v397, %v393
      %v442 = vpack.c.b16 %v398, %v394
      %v443 = vpack.c.b16 %v399, %v395
      %v444 = vpack.c.b16 %v400, %v396
      %v445 = vpack.c.b16 %v405, %v401
      %v446 = vpack.c.b16 %v406, %v402
      %v447 = vpack.c.b16 %v407, %v403
      %v448 = vpack.c.b16 %v408, %v404
      %v449 = vpack.c.b16 %v413, %v409
      %v450 = vpack.c.b16 %v414, %v410
      %v451 = vpack.c.b16 %v415, %v411
      %v452 = vpack.c.b16 %v416, %v412
      %v453 = vpack.c.b16 %v421, %v417
      %v454 = vpack.c.b16 %v422, %v418
      %v455 = vpack.c.b16 %v423, %v419
      %v456 = vpack.c.b16 %v424, %v420
      %489 = vmatprep.subr.bf16.mxu0 %v426
      %490 = vmatpush1.bf16.msra.mxu0 %v425
      %491 = vmatprep.subr.bf16.mxu0 %v430
      %492 = vmatpush1.bf16.msra.mxu0 %v429
      %493 = vmatprep.subr.bf16.mxu0 %v434
      %494 = vmatpush1.bf16.msra.mxu0 %v433
      %495 = vmatprep.subr.bf16.mxu0 %v438
      %496 = vmatpush1.bf16.msra.mxu0 %v437
      %497 = vmatprep.subr.bf16.mxu0 %v442
      %498 = vmatpush1.bf16.msra.mxu0 %v441
      %499 = vmatprep.subr.bf16.mxu0 %v446
      %500 = vmatpush1.bf16.msra.mxu0 %v445
      %501 = vmatprep.subr.bf16.mxu0 %v450
      %502 = vmatpush1.bf16.msra.mxu0 %v449
      %503 = vmatprep.subr.bf16.mxu0 %v454
      %504 = vmatpush1.bf16.msra.mxu0 %v453
      %505 = vmatprep.subr.bf16.mxu0 0
      %506 = vmatpush1.bf16.msra.mxu0 0
      %507 = vmatprep.subr.bf16.mxu0 0
      %508 = vmatpush1.bf16.msra.mxu0 0
      %509 = vmatprep.subr.bf16.mxu0 0
      %510 = vmatpush1.bf16.msra.mxu0 0
      %511 = vmatprep.subr.bf16.mxu0 0
      %512 = vmatpush1.bf16.msra.mxu0 0
      %513 = vmatprep.subr.bf16.mxu0 0
      %514 = vmatpush1.bf16.msra.mxu0 0
      %515 = vmatprep.subr.bf16.mxu0 0
      %516 = vmatpush1.bf16.msra.mxu0 0
      %517 = vmatprep.subr.bf16.mxu0 0
      %518 = vmatpush1.bf16.msra.mxu0 0
      %519 = vmatprep.subr.bf16.mxu0 0
      %520 = vmatpush1.bf16.msra.mxu0 0
      %521 = vmatprep.mubr.bf16.mxu0 0
      %522 = vmatmul.mubr.bf16.gmra.mrb[0].mxu0 %v296
      %v523 = vpop.f32.mrb[0].mxu0
      %v524 = vadd.f32 0.0, %v523
      %v525 = vpop.f32.mrb[0].mxu0
      %v526 = vadd.f32 0.0, %v525
      %v527 = vpop.f32.mrb[0].mxu0
      %v528 = vadd.f32 0.0, %v527
      %v529 = vpop.f32.mrb[0].mxu0
      %v530 = vadd.f32 0.0, %v529
      %531 = vdwg.mxu0
      %532 = vmatprep.subr.bf16.mxu0 %v428
      %533 = vmatpush1.bf16.msra.mxu0 %v427
      %534 = vmatprep.subr.bf16.mxu0 %v432
      %535 = vmatpush1.bf16.msra.mxu0 %v431
      %536 = vmatprep.subr.bf16.mxu0 %v436
      %537 = vmatpush1.bf16.msra.mxu0 %v435
      %538 = vmatprep.subr.bf16.mxu0 %v440
      %539 = vmatpush1.bf16.msra.mxu0 %v439
      %540 = vmatprep.subr.bf16.mxu0 %v444
      %541 = vmatpush1.bf16.msra.mxu0 %v443
      %542 = vmatprep.subr.bf16.mxu0 %v448
      %543 = vmatpush1.bf16.msra.mxu0 %v447
      %544 = vmatprep.subr.bf16.mxu0 %v452
      %545 = vmatpush1.bf16.msra.mxu0 %v451
      %546 = vmatprep.subr.bf16.mxu0 %v456
      %547 = vmatpush1.bf16.msra.mxu0 %v455
      %548 = vmatprep.subr.bf16.mxu0 0
      %549 = vmatpush1.bf16.msra.mxu0 0
      %550 = vmatprep.subr.bf16.mxu0 0
      %551 = vmatpush1.bf16.msra.mxu0 0
      %552 = vmatprep.subr.bf16.mxu0 0
      %553 = vmatpush1.bf16.msra.mxu0 0
      %554 = vmatprep.subr.bf16.mxu0 0
      %555 = vmatpush1.bf16.msra.mxu0 0
      %556 = vmatprep.subr.bf16.mxu0 0
      %557 = vmatpush1.bf16.msra.mxu0 0
      %558 = vmatprep.subr.bf16.mxu0 0
      %559 = vmatpush1.bf16.msra.mxu0 0
      %560 = vmatprep.subr.bf16.mxu0 0
      %561 = vmatpush1.bf16.msra.mxu0 0
      %562 = vmatprep.subr.bf16.mxu0 0
      %563 = vmatpush1.bf16.msra.mxu0 0
      %564 = vmatprep.mubr.bf16.mxu0 0
      %565 = vmatmul.mubr.bf16.gmra.mrb[0].mxu0 %v296
      %v566 = vpop.f32.mrb[0].mxu0
      %v567 = vadd.f32 0.0, %v566
      %v568 = vpop.f32.mrb[0].mxu0
      %v569 = vadd.f32 0.0, %v568
      %v570 = vpop.f32.mrb[0].mxu0
      %v571 = vadd.f32 0.0, %v570
      %v572 = vpop.f32.mrb[0].mxu0
      %v573 = vadd.f32 0.0, %v572
      %574 = vdwg.mxu0
      %v575 = vld [vmem:[%s4] sm:$0x3]
      %v577 = vlaneseq
      %v578 = vshrl.u32 %v577, 7
      %v579 = vsub.s32 0, %v578
      %v580 = vrot.slane %v575, %v579
      %v581 = vlaneseq
      %v582 = vshrl.u32 %v581, 7
      %v583 = vsub.s32 1, %v582
      %v584 = vrot.slane %v575, %v583
      %v587 = vadd.f32 %v524, %v580
      %v588 = vadd.f32 %v526, %v584
      %v589 = vadd.f32 %v528, %v580
      %v590 = vadd.f32 %v530, %v584
      %v591 = vpack.c.bf16 %v589, %v587
      %v592 = vpack.c.bf16 %v590, %v588
      %v595 = vunpack.c.l.b16 %v591
      %v596 = vunpack.c.l.b16 %v592
      %v597 = vunpack.c.h.b16 %v591
      %v598 = vunpack.c.h.b16 %v592
      %v599 = vpack.c.b16 %v596, %v595
      %v600 = vpack.c.b16 %v598, %v597
      %603 = vst [vmem:[%s264] sm:$0xff] %v599
      %604 = vst [vmem:[%s264 + $0x8] sm:$0xff] %v600
      %v605 = vpack.c.bf16 %v571, %v567
      %v606 = vpack.c.bf16 %v573, %v569
      %v609 = vunpack.c.l.b16 %v605
      %v610 = vunpack.c.l.b16 %v606
      %v611 = vunpack.c.h.b16 %v605
      %v612 = vunpack.c.h.b16 %v606
      %v613 = vpack.c.b16 %v610, %v609
      %v614 = vpack.c.b16 %v612, %v611
      %617 = vst [vmem:[%s271] sm:$0xff] %v613
      %618 = vst [vmem:[%s271 + $0x8] sm:$0xff] %v614
      %s619 = smul.u32 2, %s18
      %p620 = scmp.lt.s32.totalorder %s619, 5
      %s621 = scalar_select %p620, %s619, 5
      %s622 = smul.addr %s621, 2
      %s623 = smul.addr %s622, 4
      %s624 = scalar_lea.vmem %s5, %s623
      %s625 = smul.u32 2, %s18
      %p626 = scmp.lt.s32.totalorder %s625, 5
      %s627 = scalar_select %p626, %s625, 5
      %s628 = smul.addr %s627, 2
      %s629 = smul.addr %s628, 4
      %s630 = scalar_lea.vmem %s6, %s629
      // Predicated region
      $region41: #{gin_convnet_forward.17} parent=39 // pred_check
        %p631 = pneg %p146
      $region42: #{gin_convnet_forward.17} parent=39 // pred_check_branch
        %633 = sbr.rel (%p631) target = $region44
      $region43: #{gin_convnet_forward.17} parent=39 // pred_region
        %s634 = smul.u32 2, %s18
      $region44: #{gin_convnet_forward.17} parent=39 // pred_fallthru
        _
      // Predicated region
      $region45: #{gin_convnet_forward.17} parent=39 // pred_check
        %p635 = pneg %p172
      $region46: #{gin_convnet_forward.17} parent=39 // pred_check_branch
        %637 = sbr.rel (%p635) target = $region48
      $region47: #{gin_convnet_forward.17} parent=39 // pred_region
        %s638 = smul.u32 2, %s18
      $region48: #{gin_convnet_forward.17} parent=39 // pred_fallthru
        _
    $region40: #{gin_convnet_forward.17} parent=5 // pred_fallthru
      _
    %p639 = scmp.le.s32.totalorder 2, %s13
    // Predicated region
    $region49: #{gin_convnet_forward.17} parent=5 // pred_check
      %p640 = pneg %p639
    $region50: #{gin_convnet_forward.17} parent=5 // pred_check_branch
      %642 = sbr.rel (%p640) target = $region52
    $region51: #{gin_convnet_forward.17} parent=5 // pred_region
      %s643 = ssub.s32 %s13, 2
      // Predicated region
      $region53: #{gin_convnet_forward.17} parent=51 // pred_check
        %p644 = pneg %p152
      $region54: #{gin_convnet_forward.17} parent=51 // pred_check_branch
        %646 = sbr.rel (%p644) target = $region56
      $region55: #{gin_convnet_forward.17} parent=51 // pred_region
        %s647 = smul.u32 2, %s19
        %p648 = scmp.lt.s32.totalorder %s647, 5
        %s649 = scalar_select %p648, %s647, 5
        %s650 = smul.addr %s649, 2
        %s651 = smul.addr %s650, 4
        %s652 = scalar_lea.vmem %s5, %s651
      $region56: #{gin_convnet_forward.17} parent=51 // pred_fallthru
        _
      // Predicated region
      $region57: #{gin_convnet_forward.17} parent=51 // pred_check
        %p653 = pneg %p178
      $region58: #{gin_convnet_forward.17} parent=51 // pred_check_branch
        %655 = sbr.rel (%p653) target = $region60
      $region59: #{gin_convnet_forward.17} parent=51 // pred_region
        %s656 = smul.u32 2, %s19
        %p657 = scmp.lt.s32.totalorder %s656, 5
        %s658 = scalar_select %p657, %s656, 5
        %s659 = smul.addr %s658, 2
        %s660 = smul.addr %s659, 4
        %s661 = scalar_lea.vmem %s6, %s660
      $region60: #{gin_convnet_forward.17} parent=51 // pred_fallthru
        _
    $region52: #{gin_convnet_forward.17} parent=5 // pred_fallthru
      _
  $region6: #{gin_convnet_forward.17} parent=0 // loop_footer
    %s17 = sadd.s32 1, %s13
  $region7: #{gin_convnet_forward.17} parent=0 // loop_footer_branch
    %12 = sbr.rel target = $region3
  $region8: #{gin_convnet_forward.17} parent=0 // loop_exit
    _

// kernel: gin_convnet_forward.18
$region0: #{gin_convnet_forward.18}
  #allocation0 [shape = 'u32[]', space=smem, size = 0x4, offset = 0x4, fixed_abs, tag = 'smem constant byte address 0x4 - core index']
  #allocation1 [shape = 'u32[144,128]{1,0:T(1,128)}', space=vmem, size = 0x12000, scoped, tag = 'internal scratch']
  %s0 = inlined_call_operand.vmem [shape: bf16[96,256], index: 0, kind: input, shape index: {}]
  %s1 = inlined_call_operand.vmem [shape: bf16[96,256], index: 1, kind: input, shape index: {}]
  %s2 = inlined_call_operand.vmem [shape: bf16[256,256], index: 2, kind: input, shape index: {}]
  %s3 = inlined_call_operand.vmem [shape: f32[1,256], index: 3, kind: input, shape index: {}]
  %s4 = inlined_call_operand.vmem [shape: f32[96,256], index: 4, kind: output, shape index: {}]
  %s5 = sld [smem:[#allocation0]]
  $region49: #{gin_convnet_forward.18} parent=0
    _
  %s7 = ssub.s32 1, %s5
  %s8 = scalar_select 0, %s7, %s5
  loop: start=0, step=1, limit=5
  $region2: #{gin_convnet_forward.18} parent=0 // loop_pre_header
    _
  $region3: #{gin_convnet_forward.18} parent=0 // loop_header
    %s10 = sphi 0, %s14
    %p11 = scmp.ge.s32.totalorder %s10, 5
    %s20 = sphi 0, %s22
    %s23 = sphi 0, %s20
    %s24 = sphi 0, %s23
    %s40 = sphi 0, %s24
    %s46 = sphi 0, %s48
    %s49 = sphi 0, %s46
    %s50 = sphi 0, %s49
    %s66 = sphi 0, %s50
    %s70 = sphi 0, %s70
    %s72 = sphi 0, %s70
    %s73 = sphi 0, %s72
    %s87 = sphi 0, %s73
    %s91 = sphi 0, %s91
    %s93 = sphi 0, %s91
    %s94 = sphi 0, %s93
    %s108 = sphi 0, %s94
    %s114 = sphi 0, %s116
    %s117 = sphi 0, %s114
    %s118 = sphi 0, %s117
    %s134 = sphi 0, %s118
  $region4: #{gin_convnet_forward.18} parent=0 // loop_header_branch
    %13 = sbr.rel (%p11) target = $region8
  $region5: #{gin_convnet_forward.18} parent=0 // loop_body
    %s15 = ssub.s32 %s10, 1
    %s16 = ssub.s32 %s10, 2
    %s17 = sadd.s32 %s10, 1
    %s18 = ssub.s32 %s10, %s17
    %p19 = scmp.eq.s32.totalorder %s18, 0
    %s21 = sadd.s32 %s20, 1
    %s22 = scalar_select %p19, %s20, %s21
    %p25 = pneg %p19
    %p26 = scmp.eq.s32.totalorder %s10, 2
    %p27 = por %p25, %p26
    %p28 = scmp.ne.s32.totalorder %s20, %s23
    %p29 = scmp.eq.s32.totalorder %s10, 0
    %p30 = por %p28, %p29
    %p31 = scmp.ne.s32.totalorder %s20, %s23
    %p32 = scmp.eq.s32.totalorder %s15, 2
    %p33 = por %p31, %p32
    %p34 = scmp.ne.s32.totalorder %s23, %s24
    %p35 = scmp.eq.s32.totalorder %s15, 0
    %p36 = por %p34, %p35
    %p37 = scmp.ne.s32.totalorder %s23, %s24
    %p38 = scmp.eq.s32.totalorder %s16, 2
    %p39 = por %p37, %p38
    %p41 = scmp.ne.s32.totalorder %s24, %s40
    %p42 = scmp.eq.s32.totalorder %s16, 0
    %p43 = por %p41, %p42
    %s44 = ssub.s32 %s10, %s17
    %p45 = scmp.eq.s32.totalorder %s44, 0
    %s47 = sadd.s32 %s46, 1
    %s48 = scalar_select %p45, %s46, %s47
    %p51 = pneg %p45
    %p52 = scmp.eq.s32.totalorder %s10, 2
    %p53 = por %p51, %p52
    %p54 = scmp.ne.s32.totalorder %s46, %s49
    %p55 = scmp.eq.s32.totalorder %s10, 0
    %p56 = por %p54, %p55
    %p57 = scmp.ne.s32.totalorder %s46, %s49
    %p58 = scmp.eq.s32.totalorder %s15, 2
    %p59 = por %p57, %p58
    %p60 = scmp.ne.s32.totalorder %s49, %s50
    %p61 = scmp.eq.s32.totalorder %s15, 0
    %p62 = por %p60, %p61
    %p63 = scmp.ne.s32.totalorder %s49, %s50
    %p64 = scmp.eq.s32.totalorder %s16, 2
    %p65 = por %p63, %p64
    %p67 = scmp.ne.s32.totalorder %s50, %s66
    %p68 = scmp.eq.s32.totalorder %s16, 0
    %p69 = por %p67, %p68
    %s71 = sadd.s32 %s70, 1
    %p74 = scmp.eq.s32.totalorder %s10, 2
    %p75 = scmp.ne.s32.totalorder %s70, %s72
    %p76 = scmp.eq.s32.totalorder %s10, 0
    %p77 = por %p75, %p76
    %p78 = scmp.ne.s32.totalorder %s70, %s72
    %p79 = scmp.eq.s32.totalorder %s15, 2
    %p80 = por %p78, %p79
    %p81 = scmp.ne.s32.totalorder %s72, %s73
    %p82 = scmp.eq.s32.totalorder %s15, 0
    %p83 = por %p81, %p82
    %p84 = scmp.ne.s32.totalorder %s72, %s73
    %p85 = scmp.eq.s32.totalorder %s16, 2
    %p86 = por %p84, %p85
    %p88 = scmp.ne.s32.totalorder %s73, %s87
    %p89 = scmp.eq.s32.totalorder %s16, 0
    %p90 = por %p88, %p89
    %s92 = sadd.s32 %s91, 1
    %p95 = scmp.eq.s32.totalorder %s10, 2
    %p96 = scmp.ne.s32.totalorder %s91, %s93
    %p97 = scmp.eq.s32.totalorder %s10, 0
    %p98 = por %p96, %p97
    %p99 = scmp.ne.s32.totalorder %s91, %s93
    %p100 = scmp.eq.s32.totalorder %s15, 2
    %p101 = por %p99, %p100
    %p102 = scmp.ne.s32.totalorder %s93, %s94
    %p103 = scmp.eq.s32.totalorder %s15, 0
    %p104 = por %p102, %p103
    %p105 = scmp.ne.s32.totalorder %s93, %s94
    %p106 = scmp.eq.s32.totalorder %s16, 2
    %p107 = por %p105, %p106
    %p109 = scmp.ne.s32.totalorder %s94, %s108
    %p110 = scmp.eq.s32.totalorder %s16, 0
    %p111 = por %p109, %p110
    %s112 = ssub.s32 %s10, %s17
    %p113 = scmp.eq.s32.totalorder %s112, 0
    %s115 = sadd.s32 %s114, 1
    %s116 = scalar_select %p113, %s114, %s115
    %p119 = pneg %p113
    %p120 = scmp.eq.s32.totalorder %s10, 2
    %p121 = por %p119, %p120
    %p122 = scmp.ne.s32.totalorder %s114, %s117
    %p123 = scmp.eq.s32.totalorder %s10, 0
    %p124 = por %p122, %p123
    %p125 = scmp.ne.s32.totalorder %s114, %s117
    %p126 = scmp.eq.s32.totalorder %s15, 2
    %p127 = por %p125, %p126
    %p128 = scmp.ne.s32.totalorder %s117, %s118
    %p129 = scmp.eq.s32.totalorder %s15, 0
    %p130 = por %p128, %p129
    %p131 = scmp.ne.s32.totalorder %s117, %s118
    %p132 = scmp.eq.s32.totalorder %s16, 2
    %p133 = por %p131, %p132
    %p135 = scmp.ne.s32.totalorder %s118, %s134
    %p136 = scmp.eq.s32.totalorder %s16, 0
    %p137 = por %p135, %p136
    %p138 = scmp.le.s32.totalorder 1, %s10
    %p139 = scmp.lt.s32.totalorder %s10, 4
    %p140 = pnand %p138, %p139
    %p141 = pneg %p140
    // Predicated region
    $region9: #{gin_convnet_forward.18} parent=5 // pred_check
      _
    $region10: #{gin_convnet_forward.18} parent=5 // pred_check_branch
      %143 = sbr.rel (%p140) target = $region12
    $region11: #{gin_convnet_forward.18} parent=5 // pred_region
      %s144 = ssub.s32 %s10, 1
      // Predicated region
      $region13: #{gin_convnet_forward.18} parent=11 // pred_check
        %p145 = pneg %p83
      $region14: #{gin_convnet_forward.18} parent=11 // pred_check_branch
        %147 = sbr.rel (%p145) target = $region16
      $region15: #{gin_convnet_forward.18} parent=11 // pred_region
        _
      $region16: #{gin_convnet_forward.18} parent=11 // pred_fallthru
        _
      // Predicated region
      $region17: #{gin_convnet_forward.18} parent=11 // pred_check
        %p148 = pneg %p104
      $region18: #{gin_convnet_forward.18} parent=11 // pred_check_branch
        %150 = sbr.rel (%p148) target = $region20
      $region19: #{gin_convnet_forward.18} parent=11 // pred_region
        _
      $region20: #{gin_convnet_forward.18} parent=11 // pred_fallthru
        _
    $region12: #{gin_convnet_forward.18} parent=5 // pred_fallthru
      _
    %p151 = scmp.lt.s32.totalorder %s10, 3
    // Predicated region
    $region21: #{gin_convnet_forward.18} parent=5 // pred_check
      %p152 = pneg %p151
    $region22: #{gin_convnet_forward.18} parent=5 // pred_check_branch
      %154 = sbr.rel (%p152) target = $region24
    $region23: #{gin_convnet_forward.18} parent=5 // pred_region
      // Predicated region
      $region25: #{gin_convnet_forward.18} parent=23 // pred_check
        %p155 = pneg %p30
      $region26: #{gin_convnet_forward.18} parent=23 // pred_check_branch
        %157 = sbr.rel (%p155) target = $region28
      $region27: #{gin_convnet_forward.18} parent=23 // pred_region
        %s158 = smul.u32 4, %s10
        %p159 = scmp.lt.s32.totalorder %s158, 11
        %s160 = scalar_select %p159, %s158, 11
        %s161 = smul.addr %s160, 2
        %s162 = smul.addr %s161, 4
        %s163 = scalar_lea.vmem %s0, %s162
        %s164 = smul.u32 4, %s10
      $region28: #{gin_convnet_forward.18} parent=23 // pred_fallthru
        _
      // Predicated region
      $region29: #{gin_convnet_forward.18} parent=23 // pred_check
        %p165 = pneg %p56
      $region30: #{gin_convnet_forward.18} parent=23 // pred_check_branch
        %167 = sbr.rel (%p165) target = $region32
      $region31: #{gin_convnet_forward.18} parent=23 // pred_region
        %s168 = smul.u32 4, %s10
        %p169 = scmp.lt.s32.totalorder %s168, 11
        %s170 = scalar_select %p169, %s168, 11
        %s171 = smul.addr %s170, 2
        %s172 = smul.addr %s171, 4
        %s173 = scalar_lea.vmem %s1, %s172
        %s174 = smul.u32 4, %s10
      $region32: #{gin_convnet_forward.18} parent=23 // pred_fallthru
        _
    $region24: #{gin_convnet_forward.18} parent=5 // pred_fallthru
      _
    %p175 = scmp.le.s32.totalorder 1, %s10
    %p176 = scmp.lt.s32.totalorder %s10, 4
    %p177 = pnand %p175, %p176
    %p178 = pneg %p177
    // Predicated region
    $region33: #{gin_convnet_forward.18} parent=5 // pred_check
      _
    $region34: #{gin_convnet_forward.18} parent=5 // pred_check_branch
      %180 = sbr.rel (%p177) target = $region36
    $region35: #{gin_convnet_forward.18} parent=5 // pred_region
      %s181 = ssub.s32 %s10, 1
      %s182 = smul.u32 4, %s15
      %p183 = scmp.lt.s32.totalorder %s182, 11
      %s184 = scalar_select %p183, %s182, 11
      %s185 = smul.addr %s184, 2
      %s186 = smul.addr %s185, 4
      %s187 = scalar_lea.vmem %s0, %s186
      %p188 = pneg %p36
      %p189 = pneg %p33
      %s190 = smul.u32 4, %s15
      %p191 = scmp.lt.s32.totalorder %s190, 11
      %s192 = scalar_select %p191, %s190, 11
      %s193 = smul.addr %s192, 2
      %s194 = smul.addr %s193, 4
      %s195 = scalar_lea.vmem %s1, %s194
      %p196 = pneg %p62
      %p197 = pneg %p59
      %p198 = pneg %p83
      %p199 = pneg %p80
      %p200 = pneg %p104
      %p201 = pneg %p101
      %p202 = pneg %p130
      %p203 = pneg %p127
      %s204 = smul.u32 4, %s15
      %p205 = scmp.lt.s32.totalorder %s204, 11
      %s206 = scalar_select %p205, %s204, 11
      %s207 = smul.addr %s206, 2
      %s208 = smul.addr %s207, 8
      %s209 = scalar_lea.vmem %s4, %s208
      %s210 = smul.u32 4, %s15
      %p211 = scmp.lt.s32.totalorder %s210, 11
      %s212 = scalar_select %p211, %s210, 11
      %s213 = smul.addr %s212, 2
      %s214 = smul.addr %s213, 4
      %s215 = scalar_lea.vmem %s0, %s214
      %s216 = smul.u32 4, %s15
      %s217 = smul.u32 4, %s15
      %p218 = scmp.lt.s32.totalorder %s217, 11
      %s219 = scalar_select %p218, %s217, 11
      %s220 = smul.addr %s219, 2
      %s221 = smul.addr %s220, 4
      %s222 = scalar_lea.vmem %s1, %s221
      %s223 = smul.u32 4, %s15
      %s224 = smul.u32 4, %s15
      %p225 = scmp.lt.s32.totalorder %s224, 11
      %s226 = scalar_select %p225, %s224, 11
      %s227 = smul.addr %s226, 2
      %s228 = smul.addr %s227, 8
      %s229 = scalar_lea.vmem %s4, %s228
      %s230 = smul.u32 4, %s15
      %v231 = vld [vmem:[%s215] sm:$0xff]
      %v232 = vld [vmem:[%s215 + $0x8] sm:$0xff]
      %v233 = vld [vmem:[%s215 + $0x10] sm:$0xff]
      %v234 = vld [vmem:[%s215 + $0x18] sm:$0xff]
      %v235 = vunpack.c.l.bf16 %v231
      %v236 = vunpack.c.h.bf16 %v231
      %v237 = vunpack.c.l.bf16 %v232
      %v238 = vunpack.c.h.bf16 %v232
      %v239 = vunpack.c.l.bf16 %v233
      %v240 = vunpack.c.h.bf16 %v233
      %v241 = vunpack.c.l.bf16 %v234
      %v242 = vunpack.c.h.bf16 %v234
      %v243 = vld [vmem:[%s222] sm:$0xff]
      %v244 = vld [vmem:[%s222 + $0x8] sm:$0xff]
      %v245 = vld [vmem:[%s222 + $0x10] sm:$0xff]
      %v246 = vld [vmem:[%s222 + $0x18] sm:$0xff]
      %v247 = vunpack.c.l.bf16 %v243
      %v248 = vunpack.c.h.bf16 %v243
      %v249 = vunpack.c.l.bf16 %v244
      %v250 = vunpack.c.h.bf16 %v244
      %v251 = vunpack.c.l.bf16 %v245
      %v252 = vunpack.c.h.bf16 %v245
      %v253 = vunpack.c.l.bf16 %v246
      %v254 = vunpack.c.h.bf16 %v246
      %v255 = vadd.f32 %v235, %v247
      %v256 = vadd.f32 %v236, %v248
      %v257 = vadd.f32 %v237, %v249
      %v258 = vadd.f32 %v238, %v250
      %v259 = vadd.f32 %v239, %v251
      %v260 = vadd.f32 %v240, %v252
      %v261 = vadd.f32 %v241, %v253
      %v262 = vadd.f32 %v242, %v254
      %v263 = vmax.f32 %v255, 0.0
      %v264 = vmax.f32 %v256, 0.0
      %v265 = vmax.f32 %v257, 0.0
      %v266 = vmax.f32 %v258, 0.0
      %v267 = vmax.f32 %v259, 0.0
      %v268 = vmax.f32 %v260, 0.0
      %v269 = vmax.f32 %v261, 0.0
      %v270 = vmax.f32 %v262, 0.0
      %v271 = vpack.c.bf16 %v265, %v263
      %v272 = vpack.c.bf16 %v266, %v264
      %v273 = vpack.c.bf16 %v269, %v267
      %v274 = vpack.c.bf16 %v270, %v268
      %v275 = vld [vmem:[%s2] sm:$0xff]
      %v276 = vld [vmem:[%s2 + $0x8] sm:$0xff]
      %v277 = vld [vmem:[%s2 + $0x10] sm:$0xff]
      %v278 = vld [vmem:[%s2 + $0x18] sm:$0xff]
      %v279 = vld [vmem:[%s2 + $0x20] sm:$0xff]
      %v280 = vld [vmem:[%s2 + $0x28] sm:$0xff]
      %v281 = vld [vmem:[%s2 + $0x30] sm:$0xff]
      %v282 = vld [vmem:[%s2 + $0x38] sm:$0xff]
      %v283 = vld [vmem:[%s2 + $0x40] sm:$0xff]
      %v284 = vld [vmem:[%s2 + $0x48] sm:$0xff]
      %v285 = vld [vmem:[%s2 + $0x50] sm:$0xff]
      %v286 = vld [vmem:[%s2 + $0x58] sm:$0xff]
      %v287 = vld [vmem:[%s2 + $0x60] sm:$0xff]
      %v288 = vld [vmem:[%s2 + $0x68] sm:$0xff]
      %v289 = vld [vmem:[%s2 + $0x70] sm:$0xff]
      %v290 = vld [vmem:[%s2 + $0x78] sm:$0xff]
      %v291 = vld [vmem:[%s2 + $0x80] sm:$0xff]
      %v292 = vld [vmem:[%s2 + $0x88] sm:$0xff]
      %v293 = vld [vmem:[%s2 + $0x90] sm:$0xff]
      %v294 = vld [vmem:[%s2 + $0x98] sm:$0xff]
      %v295 = vld [vmem:[%s2 + $0xa0] sm:$0xff]
      %v296 = vld [vmem:[%s2 + $0xa8] sm:$0xff]
      %v297 = vld [vmem:[%s2 + $0xb0] sm:$0xff]
      %v298 = vld [vmem:[%s2 + $0xb8] sm:$0xff]
      %v299 = vld [vmem:[%s2 + $0xc0] sm:$0xff]
      %v300 = vld [vmem:[%s2 + $0xc8] sm:$0xff]
      %v301 = vld [vmem:[%s2 + $0xd0] sm:$0xff]
      %v302 = vld [vmem:[%s2 + $0xd8] sm:$0xff]
      %v303 = vld [vmem:[%s2 + $0xe0] sm:$0xff]
      %v304 = vld [vmem:[%s2 + $0xe8] sm:$0xff]
      %v305 = vld [vmem:[%s2 + $0xf0] sm:$0xff]
      %v306 = vld [vmem:[%s2 + $0xf8] sm:$0xff]
      %v307 = vld [vmem:[%s3] sm:$0x3]
      %v309 = vlaneseq
      %v310 = vshrl.u32 %v309, 7
      %v311 = vsub.s32 0, %v310
      %v312 = vrot.slane %v307, %v311
      %v313 = vlaneseq
      %v314 = vshrl.u32 %v313, 7
      %v315 = vsub.s32 1, %v314
      %v316 = vrot.slane %v307, %v315
      %v351 = vunpack.c.l.b16 %v275
      %v352 = vunpack.c.h.b16 %v275
      %v353 = vunpack.c.l.b16 %v276
      %v354 = vunpack.c.h.b16 %v276
      %v355 = vunpack.c.l.b16 %v277
      %v356 = vunpack.c.h.b16 %v277
      %v357 = vunpack.c.l.b16 %v278
      %v358 = vunpack.c.h.b16 %v278
      %v359 = vunpack.c.l.b16 %v279
      %v360 = vunpack.c.h.b16 %v279
      %v361 = vunpack.c.l.b16 %v280
      %v362 = vunpack.c.h.b16 %v280
      %v363 = vunpack.c.l.b16 %v281
      %v364 = vunpack.c.h.b16 %v281
      %v365 = vunpack.c.l.b16 %v282
      %v366 = vunpack.c.h.b16 %v282
      %v367 = vunpack.c.l.b16 %v283
      %v368 = vunpack.c.h.b16 %v283
      %v369 = vunpack.c.l.b16 %v284
      %v370 = vunpack.c.h.b16 %v284
      %v371 = vunpack.c.l.b16 %v285
      %v372 = vunpack.c.h.b16 %v285
      %v373 = vunpack.c.l.b16 %v286
      %v374 = vunpack.c.h.b16 %v286
      %v375 = vunpack.c.l.b16 %v287
      %v376 = vunpack.c.h.b16 %v287
      %v377 = vunpack.c.l.b16 %v288
      %v378 = vunpack.c.h.b16 %v288
      %v379 = vunpack.c.l.b16 %v289
      %v380 = vunpack.c.h.b16 %v289
      %v381 = vunpack.c.l.b16 %v290
      %v382 = vunpack.c.h.b16 %v290
      %v383 = vunpack.c.l.b16 %v291
      %v384 = vunpack.c.h.b16 %v291
      %v385 = vunpack.c.l.b16 %v292
      %v386 = vunpack.c.h.b16 %v292
      %v387 = vunpack.c.l.b16 %v293
      %v388 = vunpack.c.h.b16 %v293
      %v389 = vunpack.c.l.b16 %v294
      %v390 = vunpack.c.h.b16 %v294
      %v391 = vunpack.c.l.b16 %v295
      %v392 = vunpack.c.h.b16 %v295
      %v393 = vunpack.c.l.b16 %v296
      %v394 = vunpack.c.h.b16 %v296
      %v395 = vunpack.c.l.b16 %v297
      %v396 = vunpack.c.h.b16 %v297
      %v397 = vunpack.c.l.b16 %v298
      %v398 = vunpack.c.h.b16 %v298
      %v399 = vunpack.c.l.b16 %v299
      %v400 = vunpack.c.h.b16 %v299
      %v401 = vunpack.c.l.b16 %v300
      %v402 = vunpack.c.h.b16 %v300
      %v403 = vunpack.c.l.b16 %v301
      %v404 = vunpack.c.h.b16 %v301
      %v405 = vunpack.c.l.b16 %v302
      %v406 = vunpack.c.h.b16 %v302
      %v407 = vunpack.c.l.b16 %v303
      %v408 = vunpack.c.h.b16 %v303
      %v409 = vunpack.c.l.b16 %v304
      %v410 = vunpack.c.h.b16 %v304
      %v411 = vunpack.c.l.b16 %v305
      %v412 = vunpack.c.h.b16 %v305
      %v413 = vunpack.c.l.b16 %v306
      %v414 = vunpack.c.h.b16 %v306
      %v415 = vpack.c.b16 %v353, %v351
      %v416 = vpack.c.b16 %v354, %v352
      %v417 = vpack.c.b16 %v357, %v355
      %v418 = vpack.c.b16 %v358, %v356
      %v419 = vpack.c.b16 %v361, %v359
      %v420 = vpack.c.b16 %v362, %v360
      %v421 = vpack.c.b16 %v365, %v363
      %v422 = vpack.c.b16 %v366, %v364
      %v423 = vpack.c.b16 %v369, %v367
      %v424 = vpack.c.b16 %v370, %v368
      %v425 = vpack.c.b16 %v373, %v371
      %v426 = vpack.c.b16 %v374, %v372
      %v427 = vpack.c.b16 %v377, %v375
      %v428 = vpack.c.b16 %v378, %v376
      %v429 = vpack.c.b16 %v381, %v379
      %v430 = vpack.c.b16 %v382, %v380
      %v431 = vpack.c.b16 %v385, %v383
      %v432 = vpack.c.b16 %v386, %v384
      %v433 = vpack.c.b16 %v389, %v387
      %v434 = vpack.c.b16 %v390, %v388
      %v435 = vpack.c.b16 %v393, %v391
      %v436 = vpack.c.b16 %v394, %v392
      %v437 = vpack.c.b16 %v397, %v395
      %v438 = vpack.c.b16 %v398, %v396
      %v439 = vpack.c.b16 %v401, %v399
      %v440 = vpack.c.b16 %v402, %v400
      %v441 = vpack.c.b16 %v405, %v403
      %v442 = vpack.c.b16 %v406, %v404
      %v443 = vpack.c.b16 %v409, %v407
      %v444 = vpack.c.b16 %v410, %v408
      %v445 = vpack.c.b16 %v413, %v411
      %v446 = vpack.c.b16 %v414, %v412
      %479 = vmatprep.subr.bf16.mxu0 %v416
      %480 = vmatpush1.bf16.msra.mxu0 %v415
      %481 = vmatprep.subr.bf16.mxu0 %v418
      %482 = vmatpush1.bf16.msra.mxu0 %v417
      %483 = vmatprep.subr.bf16.mxu0 %v420
      %484 = vmatpush1.bf16.msra.mxu0 %v419
      %485 = vmatprep.subr.bf16.mxu0 %v422
      %486 = vmatpush1.bf16.msra.mxu0 %v421
      %487 = vmatprep.subr.bf16.mxu0 %v424
      %488 = vmatpush1.bf16.msra.mxu0 %v423
      %489 = vmatprep.subr.bf16.mxu0 %v426
      %490 = vmatpush1.bf16.msra.mxu0 %v425
      %491 = vmatprep.subr.bf16.mxu0 %v428
      %492 = vmatpush1.bf16.msra.mxu0 %v427
      %493 = vmatprep.subr.bf16.mxu0 %v430
      %494 = vmatpush1.bf16.msra.mxu0 %v429
      %495 = vmatprep.subr.bf16.mxu0 %v432
      %496 = vmatpush1.bf16.msra.mxu0 %v431
      %497 = vmatprep.subr.bf16.mxu0 %v434
      %498 = vmatpush1.bf16.msra.mxu0 %v433
      %499 = vmatprep.subr.bf16.mxu0 %v436
      %500 = vmatpush1.bf16.msra.mxu0 %v435
      %501 = vmatprep.subr.bf16.mxu0 %v438
      %502 = vmatpush1.bf16.msra.mxu0 %v437
      %503 = vmatprep.subr.bf16.mxu0 %v440
      %504 = vmatpush1.bf16.msra.mxu0 %v439
      %505 = vmatprep.subr.bf16.mxu0 %v442
      %506 = vmatpush1.bf16.msra.mxu0 %v441
      %507 = vmatprep.subr.bf16.mxu0 %v444
      %508 = vmatpush1.bf16.msra.mxu0 %v443
      %509 = vmatprep.subr.bf16.mxu0 %v446
      %510 = vmatpush1.bf16.msra.mxu0 %v445
      %511 = vmatprep.mubr.bf16.mxu0 %v272
      %512 = vmatmul.mubr.bf16.gmra.mrb[0].mxu0 %v271
      %v513 = vpop.f32.mrb[0].mxu0
      %v514 = vadd.f32 %v312, %v513
      %v515 = vpop.f32.mrb[0].mxu0
      %v516 = vadd.f32 %v316, %v515
      %v517 = vpop.f32.mrb[0].mxu0
      %v518 = vadd.f32 %v312, %v517
      %v519 = vpop.f32.mrb[0].mxu0
      %v520 = vadd.f32 %v316, %v519
      %521 = vmatprep.mubr.bf16.mxu0 %v274
      %522 = vmatmul.mubr.bf16.gmra.mrb[0].mxu0 %v273
      %v523 = vpop.f32.mrb[0].mxu0
      %v524 = vadd.f32 %v312, %v523
      %v525 = vpop.f32.mrb[0].mxu0
      %v526 = vadd.f32 %v316, %v525
      %v527 = vpop.f32.mrb[0].mxu0
      %v528 = vadd.f32 %v312, %v527
      %v529 = vpop.f32.mrb[0].mxu0
      %v530 = vadd.f32 %v316, %v529
      %531 = vdwg.mxu0
      %532 = vst [vmem:[%s229] sm:$0xff] %v514
      %533 = vst [vmem:[%s229 + $0x8] sm:$0xff] %v516
      %534 = vst [vmem:[%s229 + $0x10] sm:$0xff] %v518
      %535 = vst [vmem:[%s229 + $0x18] sm:$0xff] %v520
      %536 = vst [vmem:[%s229 + $0x20] sm:$0xff] %v524
      %537 = vst [vmem:[%s229 + $0x28] sm:$0xff] %v526
      %538 = vst [vmem:[%s229 + $0x30] sm:$0xff] %v528
      %539 = vst [vmem:[%s229 + $0x38] sm:$0xff] %v530
      %s540 = smul.u32 4, %s15
      %p541 = scmp.lt.s32.totalorder %s540, 11
      %s542 = scalar_select %p541, %s540, 11
      %s543 = smul.addr %s542, 2
      %s544 = smul.addr %s543, 8
      %s545 = scalar_lea.vmem %s4, %s544
      // Predicated region
      $region37: #{gin_convnet_forward.18} parent=35 // pred_check
        %p546 = pneg %p127
      $region38: #{gin_convnet_forward.18} parent=35 // pred_check_branch
        %548 = sbr.rel (%p546) target = $region40
      $region39: #{gin_convnet_forward.18} parent=35 // pred_region
        %s549 = smul.u32 4, %s15
      $region40: #{gin_convnet_forward.18} parent=35 // pred_fallthru
        _
    $region36: #{gin_convnet_forward.18} parent=5 // pred_fallthru
      _
    %p550 = scmp.le.s32.totalorder 2, %s10
    // Predicated region
    $region41: #{gin_convnet_forward.18} parent=5 // pred_check
      %p551 = pneg %p550
    $region42: #{gin_convnet_forward.18} parent=5 // pred_check_branch
      %553 = sbr.rel (%p551) target = $region44
    $region43: #{gin_convnet_forward.18} parent=5 // pred_region
      %s554 = ssub.s32 %s10, 2
      // Predicated region
      $region45: #{gin_convnet_forward.18} parent=43 // pred_check
        %p555 = pneg %p133
      $region46: #{gin_convnet_forward.18} parent=43 // pred_check_branch
        %557 = sbr.rel (%p555) target = $region48
      $region47: #{gin_convnet_forward.18} parent=43 // pred_region
        %s558 = smul.u32 4, %s16
        %p559 = scmp.lt.s32.totalorder %s558, 11
        %s560 = scalar_select %p559, %s558, 11
        %s561 = smul.addr %s560, 2
        %s562 = smul.addr %s561, 8
        %s563 = scalar_lea.vmem %s4, %s562
      $region48: #{gin_convnet_forward.18} parent=43 // pred_fallthru
        _
    $region44: #{gin_convnet_forward.18} parent=5 // pred_fallthru
      _
  $region6: #{gin_convnet_forward.18} parent=0 // loop_footer
    %s14 = sadd.s32 1, %s10
  $region7: #{gin_convnet_forward.18} parent=0 // loop_footer_branch
    %9 = sbr.rel target = $region3
  $region8: #{gin_convnet_forward.18} parent=0 // loop_exit
    _

// kernel: gin_convnet_forward.19
$region0: #{gin_convnet_forward.19}
  #allocation0 [shape = 'u32[]', space=smem, size = 0x4, offset = 0x4, fixed_abs, tag = 'smem constant byte address 0x4 - core index']
  #allocation1 [shape = 'u32[144,128]{1,0:T(1,128)}', space=vmem, size = 0x12000, scoped, tag = 'internal scratch']
  %s0 = inlined_call_operand.vmem [shape: f32[48,256], index: 0, kind: input, shape index: {}]
  %s1 = inlined_call_operand.vmem [shape: f32[3,2,256], index: 1, kind: output, shape index: {}]
  %s2 = sld [smem:[#allocation0]]
  $region37: #{gin_convnet_forward.19} parent=0
    _
  %s4 = ssub.s32 1, %s2
  %s5 = scalar_select 0, %s4, %s2
  loop: start=0, step=1, limit=5
  $region2: #{gin_convnet_forward.19} parent=0 // loop_pre_header
    _
  $region3: #{gin_convnet_forward.19} parent=0 // loop_header
    %s7 = sphi 0, %s11
    %p8 = scmp.ge.s32.totalorder %s7, 5
    %s17 = sphi 0, %s19
    %s20 = sphi 0, %s17
    %s21 = sphi 0, %s20
    %s37 = sphi 0, %s21
    %s43 = sphi 0, %s45
    %s46 = sphi 0, %s43
    %s47 = sphi 0, %s46
    %s63 = sphi 0, %s47
  $region4: #{gin_convnet_forward.19} parent=0 // loop_header_branch
    %10 = sbr.rel (%p8) target = $region8
  $region5: #{gin_convnet_forward.19} parent=0 // loop_body
    %s12 = ssub.s32 %s7, 1
    %s13 = ssub.s32 %s7, 2
    %s14 = sadd.s32 %s7, 1
    %s15 = ssub.s32 %s7, %s14
    %p16 = scmp.eq.s32.totalorder %s15, 0
    %s18 = sadd.s32 %s17, 1
    %s19 = scalar_select %p16, %s17, %s18
    %p22 = pneg %p16
    %p23 = scmp.eq.s32.totalorder %s7, 2
    %p24 = por %p22, %p23
    %p25 = scmp.ne.s32.totalorder %s17, %s20
    %p26 = scmp.eq.s32.totalorder %s7, 0
    %p27 = por %p25, %p26
    %p28 = scmp.ne.s32.totalorder %s17, %s20
    %p29 = scmp.eq.s32.totalorder %s12, 2
    %p30 = por %p28, %p29
    %p31 = scmp.ne.s32.totalorder %s20, %s21
    %p32 = scmp.eq.s32.totalorder %s12, 0
    %p33 = por %p31, %p32
    %p34 = scmp.ne.s32.totalorder %s20, %s21
    %p35 = scmp.eq.s32.totalorder %s13, 2
    %p36 = por %p34, %p35
    %p38 = scmp.ne.s32.totalorder %s21, %s37
    %p39 = scmp.eq.s32.totalorder %s13, 0
    %p40 = por %p38, %p39
    %s41 = ssub.s32 %s7, %s14
    %p42 = scmp.eq.s32.totalorder %s41, 0
    %s44 = sadd.s32 %s43, 1
    %s45 = scalar_select %p42, %s43, %s44
    %p48 = pneg %p42
    %p49 = scmp.eq.s32.totalorder %s7, 2
    %p50 = por %p48, %p49
    %p51 = scmp.ne.s32.totalorder %s43, %s46
    %p52 = scmp.eq.s32.totalorder %s7, 0
    %p53 = por %p51, %p52
    %p54 = scmp.ne.s32.totalorder %s43, %s46
    %p55 = scmp.eq.s32.totalorder %s12, 2
    %p56 = por %p54, %p55
    %p57 = scmp.ne.s32.totalorder %s46, %s47
    %p58 = scmp.eq.s32.totalorder %s12, 0
    %p59 = por %p57, %p58
    %p60 = scmp.ne.s32.totalorder %s46, %s47
    %p61 = scmp.eq.s32.totalorder %s13, 2
    %p62 = por %p60, %p61
    %p64 = scmp.ne.s32.totalorder %s47, %s63
    %p65 = scmp.eq.s32.totalorder %s13, 0
    %p66 = por %p64, %p65
    %p67 = scmp.le.s32.totalorder 1, %s7
    %p68 = scmp.lt.s32.totalorder %s7, 4
    %p69 = pnand %p67, %p68
    %p70 = pneg %p69
    // Predicated region
    $region9: #{gin_convnet_forward.19} parent=5 // pred_check
      _
    $region10: #{gin_convnet_forward.19} parent=5 // pred_check_branch
      %72 = sbr.rel (%p69) target = $region12
    $region11: #{gin_convnet_forward.19} parent=5 // pred_region
      %s73 = ssub.s32 %s7, 1
    $region12: #{gin_convnet_forward.19} parent=5 // pred_fallthru
      _
    %p74 = scmp.lt.s32.totalorder %s7, 3
    // Predicated region
    $region13: #{gin_convnet_forward.19} parent=5 // pred_check
      %p75 = pneg %p74
    $region14: #{gin_convnet_forward.19} parent=5 // pred_check_branch
      %77 = sbr.rel (%p75) target = $region16
    $region15: #{gin_convnet_forward.19} parent=5 // pred_region
      // Predicated region
      $region17: #{gin_convnet_forward.19} parent=15 // pred_check
        %p78 = pneg %p27
      $region18: #{gin_convnet_forward.19} parent=15 // pred_check_branch
        %80 = sbr.rel (%p78) target = $region20
      $region19: #{gin_convnet_forward.19} parent=15 // pred_region
        %s81 = smul.u32 2, %s7
        %p82 = scmp.lt.s32.totalorder %s81, 5
        %s83 = scalar_select %p82, %s81, 5
        %s84 = smul.addr %s83, 2
        %s85 = smul.addr %s84, 8
        %s86 = scalar_lea.vmem %s0, %s85
        %s87 = smul.u32 2, %s7
      $region20: #{gin_convnet_forward.19} parent=15 // pred_fallthru
        _
    $region16: #{gin_convnet_forward.19} parent=5 // pred_fallthru
      _
    %p88 = scmp.le.s32.totalorder 1, %s7
    %p89 = scmp.lt.s32.totalorder %s7, 4
    %p90 = pnand %p88, %p89
    %p91 = pneg %p90
    // Predicated region
    $region21: #{gin_convnet_forward.19} parent=5 // pred_check
      _
    $region22: #{gin_convnet_forward.19} parent=5 // pred_check_branch
      %93 = sbr.rel (%p90) target = $region24
    $region23: #{gin_convnet_forward.19} parent=5 // pred_region
      %s94 = ssub.s32 %s7, 1
      %s95 = smul.u32 2, %s12
      %p96 = scmp.lt.s32.totalorder %s95, 5
      %s97 = scalar_select %p96, %s95, 5
      %s98 = smul.addr %s97, 2
      %s99 = smul.addr %s98, 8
      %s100 = scalar_lea.vmem %s0, %s99
      %p101 = pneg %p33
      %p102 = pneg %p30
      %p103 = pneg %p59
      %p104 = pneg %p56
      %p105 = scmp.lt.s32.totalorder %s12, 2
      %s106 = scalar_select %p105, %s12, 2
      %s107 = smul.addr %s106, 2
      %s108 = smul.addr %s107, 2
      %s109 = scalar_lea.vmem %s1, %s108
      %s110 = smul.u32 2, %s12
      %p111 = scmp.lt.s32.totalorder %s110, 5
      %s112 = scalar_select %p111, %s110, 5
      %s113 = smul.addr %s112, 2
      %s114 = smul.addr %s113, 8
      %s115 = scalar_lea.vmem %s0, %s114
      %s116 = smul.u32 2, %s12
      %p117 = scmp.lt.s32.totalorder %s12, 2
      %s118 = scalar_select %p117, %s12, 2
      %s119 = smul.addr %s118, 2
      %s120 = smul.addr %s119, 2
      %s121 = scalar_lea.vmem %s1, %s120
      %v122 = vld [vmem:[%s115] sm:$0xff]
      %v123 = vld [vmem:[%s115 + $0x8] sm:$0xff]
      %v124 = vld [vmem:[%s115 + $0x10] sm:$0xff]
      %v125 = vld [vmem:[%s115 + $0x18] sm:$0xff]
      %v126 = vmax.f32 %v122, 0.0
      %v127 = vmax.f32 %v123, 0.0
      %v128 = vmax.f32 %v124, 0.0
      %v129 = vmax.f32 %v125, 0.0
      %v130 = vadd.f32 %v126, %v128
      %v131 = vrot.slane %v130, 4
      %v132 = vadd.f32 %v130, %v131
      %v133 = vrot.slane %v132, 2
      %v134 = vadd.f32 %v132, %v133
      %v135 = vrot.slane %v134, 1
      %v136 = vadd.f32 %v134, %v135
      %v137 = vadd.f32 %v127, %v129
      %v138 = vrot.slane %v137, 4
      %v139 = vadd.f32 %v137, %v138
      %v140 = vrot.slane %v139, 2
      %v141 = vadd.f32 %v139, %v140
      %v142 = vrot.slane %v141, 1
      %v143 = vadd.f32 %v141, %v142
      %v144 = vmul.f32 %v126, %v126
      %v145 = vmul.f32 %v127, %v127
      %v146 = vmul.f32 %v128, %v128
      %v147 = vmul.f32 %v129, %v129
      %v148 = vadd.f32 %v144, %v146
      %v149 = vrot.slane %v148, 4
      %v150 = vadd.f32 %v148, %v149
      %v151 = vrot.slane %v150, 2
      %v152 = vadd.f32 %v150, %v151
      %v153 = vrot.slane %v152, 1
      %v154 = vadd.f32 %v152, %v153
      %v155 = vadd.f32 %v145, %v147
      %v156 = vrot.slane %v155, 4
      %v157 = vadd.f32 %v155, %v156
      %v158 = vrot.slane %v157, 2
      %v159 = vadd.f32 %v157, %v158
      %v160 = vrot.slane %v159, 1
      %v161 = vadd.f32 %v159, %v160
      %vm162 = vcmask 1040384
      %v163 = vsel %vm162, %v136, %v154
      %v164 = vsel %vm162, %v143, %v161
      %v167 = vcombine.low %v163, %v164
      %v169 = vunpack.c.l.s4 1983009808
      %v170 = vunpack.c.0.s8 %v169
      %v171 = vlaneseq
      %v172 = vshrl.u32 %v171, 7
      %v173 = vsub.s32 %v170, %v172
      %v174 = vrot.slane %v167, %v173
      %176 = vst [vmem:[%s121] sm:$0xf] %v174
      %p177 = scmp.lt.s32.totalorder %s12, 2
      %s178 = scalar_select %p177, %s12, 2
      %s179 = smul.addr %s178, 2
      %s180 = smul.addr %s179, 2
      %s181 = scalar_lea.vmem %s1, %s180
      // Predicated region
      $region25: #{gin_convnet_forward.19} parent=23 // pred_check
        %p182 = pneg %p56
      $region26: #{gin_convnet_forward.19} parent=23 // pred_check_branch
        %184 = sbr.rel (%p182) target = $region28
      $region27: #{gin_convnet_forward.19} parent=23 // pred_region
        _
      $region28: #{gin_convnet_forward.19} parent=23 // pred_fallthru
        _
    $region24: #{gin_convnet_forward.19} parent=5 // pred_fallthru
      _
    %p185 = scmp.le.s32.totalorder 2, %s7
    // Predicated region
    $region29: #{gin_convnet_forward.19} parent=5 // pred_check
      %p186 = pneg %p185
    $region30: #{gin_convnet_forward.19} parent=5 // pred_check_branch
      %188 = sbr.rel (%p186) target = $region32
    $region31: #{gin_convnet_forward.19} parent=5 // pred_region
      %s189 = ssub.s32 %s7, 2
      // Predicated region
      $region33: #{gin_convnet_forward.19} parent=31 // pred_check
        %p190 = pneg %p62
      $region34: #{gin_convnet_forward.19} parent=31 // pred_check_branch
        %192 = sbr.rel (%p190) target = $region36
      $region35: #{gin_convnet_forward.19} parent=31 // pred_region
        %p193 = scmp.lt.s32.totalorder %s13, 2
        %s194 = scalar_select %p193, %s13, 2
        %s195 = smul.addr %s194, 2
        %s196 = smul.addr %s195, 2
        %s197 = scalar_lea.vmem %s1, %s196
      $region36: #{gin_convnet_forward.19} parent=31 // pred_fallthru
        _
    $region32: #{gin_convnet_forward.19} parent=5 // pred_fallthru
      _
  $region6: #{gin_convnet_forward.19} parent=0 // loop_footer
    %s11 = sadd.s32 1, %s7
  $region7: #{gin_convnet_forward.19} parent=0 // loop_footer_branch
    %6 = sbr.rel target = $region3
  $region8: #{gin_convnet_forward.19} parent=0 // loop_exit
    _

// kernel: gin_convnet_forward.20
$region0: #{gin_convnet_forward.20}
  #allocation0 [shape = 'u32[]', space=smem, size = 0x4, offset = 0x4, fixed_abs, tag = 'smem constant byte address 0x4 - core index']
  #allocation1 [shape = 'u32[144,128]{1,0:T(1,128)}', space=vmem, size = 0x12000, scoped, tag = 'internal scratch']
  %s0 = inlined_call_operand.vmem [shape: f32[48,256], index: 0, kind: input, shape index: {}]
  %s1 = inlined_call_operand.vmem [shape: f32[1,256], index: 1, kind: input, shape index: {}]
  %s2 = inlined_call_operand.vmem [shape: f32[1,256], index: 2, kind: input, shape index: {}]
  %s3 = inlined_call_operand.vmem [shape: bf16[256,512], index: 3, kind: input, shape index: {}]
  %s4 = inlined_call_operand.vmem [shape: f32[1,256], index: 4, kind: input, shape index: {}]
  %s5 = inlined_call_operand.vmem [shape: bf16[48,256], index: 5, kind: output, shape index: {0}]
  %s6 = inlined_call_operand.vmem [shape: bf16[48,256], index: 6, kind: output, shape index: {1}]
  %7 = xla_tuple %s5, %s6
  %s8 = sld [smem:[#allocation0]]
  $region61: #{gin_convnet_forward.20} parent=0
    _
  %s10 = ssub.s32 1, %s8
  %s11 = scalar_select 0, %s10, %s8
  loop: start=0, step=1, limit=5
  $region2: #{gin_convnet_forward.20} parent=0 // loop_pre_header
    _
  $region3: #{gin_convnet_forward.20} parent=0 // loop_header
    %s13 = sphi 0, %s17
    %p14 = scmp.ge.s32.totalorder %s13, 5
    %s23 = sphi 0, %s25
    %s26 = sphi 0, %s23
    %s27 = sphi 0, %s26
    %s43 = sphi 0, %s27
    %s47 = sphi 0, %s47
    %s49 = sphi 0, %s47
    %s50 = sphi 0, %s49
    %s64 = sphi 0, %s50
    %s68 = sphi 0, %s68
    %s70 = sphi 0, %s68
    %s71 = sphi 0, %s70
    %s85 = sphi 0, %s71
    %s89 = sphi 0, %s89
    %s91 = sphi 0, %s89
    %s92 = sphi 0, %s91
    %s106 = sphi 0, %s92
    %s110 = sphi 0, %s110
    %s112 = sphi 0, %s110
    %s113 = sphi 0, %s112
    %s127 = sphi 0, %s113
    %s133 = sphi 0, %s135
    %s136 = sphi 0, %s133
    %s137 = sphi 0, %s136
    %s153 = sphi 0, %s137
    %s159 = sphi 0, %s161
    %s162 = sphi 0, %s159
    %s163 = sphi 0, %s162
    %s179 = sphi 0, %s163
  $region4: #{gin_convnet_forward.20} parent=0 // loop_header_branch
    %16 = sbr.rel (%p14) target = $region8
  $region5: #{gin_convnet_forward.20} parent=0 // loop_body
    %s18 = ssub.s32 %s13, 1
    %s19 = ssub.s32 %s13, 2
    %s20 = sadd.s32 %s13, 1
    %s21 = ssub.s32 %s13, %s20
    %p22 = scmp.eq.s32.totalorder %s21, 0
    %s24 = sadd.s32 %s23, 1
    %s25 = scalar_select %p22, %s23, %s24
    %p28 = pneg %p22
    %p29 = scmp.eq.s32.totalorder %s13, 2
    %p30 = por %p28, %p29
    %p31 = scmp.ne.s32.totalorder %s23, %s26
    %p32 = scmp.eq.s32.totalorder %s13, 0
    %p33 = por %p31, %p32
    %p34 = scmp.ne.s32.totalorder %s23, %s26
    %p35 = scmp.eq.s32.totalorder %s18, 2
    %p36 = por %p34, %p35
    %p37 = scmp.ne.s32.totalorder %s26, %s27
    %p38 = scmp.eq.s32.totalorder %s18, 0
    %p39 = por %p37, %p38
    %p40 = scmp.ne.s32.totalorder %s26, %s27
    %p41 = scmp.eq.s32.totalorder %s19, 2
    %p42 = por %p40, %p41
    %p44 = scmp.ne.s32.totalorder %s27, %s43
    %p45 = scmp.eq.s32.totalorder %s19, 0
    %p46 = por %p44, %p45
    %s48 = sadd.s32 %s47, 1
    %p51 = scmp.eq.s32.totalorder %s13, 2
    %p52 = scmp.ne.s32.totalorder %s47, %s49
    %p53 = scmp.eq.s32.totalorder %s13, 0
    %p54 = por %p52, %p53
    %p55 = scmp.ne.s32.totalorder %s47, %s49
    %p56 = scmp.eq.s32.totalorder %s18, 2
    %p57 = por %p55, %p56
    %p58 = scmp.ne.s32.totalorder %s49, %s50
    %p59 = scmp.eq.s32.totalorder %s18, 0
    %p60 = por %p58, %p59
    %p61 = scmp.ne.s32.totalorder %s49, %s50
    %p62 = scmp.eq.s32.totalorder %s19, 2
    %p63 = por %p61, %p62
    %p65 = scmp.ne.s32.totalorder %s50, %s64
    %p66 = scmp.eq.s32.totalorder %s19, 0
    %p67 = por %p65, %p66
    %s69 = sadd.s32 %s68, 1
    %p72 = scmp.eq.s32.totalorder %s13, 2
    %p73 = scmp.ne.s32.totalorder %s68, %s70
    %p74 = scmp.eq.s32.totalorder %s13, 0
    %p75 = por %p73, %p74
    %p76 = scmp.ne.s32.totalorder %s68, %s70
    %p77 = scmp.eq.s32.totalorder %s18, 2
    %p78 = por %p76, %p77
    %p79 = scmp.ne.s32.totalorder %s70, %s71
    %p80 = scmp.eq.s32.totalorder %s18, 0
    %p81 = por %p79, %p80
    %p82 = scmp.ne.s32.totalorder %s70, %s71
    %p83 = scmp.eq.s32.totalorder %s19, 2
    %p84 = por %p82, %p83
    %p86 = scmp.ne.s32.totalorder %s71, %s85
    %p87 = scmp.eq.s32.totalorder %s19, 0
    %p88 = por %p86, %p87
    %s90 = sadd.s32 %s89, 1
    %p93 = scmp.eq.s32.totalorder %s13, 2
    %p94 = scmp.ne.s32.totalorder %s89, %s91
    %p95 = scmp.eq.s32.totalorder %s13, 0
    %p96 = por %p94, %p95
    %p97 = scmp.ne.s32.totalorder %s89, %s91
    %p98 = scmp.eq.s32.totalorder %s18, 2
    %p99 = por %p97, %p98
    %p100 = scmp.ne.s32.totalorder %s91, %s92
    %p101 = scmp.eq.s32.totalorder %s18, 0
    %p102 = por %p100, %p101
    %p103 = scmp.ne.s32.totalorder %s91, %s92
    %p104 = scmp.eq.s32.totalorder %s19, 2
    %p105 = por %p103, %p104
    %p107 = scmp.ne.s32.totalorder %s92, %s106
    %p108 = scmp.eq.s32.totalorder %s19, 0
    %p109 = por %p107, %p108
    %s111 = sadd.s32 %s110, 1
    %p114 = scmp.eq.s32.totalorder %s13, 2
    %p115 = scmp.ne.s32.totalorder %s110, %s112
    %p116 = scmp.eq.s32.totalorder %s13, 0
    %p117 = por %p115, %p116
    %p118 = scmp.ne.s32.totalorder %s110, %s112
    %p119 = scmp.eq.s32.totalorder %s18, 2
    %p120 = por %p118, %p119
    %p121 = scmp.ne.s32.totalorder %s112, %s113
    %p122 = scmp.eq.s32.totalorder %s18, 0
    %p123 = por %p121, %p122
    %p124 = scmp.ne.s32.totalorder %s112, %s113
    %p125 = scmp.eq.s32.totalorder %s19, 2
    %p126 = por %p124, %p125
    %p128 = scmp.ne.s32.totalorder %s113, %s127
    %p129 = scmp.eq.s32.totalorder %s19, 0
    %p130 = por %p128, %p129
    %s131 = ssub.s32 %s13, %s20
    %p132 = scmp.eq.s32.totalorder %s131, 0
    %s134 = sadd.s32 %s133, 1
    %s135 = scalar_select %p132, %s133, %s134
    %p138 = pneg %p132
    %p139 = scmp.eq.s32.totalorder %s13, 2
    %p140 = por %p138, %p139
    %p141 = scmp.ne.s32.totalorder %s133, %s136
    %p142 = scmp.eq.s32.totalorder %s13, 0
    %p143 = por %p141, %p142
    %p144 = scmp.ne.s32.totalorder %s133, %s136
    %p145 = scmp.eq.s32.totalorder %s18, 2
    %p146 = por %p144, %p145
    %p147 = scmp.ne.s32.totalorder %s136, %s137
    %p148 = scmp.eq.s32.totalorder %s18, 0
    %p149 = por %p147, %p148
    %p150 = scmp.ne.s32.totalorder %s136, %s137
    %p151 = scmp.eq.s32.totalorder %s19, 2
    %p152 = por %p150, %p151
    %p154 = scmp.ne.s32.totalorder %s137, %s153
    %p155 = scmp.eq.s32.totalorder %s19, 0
    %p156 = por %p154, %p155
    %s157 = ssub.s32 %s13, %s20
    %p158 = scmp.eq.s32.totalorder %s157, 0
    %s160 = sadd.s32 %s159, 1
    %s161 = scalar_select %p158, %s159, %s160
    %p164 = pneg %p158
    %p165 = scmp.eq.s32.totalorder %s13, 2
    %p166 = por %p164, %p165
    %p167 = scmp.ne.s32.totalorder %s159, %s162
    %p168 = scmp.eq.s32.totalorder %s13, 0
    %p169 = por %p167, %p168
    %p170 = scmp.ne.s32.totalorder %s159, %s162
    %p171 = scmp.eq.s32.totalorder %s18, 2
    %p172 = por %p170, %p171
    %p173 = scmp.ne.s32.totalorder %s162, %s163
    %p174 = scmp.eq.s32.totalorder %s18, 0
    %p175 = por %p173, %p174
    %p176 = scmp.ne.s32.totalorder %s162, %s163
    %p177 = scmp.eq.s32.totalorder %s19, 2
    %p178 = por %p176, %p177
    %p180 = scmp.ne.s32.totalorder %s163, %s179
    %p181 = scmp.eq.s32.totalorder %s19, 0
    %p182 = por %p180, %p181
    %p183 = scmp.le.s32.totalorder 1, %s13
    %p184 = scmp.lt.s32.totalorder %s13, 4
    %p185 = pnand %p183, %p184
    %p186 = pneg %p185
    // Predicated region
    $region9: #{gin_convnet_forward.20} parent=5 // pred_check
      _
    $region10: #{gin_convnet_forward.20} parent=5 // pred_check_branch
      %188 = sbr.rel (%p185) target = $region12
    $region11: #{gin_convnet_forward.20} parent=5 // pred_region
      %s189 = ssub.s32 %s13, 1
      // Predicated region
      $region13: #{gin_convnet_forward.20} parent=11 // pred_check
        %p190 = pneg %p60
      $region14: #{gin_convnet_forward.20} parent=11 // pred_check_branch
        %192 = sbr.rel (%p190) target = $region16
      $region15: #{gin_convnet_forward.20} parent=11 // pred_region
        _
      $region16: #{gin_convnet_forward.20} parent=11 // pred_fallthru
        _
      // Predicated region
      $region17: #{gin_convnet_forward.20} parent=11 // pred_check
        %p193 = pneg %p81
      $region18: #{gin_convnet_forward.20} parent=11 // pred_check_branch
        %195 = sbr.rel (%p193) target = $region20
      $region19: #{gin_convnet_forward.20} parent=11 // pred_region
        _
      $region20: #{gin_convnet_forward.20} parent=11 // pred_fallthru
        _
      // Predicated region
      $region21: #{gin_convnet_forward.20} parent=11 // pred_check
        %p196 = pneg %p102
      $region22: #{gin_convnet_forward.20} parent=11 // pred_check_branch
        %198 = sbr.rel (%p196) target = $region24
      $region23: #{gin_convnet_forward.20} parent=11 // pred_region
        _
      $region24: #{gin_convnet_forward.20} parent=11 // pred_fallthru
        _
      // Predicated region
      $region25: #{gin_convnet_forward.20} parent=11 // pred_check
        %p199 = pneg %p123
      $region26: #{gin_convnet_forward.20} parent=11 // pred_check_branch
        %201 = sbr.rel (%p199) target = $region28
      $region27: #{gin_convnet_forward.20} parent=11 // pred_region
        _
      $region28: #{gin_convnet_forward.20} parent=11 // pred_fallthru
        _
    $region12: #{gin_convnet_forward.20} parent=5 // pred_fallthru
      _
    %p202 = scmp.lt.s32.totalorder %s13, 3
    // Predicated region
    $region29: #{gin_convnet_forward.20} parent=5 // pred_check
      %p203 = pneg %p202
    $region30: #{gin_convnet_forward.20} parent=5 // pred_check_branch
      %205 = sbr.rel (%p203) target = $region32
    $region31: #{gin_convnet_forward.20} parent=5 // pred_region
      // Predicated region
      $region33: #{gin_convnet_forward.20} parent=31 // pred_check
        %p206 = pneg %p33
      $region34: #{gin_convnet_forward.20} parent=31 // pred_check_branch
        %208 = sbr.rel (%p206) target = $region36
      $region35: #{gin_convnet_forward.20} parent=31 // pred_region
        %s209 = smul.u32 2, %s13
        %p210 = scmp.lt.s32.totalorder %s209, 5
        %s211 = scalar_select %p210, %s209, 5
        %s212 = smul.addr %s211, 2
        %s213 = smul.addr %s212, 8
        %s214 = scalar_lea.vmem %s0, %s213
        %s215 = smul.u32 2, %s13
      $region36: #{gin_convnet_forward.20} parent=31 // pred_fallthru
        _
    $region32: #{gin_convnet_forward.20} parent=5 // pred_fallthru
      _
    %p216 = scmp.le.s32.totalorder 1, %s13
    %p217 = scmp.lt.s32.totalorder %s13, 4
    %p218 = pnand %p216, %p217
    %p219 = pneg %p218
    // Predicated region
    $region37: #{gin_convnet_forward.20} parent=5 // pred_check
      _
    $region38: #{gin_convnet_forward.20} parent=5 // pred_check_branch
      %221 = sbr.rel (%p218) target = $region40
    $region39: #{gin_convnet_forward.20} parent=5 // pred_region
      %s222 = ssub.s32 %s13, 1
      %s223 = smul.u32 2, %s18
      %p224 = scmp.lt.s32.totalorder %s223, 5
      %s225 = scalar_select %p224, %s223, 5
      %s226 = smul.addr %s225, 2
      %s227 = smul.addr %s226, 8
      %s228 = scalar_lea.vmem %s0, %s227
      %p229 = pneg %p39
      %p230 = pneg %p36
      %p231 = pneg %p60
      %p232 = pneg %p57
      %p233 = pneg %p81
      %p234 = pneg %p78
      %p235 = pneg %p102
      %p236 = pneg %p99
      %p237 = pneg %p123
      %p238 = pneg %p120
      %p239 = pneg %p149
      %p240 = pneg %p146
      %s241 = smul.u32 2, %s18
      %p242 = scmp.lt.s32.totalorder %s241, 5
      %s243 = scalar_select %p242, %s241, 5
      %s244 = smul.addr %s243, 2
      %s245 = smul.addr %s244, 4
      %s246 = scalar_lea.vmem %s5, %s245
      %p247 = pneg %p175
      %p248 = pneg %p172
      %s249 = smul.u32 2, %s18
      %p250 = scmp.lt.s32.totalorder %s249, 5
      %s251 = scalar_select %p250, %s249, 5
      %s252 = smul.addr %s251, 2
      %s253 = smul.addr %s252, 4
      %s254 = scalar_lea.vmem %s6, %s253
      %s255 = smul.u32 2, %s18
      %p256 = scmp.lt.s32.totalorder %s255, 5
      %s257 = scalar_select %p256, %s255, 5
      %s258 = smul.addr %s257, 2
      %s259 = smul.addr %s258, 8
      %s260 = scalar_lea.vmem %s0, %s259
      %s261 = smul.u32 2, %s18
      %s262 = smul.u32 2, %s18
      %p263 = scmp.lt.s32.totalorder %s262, 5
      %s264 = scalar_select %p263, %s262, 5
      %s265 = smul.addr %s264, 2
      %s266 = smul.addr %s265, 4
      %s267 = scalar_lea.vmem %s5, %s266
      %s268 = smul.u32 2, %s18
      %s269 = smul.u32 2, %s18
      %p270 = scmp.lt.s32.totalorder %s269, 5
      %s271 = scalar_select %p270, %s269, 5
      %s272 = smul.addr %s271, 2
      %s273 = smul.addr %s272, 4
      %s274 = scalar_lea.vmem %s6, %s273
      %s275 = smul.u32 2, %s18
      %v276 = vld [vmem:[%s260] sm:$0xff]
      %v277 = vld [vmem:[%s260 + $0x8] sm:$0xff]
      %v278 = vld [vmem:[%s260 + $0x10] sm:$0xff]
      %v279 = vld [vmem:[%s260 + $0x18] sm:$0xff]
      %v280 = vmax.f32 %v276, 0.0
      %v281 = vmax.f32 %v277, 0.0
      %v282 = vmax.f32 %v278, 0.0
      %v283 = vmax.f32 %v279, 0.0
      %v284 = vld [vmem:[%s1] sm:$0x3]
      %v286 = vlaneseq
      %v287 = vshrl.u32 %v286, 7
      %v288 = vsub.s32 0, %v287
      %v289 = vrot.slane %v284, %v288
      %v290 = vlaneseq
      %v291 = vshrl.u32 %v290, 7
      %v292 = vsub.s32 1, %v291
      %v293 = vrot.slane %v284, %v292
      %v296 = vmul.f32 %v280, %v289
      %v297 = vmul.f32 %v281, %v293
      %v298 = vmul.f32 %v282, %v289
      %v299 = vmul.f32 %v283, %v293
      %v300 = vld [vmem:[%s2] sm:$0x3]
      %v302 = vlaneseq
      %v303 = vshrl.u32 %v302, 7
      %v304 = vsub.s32 0, %v303
      %v305 = vrot.slane %v300, %v304
      %v306 = vlaneseq
      %v307 = vshrl.u32 %v306, 7
      %v308 = vsub.s32 1, %v307
      %v309 = vrot.slane %v300, %v308
      %v312 = vadd.f32 %v296, %v305
      %v313 = vadd.f32 %v297, %v309
      %v314 = vadd.f32 %v298, %v305
      %v315 = vadd.f32 %v299, %v309
      %v316 = vpack.c.bf16 %v314, %v312
      %v317 = vpack.c.bf16 %v315, %v313
      %v318 = vld [vmem:[%s3] sm:$0xff]
      %v319 = vld [vmem:[%s3 + $0x8] sm:$0xff]
      %v320 = vld [vmem:[%s3 + $0x10] sm:$0xff]
      %v321 = vld [vmem:[%s3 + $0x18] sm:$0xff]
      %v322 = vld [vmem:[%s3 + $0x20] sm:$0xff]
      %v323 = vld [vmem:[%s3 + $0x28] sm:$0xff]
      %v324 = vld [vmem:[%s3 + $0x30] sm:$0xff]
      %v325 = vld [vmem:[%s3 + $0x38] sm:$0xff]
      %v326 = vld [vmem:[%s3 + $0x40] sm:$0xff]
      %v327 = vld [vmem:[%s3 + $0x48] sm:$0xff]
      %v328 = vld [vmem:[%s3 + $0x50] sm:$0xff]
      %v329 = vld [vmem:[%s3 + $0x58] sm:$0xff]
      %v330 = vld [vmem:[%s3 + $0x60] sm:$0xff]
      %v331 = vld [vmem:[%s3 + $0x68] sm:$0xff]
      %v332 = vld [vmem:[%s3 + $0x70] sm:$0xff]
      %v333 = vld [vmem:[%s3 + $0x78] sm:$0xff]
      %v334 = vld [vmem:[%s3 + $0x80] sm:$0xff]
      %v335 = vld [vmem:[%s3 + $0x88] sm:$0xff]
      %v336 = vld [vmem:[%s3 + $0x90] sm:$0xff]
      %v337 = vld [vmem:[%s3 + $0x98] sm:$0xff]
      %v338 = vld [vmem:[%s3 + $0xa0] sm:$0xff]
      %v339 = vld [vmem:[%s3 + $0xa8] sm:$0xff]
      %v340 = vld [vmem:[%s3 + $0xb0] sm:$0xff]
      %v341 = vld [vmem:[%s3 + $0xb8] sm:$0xff]
      %v342 = vld [vmem:[%s3 + $0xc0] sm:$0xff]
      %v343 = vld [vmem:[%s3 + $0xc8] sm:$0xff]
      %v344 = vld [vmem:[%s3 + $0xd0] sm:$0xff]
      %v345 = vld [vmem:[%s3 + $0xd8] sm:$0xff]
      %v346 = vld [vmem:[%s3 + $0xe0] sm:$0xff]
      %v347 = vld [vmem:[%s3 + $0xe8] sm:$0xff]
      %v348 = vld [vmem:[%s3 + $0xf0] sm:$0xff]
      %v349 = vld [vmem:[%s3 + $0xf8] sm:$0xff]
      %v350 = vld [vmem:[%s3 + $0x100] sm:$0xff]
      %v351 = vld [vmem:[%s3 + $0x108] sm:$0xff]
      %v352 = vld [vmem:[%s3 + $0x110] sm:$0xff]
      %v353 = vld [vmem:[%s3 + $0x118] sm:$0xff]
      %v354 = vld [vmem:[%s3 + $0x120] sm:$0xff]
      %v355 = vld [vmem:[%s3 + $0x128] sm:$0xff]
      %v356 = vld [vmem:[%s3 + $0x130] sm:$0xff]
      %v357 = vld [vmem:[%s3 + $0x138] sm:$0xff]
      %v358 = vld [vmem:[%s3 + $0x140] sm:$0xff]
      %v359 = vld [vmem:[%s3 + $0x148] sm:$0xff]
      %v360 = vld [vmem:[%s3 + $0x150] sm:$0xff]
      %v361 = vld [vmem:[%s3 + $0x158] sm:$0xff]
      %v362 = vld [vmem:[%s3 + $0x160] sm:$0xff]
      %v363 = vld [vmem:[%s3 + $0x168] sm:$0xff]
      %v364 = vld [vmem:[%s3 + $0x170] sm:$0xff]
      %v365 = vld [vmem:[%s3 + $0x178] sm:$0xff]
      %v366 = vld [vmem:[%s3 + $0x180] sm:$0xff]
      %v367 = vld [vmem:[%s3 + $0x188] sm:$0xff]
      %v368 = vld [vmem:[%s3 + $0x190] sm:$0xff]
      %v369 = vld [vmem:[%s3 + $0x198] sm:$0xff]
      %v370 = vld [vmem:[%s3 + $0x1a0] sm:$0xff]
      %v371 = vld [vmem:[%s3 + $0x1a8] sm:$0xff]
      %v372 = vld [vmem:[%s3 + $0x1b0] sm:$0xff]
      %v373 = vld [vmem:[%s3 + $0x1b8] sm:$0xff]
      %v374 = vld [vmem:[%s3 + $0x1c0] sm:$0xff]
      %v375 = vld [vmem:[%s3 + $0x1c8] sm:$0xff]
      %v376 = vld [vmem:[%s3 + $0x1d0] sm:$0xff]
      %v377 = vld [vmem:[%s3 + $0x1d8] sm:$0xff]
      %v378 = vld [vmem:[%s3 + $0x1e0] sm:$0xff]
      %v379 = vld [vmem:[%s3 + $0x1e8] sm:$0xff]
      %v380 = vld [vmem:[%s3 + $0x1f0] sm:$0xff]
      %v381 = vld [vmem:[%s3 + $0x1f8] sm:$0xff]
      %v446 = vunpack.c.l.b16 %v318
      %v447 = vunpack.c.h.b16 %v318
      %v448 = vunpack.c.l.b16 %v319
      %v449 = vunpack.c.h.b16 %v319
      %v450 = vunpack.c.l.b16 %v320
      %v451 = vunpack.c.h.b16 %v320
      %v452 = vunpack.c.l.b16 %v321
      %v453 = vunpack.c.h.b16 %v321
      %v454 = vunpack.c.l.b16 %v322
      %v455 = vunpack.c.h.b16 %v322
      %v456 = vunpack.c.l.b16 %v323
      %v457 = vunpack.c.h.b16 %v323
      %v458 = vunpack.c.l.b16 %v324
      %v459 = vunpack.c.h.b16 %v324
      %v460 = vunpack.c.l.b16 %v325
      %v461 = vunpack.c.h.b16 %v325
      %v462 = vunpack.c.l.b16 %v326
      %v463 = vunpack.c.h.b16 %v326
      %v464 = vunpack.c.l.b16 %v327
      %v465 = vunpack.c.h.b16 %v327
      %v466 = vunpack.c.l.b16 %v328
      %v467 = vunpack.c.h.b16 %v328
      %v468 = vunpack.c.l.b16 %v329
      %v469 = vunpack.c.h.b16 %v329
      %v470 = vunpack.c.l.b16 %v330
      %v471 = vunpack.c.h.b16 %v330
      %v472 = vunpack.c.l.b16 %v331
      %v473 = vunpack.c.h.b16 %v331
      %v474 = vunpack.c.l.b16 %v332
      %v475 = vunpack.c.h.b16 %v332
      %v476 = vunpack.c.l.b16 %v333
      %v477 = vunpack.c.h.b16 %v333
      %v478 = vunpack.c.l.b16 %v334
      %v479 = vunpack.c.h.b16 %v334
      %v480 = vunpack.c.l.b16 %v335
      %v481 = vunpack.c.h.b16 %v335
      %v482 = vunpack.c.l.b16 %v336
      %v483 = vunpack.c.h.b16 %v336
      %v484 = vunpack.c.l.b16 %v337
      %v485 = vunpack.c.h.b16 %v337
      %v486 = vunpack.c.l.b16 %v338
      %v487 = vunpack.c.h.b16 %v338
      %v488 = vunpack.c.l.b16 %v339
      %v489 = vunpack.c.h.b16 %v339
      %v490 = vunpack.c.l.b16 %v340
      %v491 = vunpack.c.h.b16 %v340
      %v492 = vunpack.c.l.b16 %v341
      %v493 = vunpack.c.h.b16 %v341
      %v494 = vunpack.c.l.b16 %v342
      %v495 = vunpack.c.h.b16 %v342
      %v496 = vunpack.c.l.b16 %v343
      %v497 = vunpack.c.h.b16 %v343
      %v498 = vunpack.c.l.b16 %v344
      %v499 = vunpack.c.h.b16 %v344
      %v500 = vunpack.c.l.b16 %v345
      %v501 = vunpack.c.h.b16 %v345
      %v502 = vunpack.c.l.b16 %v346
      %v503 = vunpack.c.h.b16 %v346
      %v504 = vunpack.c.l.b16 %v347
      %v505 = vunpack.c.h.b16 %v347
      %v506 = vunpack.c.l.b16 %v348
      %v507 = vunpack.c.h.b16 %v348
      %v508 = vunpack.c.l.b16 %v349
      %v509 = vunpack.c.h.b16 %v349
      %v510 = vunpack.c.l.b16 %v350
      %v511 = vunpack.c.h.b16 %v350
      %v512 = vunpack.c.l.b16 %v351
      %v513 = vunpack.c.h.b16 %v351
      %v514 = vunpack.c.l.b16 %v352
      %v515 = vunpack.c.h.b16 %v352
      %v516 = vunpack.c.l.b16 %v353
      %v517 = vunpack.c.h.b16 %v353
      %v518 = vunpack.c.l.b16 %v354
      %v519 = vunpack.c.h.b16 %v354
      %v520 = vunpack.c.l.b16 %v355
      %v521 = vunpack.c.h.b16 %v355
      %v522 = vunpack.c.l.b16 %v356
      %v523 = vunpack.c.h.b16 %v356
      %v524 = vunpack.c.l.b16 %v357
      %v525 = vunpack.c.h.b16 %v357
      %v526 = vunpack.c.l.b16 %v358
      %v527 = vunpack.c.h.b16 %v358
      %v528 = vunpack.c.l.b16 %v359
      %v529 = vunpack.c.h.b16 %v359
      %v530 = vunpack.c.l.b16 %v360
      %v531 = vunpack.c.h.b16 %v360
      %v532 = vunpack.c.l.b16 %v361
      %v533 = vunpack.c.h.b16 %v361
      %v534 = vunpack.c.l.b16 %v362
      %v535 = vunpack.c.h.b16 %v362
      %v536 = vunpack.c.l.b16 %v363
      %v537 = vunpack.c.h.b16 %v363
      %v538 = vunpack.c.l.b16 %v364
      %v539 = vunpack.c.h.b16 %v364
      %v540 = vunpack.c.l.b16 %v365
      %v541 = vunpack.c.h.b16 %v365
      %v542 = vunpack.c.l.b16 %v366
      %v543 = vunpack.c.h.b16 %v366
      %v544 = vunpack.c.l.b16 %v367
      %v545 = vunpack.c.h.b16 %v367
      %v546 = vunpack.c.l.b16 %v368
      %v547 = vunpack.c.h.b16 %v368
      %v548 = vunpack.c.l.b16 %v369
      %v549 = vunpack.c.h.b16 %v369
      %v550 = vunpack.c.l.b16 %v370
      %v551 = vunpack.c.h.b16 %v370
      %v552 = vunpack.c.l.b16 %v371
      %v553 = vunpack.c.h.b16 %v371
      %v554 = vunpack.c.l.b16 %v372
      %v555 = vunpack.c.h.b16 %v372
      %v556 = vunpack.c.l.b16 %v373
      %v557 = vunpack.c.h.b16 %v373
      %v558 = vunpack.c.l.b16 %v374
      %v559 = vunpack.c.h.b16 %v374
      %v560 = vunpack.c.l.b16 %v375
      %v561 = vunpack.c.h.b16 %v375
      %v562 = vunpack.c.l.b16 %v376
      %v563 = vunpack.c.h.b16 %v376
      %v564 = vunpack.c.l.b16 %v377
      %v565 = vunpack.c.h.b16 %v377
      %v566 = vunpack.c.l.b16 %v378
      %v567 = vunpack.c.h.b16 %v378
      %v568 = vunpack.c.l.b16 %v379
      %v569 = vunpack.c.h.b16 %v379
      %v570 = vunpack.c.l.b16 %v380
      %v571 = vunpack.c.h.b16 %v380
      %v572 = vunpack.c.l.b16 %v381
      %v573 = vunpack.c.h.b16 %v381
      %v574 = vpack.c.b16 %v450, %v446
      %v575 = vpack.c.b16 %v451, %v447
      %v576 = vpack.c.b16 %v452, %v448
      %v577 = vpack.c.b16 %v453, %v449
      %v578 = vpack.c.b16 %v458, %v454
      %v579 = vpack.c.b16 %v459, %v455
      %v580 = vpack.c.b16 %v460, %v456
      %v581 = vpack.c.b16 %v461, %v457
      %v582 = vpack.c.b16 %v466, %v462
      %v583 = vpack.c.b16 %v467, %v463
      %v584 = vpack.c.b16 %v468, %v464
      %v585 = vpack.c.b16 %v469, %v465
      %v586 = vpack.c.b16 %v474, %v470
      %v587 = vpack.c.b16 %v475, %v471
      %v588 = vpack.c.b16 %v476, %v472
      %v589 = vpack.c.b16 %v477, %v473
      %v590 = vpack.c.b16 %v482, %v478
      %v591 = vpack.c.b16 %v483, %v479
      %v592 = vpack.c.b16 %v484, %v480
      %v593 = vpack.c.b16 %v485, %v481
      %v594 = vpack.c.b16 %v490, %v486
      %v595 = vpack.c.b16 %v491, %v487
      %v596 = vpack.c.b16 %v492, %v488
      %v597 = vpack.c.b16 %v493, %v489
      %v598 = vpack.c.b16 %v498, %v494
      %v599 = vpack.c.b16 %v499, %v495
      %v600 = vpack.c.b16 %v500, %v496
      %v601 = vpack.c.b16 %v501, %v497
      %v602 = vpack.c.b16 %v506, %v502
      %v603 = vpack.c.b16 %v507, %v503
      %v604 = vpack.c.b16 %v508, %v504
      %v605 = vpack.c.b16 %v509, %v505
      %v606 = vpack.c.b16 %v514, %v510
      %v607 = vpack.c.b16 %v515, %v511
      %v608 = vpack.c.b16 %v516, %v512
      %v609 = vpack.c.b16 %v517, %v513
      %v610 = vpack.c.b16 %v522, %v518
      %v611 = vpack.c.b16 %v523, %v519
      %v612 = vpack.c.b16 %v524, %v520
      %v613 = vpack.c.b16 %v525, %v521
      %v614 = vpack.c.b16 %v530, %v526
      %v615 = vpack.c.b16 %v531, %v527
      %v616 = vpack.c.b16 %v532, %v528
      %v617 = vpack.c.b16 %v533, %v529
      %v618 = vpack.c.b16 %v538, %v534
      %v619 = vpack.c.b16 %v539, %v535
      %v620 = vpack.c.b16 %v540, %v536
      %v621 = vpack.c.b16 %v541, %v537
      %v622 = vpack.c.b16 %v546, %v542
      %v623 = vpack.c.b16 %v547, %v543
      %v624 = vpack.c.b16 %v548, %v544
      %v625 = vpack.c.b16 %v549, %v545
      %v626 = vpack.c.b16 %v554, %v550
      %v627 = vpack.c.b16 %v555, %v551
      %v628 = vpack.c.b16 %v556, %v552
      %v629 = vpack.c.b16 %v557, %v553
      %v630 = vpack.c.b16 %v562, %v558
      %v631 = vpack.c.b16 %v563, %v559
      %v632 = vpack.c.b16 %v564, %v560
      %v633 = vpack.c.b16 %v565, %v561
      %v634 = vpack.c.b16 %v570, %v566
      %v635 = vpack.c.b16 %v571, %v567
      %v636 = vpack.c.b16 %v572, %v568
      %v637 = vpack.c.b16 %v573, %v569
      %702 = vmatprep.subr.bf16.mxu0 %v575
      %703 = vmatpush1.bf16.msra.mxu0 %v574
      %704 = vmatprep.subr.bf16.mxu0 %v579
      %705 = vmatpush1.bf16.msra.mxu0 %v578
      %706 = vmatprep.subr.bf16.mxu0 %v583
      %707 = vmatpush1.bf16.msra.mxu0 %v582
      %708 = vmatprep.subr.bf16.mxu0 %v587
      %709 = vmatpush1.bf16.msra.mxu0 %v586
      %710 = vmatprep.subr.bf16.mxu0 %v591
      %711 = vmatpush1.bf16.msra.mxu0 %v590
      %712 = vmatprep.subr.bf16.mxu0 %v595
      %713 = vmatpush1.bf16.msra.mxu0 %v594
      %714 = vmatprep.subr.bf16.mxu0 %v599
      %715 = vmatpush1.bf16.msra.mxu0 %v598
      %716 = vmatprep.subr.bf16.mxu0 %v603
      %717 = vmatpush1.bf16.msra.mxu0 %v602
      %718 = vmatprep.subr.bf16.mxu0 %v607
      %719 = vmatpush1.bf16.msra.mxu0 %v606
      %720 = vmatprep.subr.bf16.mxu0 %v611
      %721 = vmatpush1.bf16.msra.mxu0 %v610
      %722 = vmatprep.subr.bf16.mxu0 %v615
      %723 = vmatpush1.bf16.msra.mxu0 %v614
      %724 = vmatprep.subr.bf16.mxu0 %v619
      %725 = vmatpush1.bf16.msra.mxu0 %v618
      %726 = vmatprep.subr.bf16.mxu0 %v623
      %727 = vmatpush1.bf16.msra.mxu0 %v622
      %728 = vmatprep.subr.bf16.mxu0 %v627
      %729 = vmatpush1.bf16.msra.mxu0 %v626
      %730 = vmatprep.subr.bf16.mxu0 %v631
      %731 = vmatpush1.bf16.msra.mxu0 %v630
      %732 = vmatprep.subr.bf16.mxu0 %v635
      %733 = vmatpush1.bf16.msra.mxu0 %v634
      %734 = vmatprep.mubr.bf16.mxu0 %v317
      %735 = vmatmul.mubr.bf16.gmra.mrb[0].mxu0 %v316
      %v736 = vpop.f32.mrb[0].mxu0
      %v737 = vadd.f32 0.0, %v736
      %v738 = vpop.f32.mrb[0].mxu0
      %v739 = vadd.f32 0.0, %v738
      %v740 = vpop.f32.mrb[0].mxu0
      %v741 = vadd.f32 0.0, %v740
      %v742 = vpop.f32.mrb[0].mxu0
      %v743 = vadd.f32 0.0, %v742
      %744 = vdwg.mxu0
      %745 = vmatprep.subr.bf16.mxu0 %v577
      %746 = vmatpush1.bf16.msra.mxu0 %v576
      %747 = vmatprep.subr.bf16.mxu0 %v581
      %748 = vmatpush1.bf16.msra.mxu0 %v580
      %749 = vmatprep.subr.bf16.mxu0 %v585
      %750 = vmatpush1.bf16.msra.mxu0 %v584
      %751 = vmatprep.subr.bf16.mxu0 %v589
      %752 = vmatpush1.bf16.msra.mxu0 %v588
      %753 = vmatprep.subr.bf16.mxu0 %v593
      %754 = vmatpush1.bf16.msra.mxu0 %v592
      %755 = vmatprep.subr.bf16.mxu0 %v597
      %756 = vmatpush1.bf16.msra.mxu0 %v596
      %757 = vmatprep.subr.bf16.mxu0 %v601
      %758 = vmatpush1.bf16.msra.mxu0 %v600
      %759 = vmatprep.subr.bf16.mxu0 %v605
      %760 = vmatpush1.bf16.msra.mxu0 %v604
      %761 = vmatprep.subr.bf16.mxu0 %v609
      %762 = vmatpush1.bf16.msra.mxu0 %v608
      %763 = vmatprep.subr.bf16.mxu0 %v613
      %764 = vmatpush1.bf16.msra.mxu0 %v612
      %765 = vmatprep.subr.bf16.mxu0 %v617
      %766 = vmatpush1.bf16.msra.mxu0 %v616
      %767 = vmatprep.subr.bf16.mxu0 %v621
      %768 = vmatpush1.bf16.msra.mxu0 %v620
      %769 = vmatprep.subr.bf16.mxu0 %v625
      %770 = vmatpush1.bf16.msra.mxu0 %v624
      %771 = vmatprep.subr.bf16.mxu0 %v629
      %772 = vmatpush1.bf16.msra.mxu0 %v628
      %773 = vmatprep.subr.bf16.mxu0 %v633
      %774 = vmatpush1.bf16.msra.mxu0 %v632
      %775 = vmatprep.subr.bf16.mxu0 %v637
      %776 = vmatpush1.bf16.msra.mxu0 %v636
      %777 = vmatprep.mubr.bf16.mxu0 %v317
      %778 = vmatmul.mubr.bf16.gmra.mrb[0].mxu0 %v316
      %v779 = vpop.f32.mrb[0].mxu0
      %v780 = vadd.f32 0.0, %v779
      %v781 = vpop.f32.mrb[0].mxu0
      %v782 = vadd.f32 0.0, %v781
      %v783 = vpop.f32.mrb[0].mxu0
      %v784 = vadd.f32 0.0, %v783
      %v785 = vpop.f32.mrb[0].mxu0
      %v786 = vadd.f32 0.0, %v785
      %787 = vdwg.mxu0
      %v788 = vld [vmem:[%s4] sm:$0x3]
      %v790 = vlaneseq
      %v791 = vshrl.u32 %v790, 7
      %v792 = vsub.s32 0, %v791
      %v793 = vrot.slane %v788, %v792
      %v794 = vlaneseq
      %v795 = vshrl.u32 %v794, 7
      %v796 = vsub.s32 1, %v795
      %v797 = vrot.slane %v788, %v796
      %v800 = vadd.f32 %v737, %v793
      %v801 = vadd.f32 %v739, %v797
      %v802 = vadd.f32 %v741, %v793
      %v803 = vadd.f32 %v743, %v797
      %v804 = vpack.c.bf16 %v802, %v800
      %v805 = vpack.c.bf16 %v803, %v801
      %v808 = vunpack.c.l.b16 %v804
      %v809 = vunpack.c.l.b16 %v805
      %v810 = vunpack.c.h.b16 %v804
      %v811 = vunpack.c.h.b16 %v805
      %v812 = vpack.c.b16 %v809, %v808
      %v813 = vpack.c.b16 %v811, %v810
      %816 = vst [vmem:[%s267] sm:$0xff] %v812
      %817 = vst [vmem:[%s267 + $0x8] sm:$0xff] %v813
      %v818 = vpack.c.bf16 %v784, %v780
      %v819 = vpack.c.bf16 %v786, %v782
      %v822 = vunpack.c.l.b16 %v818
      %v823 = vunpack.c.l.b16 %v819
      %v824 = vunpack.c.h.b16 %v818
      %v825 = vunpack.c.h.b16 %v819
      %v826 = vpack.c.b16 %v823, %v822
      %v827 = vpack.c.b16 %v825, %v824
      %830 = vst [vmem:[%s274] sm:$0xff] %v826
      %831 = vst [vmem:[%s274 + $0x8] sm:$0xff] %v827
      %s832 = smul.u32 2, %s18
      %p833 = scmp.lt.s32.totalorder %s832, 5
      %s834 = scalar_select %p833, %s832, 5
      %s835 = smul.addr %s834, 2
      %s836 = smul.addr %s835, 4
      %s837 = scalar_lea.vmem %s5, %s836
      %s838 = smul.u32 2, %s18
      %p839 = scmp.lt.s32.totalorder %s838, 5
      %s840 = scalar_select %p839, %s838, 5
      %s841 = smul.addr %s840, 2
      %s842 = smul.addr %s841, 4
      %s843 = scalar_lea.vmem %s6, %s842
      // Predicated region
      $region41: #{gin_convnet_forward.20} parent=39 // pred_check
        %p844 = pneg %p146
      $region42: #{gin_convnet_forward.20} parent=39 // pred_check_branch
        %846 = sbr.rel (%p844) target = $region44
      $region43: #{gin_convnet_forward.20} parent=39 // pred_region
        %s847 = smul.u32 2, %s18
      $region44: #{gin_convnet_forward.20} parent=39 // pred_fallthru
        _
      // Predicated region
      $region45: #{gin_convnet_forward.20} parent=39 // pred_check
        %p848 = pneg %p172
      $region46: #{gin_convnet_forward.20} parent=39 // pred_check_branch
        %850 = sbr.rel (%p848) target = $region48
      $region47: #{gin_convnet_forward.20} parent=39 // pred_region
        %s851 = smul.u32 2, %s18
      $region48: #{gin_convnet_forward.20} parent=39 // pred_fallthru
        _
    $region40: #{gin_convnet_forward.20} parent=5 // pred_fallthru
      _
    %p852 = scmp.le.s32.totalorder 2, %s13
    // Predicated region
    $region49: #{gin_convnet_forward.20} parent=5 // pred_check
      %p853 = pneg %p852
    $region50: #{gin_convnet_forward.20} parent=5 // pred_check_branch
      %855 = sbr.rel (%p853) target = $region52
    $region51: #{gin_convnet_forward.20} parent=5 // pred_region
      %s856 = ssub.s32 %s13, 2
      // Predicated region
      $region53: #{gin_convnet_forward.20} parent=51 // pred_check
        %p857 = pneg %p152
      $region54: #{gin_convnet_forward.20} parent=51 // pred_check_branch
        %859 = sbr.rel (%p857) target = $region56
      $region55: #{gin_convnet_forward.20} parent=51 // pred_region
        %s860 = smul.u32 2, %s19
        %p861 = scmp.lt.s32.totalorder %s860, 5
        %s862 = scalar_select %p861, %s860, 5
        %s863 = smul.addr %s862, 2
        %s864 = smul.addr %s863, 4
        %s865 = scalar_lea.vmem %s5, %s864
      $region56: #{gin_convnet_forward.20} parent=51 // pred_fallthru
        _
      // Predicated region
      $region57: #{gin_convnet_forward.20} parent=51 // pred_check
        %p866 = pneg %p178
      $region58: #{gin_convnet_forward.20} parent=51 // pred_check_branch
        %868 = sbr.rel (%p866) target = $region60
      $region59: #{gin_convnet_forward.20} parent=51 // pred_region
        %s869 = smul.u32 2, %s19
        %p870 = scmp.lt.s32.totalorder %s869, 5
        %s871 = scalar_select %p870, %s869, 5
        %s872 = smul.addr %s871, 2
        %s873 = smul.addr %s872, 4
        %s874 = scalar_lea.vmem %s6, %s873
      $region60: #{gin_convnet_forward.20} parent=51 // pred_fallthru
        _
    $region52: #{gin_convnet_forward.20} parent=5 // pred_fallthru
      _
  $region6: #{gin_convnet_forward.20} parent=0 // loop_footer
    %s17 = sadd.s32 1, %s13
  $region7: #{gin_convnet_forward.20} parent=0 // loop_footer_branch
    %12 = sbr.rel target = $region3
  $region8: #{gin_convnet_forward.20} parent=0 // loop_exit
    _

// kernel: gin_convnet_forward.27
$region0: #{gin_convnet_forward.27}
  #allocation0 [shape = 'u32[]', space=smem, size = 0x4, offset = 0x4, fixed_abs, tag = 'smem constant byte address 0x4 - core index']
  #allocation1 [shape = 'u32[144,128]{1,0:T(1,128)}', space=vmem, size = 0x12000, scoped, tag = 'internal scratch']
  %s0 = inlined_call_operand.vmem [shape: f32[3,2,256], index: 0, kind: input, shape index: {}]
  %s1 = inlined_call_operand.vmem [shape: f32[1,256], index: 1, kind: input, shape index: {}]
  %s2 = inlined_call_operand.vmem [shape: f32[1,256], index: 2, kind: input, shape index: {}]
  %s3 = inlined_call_operand.hbm [shape: f32[2,256], index: 3, kind: output, shape index: {}]
  %s4 = sld [smem:[#allocation0]]
  $region22: #{gin_convnet_forward.27} parent=0
    _
  %s6 = ssub.s32 1, %s4
  %s7 = scalar_select 0, %s6, %s4
  $region1: #{gin_convnet_forward.27} parent=0
    #allocation2 [shape = 'u8[2048]{0}', space=vmem, size = 0x800, scoped, tag = 'output window, operand 0, single buffered']
    #allocation3 [shape = 's32[1]{0}', space=sflag, size = 0x4, scoped, tag = 'scoped memory for gin_convnet_forward.27']
    %8 = vsyncpa [#allocation3], 0
    // Predicated region
    $region2: #{gin_convnet_forward.27} parent=1 // pred_check
      _
    $region3: #{gin_convnet_forward.27} parent=1 // pred_check_branch
      %10 = sbr.rel (0) target = $region5
    $region4: #{gin_convnet_forward.27} parent=1 // pred_region
      _
    $region5: #{gin_convnet_forward.27} parent=1 // pred_fallthru
      _
    // Predicated region
    $region6: #{gin_convnet_forward.27} parent=1 // pred_check
      _
    $region7: #{gin_convnet_forward.27} parent=1 // pred_check_branch
      %12 = sbr.rel (0) target = $region9
    $region8: #{gin_convnet_forward.27} parent=1 // pred_region
      _
    $region9: #{gin_convnet_forward.27} parent=1 // pred_fallthru
      _
    // Predicated region
    $region10: #{gin_convnet_forward.27} parent=1 // pred_check
      _
    $region11: #{gin_convnet_forward.27} parent=1 // pred_check_branch
      %14 = sbr.rel (0) target = $region13
    $region12: #{gin_convnet_forward.27} parent=1 // pred_region
      _
    $region13: #{gin_convnet_forward.27} parent=1 // pred_fallthru
      _
    %v15 = vld [vmem:[%s0] sm:$0xf]
    %v16 = vld [vmem:[%s0 + $0x4] sm:$0xf]
    %v17 = vld [vmem:[%s0 + $0x8] sm:$0xf]
    %v22 = vunpack.c.l.s4 1983009808
    %v23 = vunpack.c.0.s8 %v22
    %v24 = vlaneseq
    %v25 = vshrl.u32 %v24, 7
    %v26 = vsub.s32 %v23, %v25
    %v27 = vrot.slane %v15, %v26
    %v28 = vcombine.high %v27, %v27
    %v30 = vunpack.c.l.s4 1983009808
    %v31 = vunpack.c.0.s8 %v30
    %v32 = vlaneseq
    %v33 = vshrl.u32 %v32, 7
    %v34 = vsub.s32 %v31, %v33
    %v35 = vrot.slane %v16, %v34
    %v36 = vcombine.high %v35, %v35
    %v38 = vunpack.c.l.s4 1983009808
    %v39 = vunpack.c.0.s8 %v38
    %v40 = vlaneseq
    %v41 = vshrl.u32 %v40, 7
    %v42 = vsub.s32 %v39, %v41
    %v43 = vrot.slane %v17, %v42
    %v44 = vcombine.high %v43, %v43
    %vm51 = vcmask 1041408
    %v52 = vsel %vm51, %v27, 0.0
    %v53 = vsel %vm51, %v35, 0.0
    %v54 = vadd.f32 %v52, %v53
    %v55 = vsel %vm51, %v43, 0.0
    %v56 = vadd.f32 %v54, %v55
    %v57 = vsel %vm51, %v28, 0.0
    %v58 = vsel %vm51, %v36, 0.0
    %v59 = vadd.f32 %v57, %v58
    %v60 = vsel %vm51, %v44, 0.0
    %v61 = vadd.f32 %v59, %v60
    %v62 = vsel %vm51, %v56, 0.0
    %v63 = vrot.slane %v62, 4
    %v64 = vadd.f32 %v62, %v63
    %v65 = vrot.slane %v64, 2
    %v66 = vadd.f32 %v64, %v65
    %v67 = vrot.slane %v66, 1
    %v68 = vadd.f32 %v66, %v67
    %v69 = vsel %vm51, %v61, 0.0
    %v70 = vrot.slane %v69, 4
    %v71 = vadd.f32 %v69, %v70
    %v72 = vrot.slane %v71, 2
    %v73 = vadd.f32 %v71, %v72
    %v74 = vrot.slane %v73, 1
    %v75 = vadd.f32 %v73, %v74
    %v76 = vrcp.pop 2.0
    %v77 = vmul.f32 %v68, %v76
    %v78 = vmul.f32 %v75, %v76
    %v79 = vsub.f32 %v56, %v77
    %v80 = vsub.f32 %v61, %v78
    %v81 = vmul.f32 %v79, %v79
    %v82 = vmul.f32 %v80, %v80
    %v83 = vsel %vm51, %v81, 0.0
    %v84 = vrot.slane %v83, 4
    %v85 = vadd.f32 %v83, %v84
    %v86 = vrot.slane %v85, 2
    %v87 = vadd.f32 %v85, %v86
    %v88 = vrot.slane %v87, 1
    %v89 = vadd.f32 %v87, %v88
    %v90 = vsel %vm51, %v82, 0.0
    %v91 = vrot.slane %v90, 4
    %v92 = vadd.f32 %v90, %v91
    %v93 = vrot.slane %v92, 2
    %v94 = vadd.f32 %v92, %v93
    %v95 = vrot.slane %v94, 1
    %v96 = vadd.f32 %v94, %v95
    %v97 = vmul.f32 %v89, %v76
    %v98 = vmul.f32 %v96, %v76
    %v99 = vld [vmem:[%s1] sm:$0x3]
    %v101 = vlaneseq
    %v102 = vshrl.u32 %v101, 7
    %v103 = vsub.s32 0, %v102
    %v104 = vrot.slane %v99, %v103
    %v105 = vlaneseq
    %v106 = vshrl.u32 %v105, 7
    %v107 = vsub.s32 1, %v106
    %v108 = vrot.slane %v99, %v107
    %v111 = vmul.f32 %v104, %v79
    %v112 = vmul.f32 %v108, %v80
    %v113 = vadd.f32 %v97, 1e-05
    %v114 = vadd.f32 %v98, 1e-05
    %v115 = vrsqrt.pop %v113
    %v116 = vrsqrt.pop %v114
    %v117 = vmul.f32 %v111, %v115
    %v118 = vmul.f32 %v112, %v116
    %v119 = vld [vmem:[%s2] sm:$0x3]
    %v121 = vlaneseq
    %v122 = vshrl.u32 %v121, 7
    %v123 = vsub.s32 0, %v122
    %v124 = vrot.slane %v119, %v123
    %v125 = vlaneseq
    %v126 = vshrl.u32 %v125, 7
    %v127 = vsub.s32 1, %v126
    %v128 = vrot.slane %v119, %v127
    %v131 = vadd.f32 %v117, %v124
    %v132 = vadd.f32 %v118, %v128
    %v135 = vcombine.low %v131, %v132
    %v137 = vunpack.c.l.s4 1983009808
    %v138 = vunpack.c.0.s8 %v137
    %v139 = vlaneseq
    %v140 = vshrl.u32 %v139, 7
    %v141 = vsub.s32 %v138, %v140
    %v142 = vrot.slane %v135, %v141
    %144 = vst [vmem:[#allocation2] sm:$0xf] %v142
    // Predicated region
    $region14: #{gin_convnet_forward.27} parent=1 // pred_check
      _
    $region15: #{gin_convnet_forward.27} parent=1 // pred_check_branch
      %146 = sbr.rel (0) target = $region17
    $region16: #{gin_convnet_forward.27} parent=1 // pred_region
      %s148 = ssub.s32 64, 64
      %149 = vsyncadd [#allocation3], %s148
      %s151 = sshll.u32 [#allocation2], 4
      %s152 = int_to_ptr.vmem [resolvable:$true] %s151
      %154 = dma.vmem_to_hbm [thread:$0]  %s152, 64, %s3, [#allocation3]
    $region17: #{gin_convnet_forward.27} parent=1 // pred_fallthru
      _
    // Predicated region
    $region18: #{gin_convnet_forward.27} parent=1 // pred_check
      _
    $region19: #{gin_convnet_forward.27} parent=1 // pred_check_branch
      %156 = sbr.rel (0) target = $region21
    $region20: #{gin_convnet_forward.27} parent=1 // pred_region
      %157 = dma.done [#allocation3], 64
    $region21: #{gin_convnet_forward.27} parent=1 // pred_fallthru
      _
    %158 = vsyncpa [#allocation3], 1

// kernel: gin_convnet_forward.26
$region0: #{gin_convnet_forward.26}
  #allocation0 [shape = 'u32[]', space=smem, size = 0x4, offset = 0x4, fixed_abs, tag = 'smem constant byte address 0x4 - core index']
  #allocation1 [shape = 'u32[144,128]{1,0:T(1,128)}', space=vmem, size = 0x12000, scoped, tag = 'internal scratch']
  %s0 = inlined_call_operand.vmem [shape: f32[48,256], index: 0, kind: input, shape index: {}]
  %s1 = inlined_call_operand.vmem [shape: f32[1,256], index: 1, kind: input, shape index: {}]
  %s2 = inlined_call_operand.vmem [shape: f32[1,256], index: 2, kind: input, shape index: {}]
  %s3 = inlined_call_operand.vmem [shape: s32[48,1], index: 3, kind: input, shape index: {}]
  %s4 = inlined_call_operand.vmem [shape: f32[3,2,256], index: 4, kind: output, shape index: {}]
  %s5 = sld [smem:[#allocation0]]
  $region49: #{gin_convnet_forward.26} parent=0
    _
  %s7 = ssub.s32 1, %s5
  %s8 = scalar_select 0, %s7, %s5
  loop: start=0, step=1, limit=5
  $region2: #{gin_convnet_forward.26} parent=0 // loop_pre_header
    _
  $region3: #{gin_convnet_forward.26} parent=0 // loop_header
    %s10 = sphi 0, %s14
    %p11 = scmp.ge.s32.totalorder %s10, 5
    %s20 = sphi 0, %s22
    %s23 = sphi 0, %s20
    %s24 = sphi 0, %s23
    %s40 = sphi 0, %s24
    %s44 = sphi 0, %s44
    %s46 = sphi 0, %s44
    %s47 = sphi 0, %s46
    %s61 = sphi 0, %s47
    %s65 = sphi 0, %s65
    %s67 = sphi 0, %s65
    %s68 = sphi 0, %s67
    %s82 = sphi 0, %s68
    %s88 = sphi 0, %s90
    %s91 = sphi 0, %s88
    %s92 = sphi 0, %s91
    %s108 = sphi 0, %s92
    %s114 = sphi 0, %s116
    %s117 = sphi 0, %s114
    %s118 = sphi 0, %s117
    %s134 = sphi 0, %s118
  $region4: #{gin_convnet_forward.26} parent=0 // loop_header_branch
    %13 = sbr.rel (%p11) target = $region8
  $region5: #{gin_convnet_forward.26} parent=0 // loop_body
    %s15 = ssub.s32 %s10, 1
    %s16 = ssub.s32 %s10, 2
    %s17 = sadd.s32 %s10, 1
    %s18 = ssub.s32 %s10, %s17
    %p19 = scmp.eq.s32.totalorder %s18, 0
    %s21 = sadd.s32 %s20, 1
    %s22 = scalar_select %p19, %s20, %s21
    %p25 = pneg %p19
    %p26 = scmp.eq.s32.totalorder %s10, 2
    %p27 = por %p25, %p26
    %p28 = scmp.ne.s32.totalorder %s20, %s23
    %p29 = scmp.eq.s32.totalorder %s10, 0
    %p30 = por %p28, %p29
    %p31 = scmp.ne.s32.totalorder %s20, %s23
    %p32 = scmp.eq.s32.totalorder %s15, 2
    %p33 = por %p31, %p32
    %p34 = scmp.ne.s32.totalorder %s23, %s24
    %p35 = scmp.eq.s32.totalorder %s15, 0
    %p36 = por %p34, %p35
    %p37 = scmp.ne.s32.totalorder %s23, %s24
    %p38 = scmp.eq.s32.totalorder %s16, 2
    %p39 = por %p37, %p38
    %p41 = scmp.ne.s32.totalorder %s24, %s40
    %p42 = scmp.eq.s32.totalorder %s16, 0
    %p43 = por %p41, %p42
    %s45 = sadd.s32 %s44, 1
    %p48 = scmp.eq.s32.totalorder %s10, 2
    %p49 = scmp.ne.s32.totalorder %s44, %s46
    %p50 = scmp.eq.s32.totalorder %s10, 0
    %p51 = por %p49, %p50
    %p52 = scmp.ne.s32.totalorder %s44, %s46
    %p53 = scmp.eq.s32.totalorder %s15, 2
    %p54 = por %p52, %p53
    %p55 = scmp.ne.s32.totalorder %s46, %s47
    %p56 = scmp.eq.s32.totalorder %s15, 0
    %p57 = por %p55, %p56
    %p58 = scmp.ne.s32.totalorder %s46, %s47
    %p59 = scmp.eq.s32.totalorder %s16, 2
    %p60 = por %p58, %p59
    %p62 = scmp.ne.s32.totalorder %s47, %s61
    %p63 = scmp.eq.s32.totalorder %s16, 0
    %p64 = por %p62, %p63
    %s66 = sadd.s32 %s65, 1
    %p69 = scmp.eq.s32.totalorder %s10, 2
    %p70 = scmp.ne.s32.totalorder %s65, %s67
    %p71 = scmp.eq.s32.totalorder %s10, 0
    %p72 = por %p70, %p71
    %p73 = scmp.ne.s32.totalorder %s65, %s67
    %p74 = scmp.eq.s32.totalorder %s15, 2
    %p75 = por %p73, %p74
    %p76 = scmp.ne.s32.totalorder %s67, %s68
    %p77 = scmp.eq.s32.totalorder %s15, 0
    %p78 = por %p76, %p77
    %p79 = scmp.ne.s32.totalorder %s67, %s68
    %p80 = scmp.eq.s32.totalorder %s16, 2
    %p81 = por %p79, %p80
    %p83 = scmp.ne.s32.totalorder %s68, %s82
    %p84 = scmp.eq.s32.totalorder %s16, 0
    %p85 = por %p83, %p84
    %s86 = ssub.s32 %s10, %s17
    %p87 = scmp.eq.s32.totalorder %s86, 0
    %s89 = sadd.s32 %s88, 1
    %s90 = scalar_select %p87, %s88, %s89
    %p93 = pneg %p87
    %p94 = scmp.eq.s32.totalorder %s10, 2
    %p95 = por %p93, %p94
    %p96 = scmp.ne.s32.totalorder %s88, %s91
    %p97 = scmp.eq.s32.totalorder %s10, 0
    %p98 = por %p96, %p97
    %p99 = scmp.ne.s32.totalorder %s88, %s91
    %p100 = scmp.eq.s32.totalorder %s15, 2
    %p101 = por %p99, %p100
    %p102 = scmp.ne.s32.totalorder %s91, %s92
    %p103 = scmp.eq.s32.totalorder %s15, 0
    %p104 = por %p102, %p103
    %p105 = scmp.ne.s32.totalorder %s91, %s92
    %p106 = scmp.eq.s32.totalorder %s16, 2
    %p107 = por %p105, %p106
    %p109 = scmp.ne.s32.totalorder %s92, %s108
    %p110 = scmp.eq.s32.totalorder %s16, 0
    %p111 = por %p109, %p110
    %s112 = ssub.s32 %s10, %s17
    %p113 = scmp.eq.s32.totalorder %s112, 0
    %s115 = sadd.s32 %s114, 1
    %s116 = scalar_select %p113, %s114, %s115
    %p119 = pneg %p113
    %p120 = scmp.eq.s32.totalorder %s10, 2
    %p121 = por %p119, %p120
    %p122 = scmp.ne.s32.totalorder %s114, %s117
    %p123 = scmp.eq.s32.totalorder %s10, 0
    %p124 = por %p122, %p123
    %p125 = scmp.ne.s32.totalorder %s114, %s117
    %p126 = scmp.eq.s32.totalorder %s15, 2
    %p127 = por %p125, %p126
    %p128 = scmp.ne.s32.totalorder %s117, %s118
    %p129 = scmp.eq.s32.totalorder %s15, 0
    %p130 = por %p128, %p129
    %p131 = scmp.ne.s32.totalorder %s117, %s118
    %p132 = scmp.eq.s32.totalorder %s16, 2
    %p133 = por %p131, %p132
    %p135 = scmp.ne.s32.totalorder %s118, %s134
    %p136 = scmp.eq.s32.totalorder %s16, 0
    %p137 = por %p135, %p136
    %p138 = scmp.le.s32.totalorder 1, %s10
    %p139 = scmp.lt.s32.totalorder %s10, 4
    %p140 = pnand %p138, %p139
    %p141 = pneg %p140
    // Predicated region
    $region9: #{gin_convnet_forward.26} parent=5 // pred_check
      _
    $region10: #{gin_convnet_forward.26} parent=5 // pred_check_branch
      %143 = sbr.rel (%p140) target = $region12
    $region11: #{gin_convnet_forward.26} parent=5 // pred_region
      %s144 = ssub.s32 %s10, 1
      // Predicated region
      $region13: #{gin_convnet_forward.26} parent=11 // pred_check
        %p145 = pneg %p57
      $region14: #{gin_convnet_forward.26} parent=11 // pred_check_branch
        %147 = sbr.rel (%p145) target = $region16
      $region15: #{gin_convnet_forward.26} parent=11 // pred_region
        _
      $region16: #{gin_convnet_forward.26} parent=11 // pred_fallthru
        _
      // Predicated region
      $region17: #{gin_convnet_forward.26} parent=11 // pred_check
        %p148 = pneg %p78
      $region18: #{gin_convnet_forward.26} parent=11 // pred_check_branch
        %150 = sbr.rel (%p148) target = $region20
      $region19: #{gin_convnet_forward.26} parent=11 // pred_region
        _
      $region20: #{gin_convnet_forward.26} parent=11 // pred_fallthru
        _
    $region12: #{gin_convnet_forward.26} parent=5 // pred_fallthru
      _
    %p151 = scmp.lt.s32.totalorder %s10, 3
    // Predicated region
    $region21: #{gin_convnet_forward.26} parent=5 // pred_check
      %p152 = pneg %p151
    $region22: #{gin_convnet_forward.26} parent=5 // pred_check_branch
      %154 = sbr.rel (%p152) target = $region24
    $region23: #{gin_convnet_forward.26} parent=5 // pred_region
      // Predicated region
      $region25: #{gin_convnet_forward.26} parent=23 // pred_check
        %p155 = pneg %p30
      $region26: #{gin_convnet_forward.26} parent=23 // pred_check_branch
        %157 = sbr.rel (%p155) target = $region28
      $region27: #{gin_convnet_forward.26} parent=23 // pred_region
        %s158 = smul.u32 2, %s10
        %p159 = scmp.lt.s32.totalorder %s158, 5
        %s160 = scalar_select %p159, %s158, 5
        %s161 = smul.addr %s160, 2
        %s162 = smul.addr %s161, 8
        %s163 = scalar_lea.vmem %s0, %s162
        %s164 = smul.u32 2, %s10
      $region28: #{gin_convnet_forward.26} parent=23 // pred_fallthru
        _
      // Predicated region
      $region29: #{gin_convnet_forward.26} parent=23 // pred_check
        %p165 = pneg %p98
      $region30: #{gin_convnet_forward.26} parent=23 // pred_check_branch
        %167 = sbr.rel (%p165) target = $region32
      $region31: #{gin_convnet_forward.26} parent=23 // pred_region
        %s168 = smul.u32 2, %s10
        %p169 = scmp.lt.s32.totalorder %s168, 5
        %s170 = scalar_select %p169, %s168, 5
        %s171 = smul.addr %s170, 8
        %s172 = scalar_lea.vmem %s3, %s171
        %s173 = smul.u32 2, %s10
      $region32: #{gin_convnet_forward.26} parent=23 // pred_fallthru
        _
    $region24: #{gin_convnet_forward.26} parent=5 // pred_fallthru
      _
    %p174 = scmp.le.s32.totalorder 1, %s10
    %p175 = scmp.lt.s32.totalorder %s10, 4
    %p176 = pnand %p174, %p175
    %p177 = pneg %p176
    // Predicated region
    $region33: #{gin_convnet_forward.26} parent=5 // pred_check
      _
    $region34: #{gin_convnet_forward.26} parent=5 // pred_check_branch
      %179 = sbr.rel (%p176) target = $region36
    $region35: #{gin_convnet_forward.26} parent=5 // pred_region
      %s180 = ssub.s32 %s10, 1
      %s181 = smul.u32 2, %s15
      %p182 = scmp.lt.s32.totalorder %s181, 5
      %s183 = scalar_select %p182, %s181, 5
      %s184 = smul.addr %s183, 2
      %s185 = smul.addr %s184, 8
      %s186 = scalar_lea.vmem %s0, %s185
      %p187 = pneg %p36
      %p188 = pneg %p33
      %p189 = pneg %p57
      %p190 = pneg %p54
      %p191 = pneg %p78
      %p192 = pneg %p75
      %s193 = smul.u32 2, %s15
      %p194 = scmp.lt.s32.totalorder %s193, 5
      %s195 = scalar_select %p194, %s193, 5
      %s196 = smul.addr %s195, 8
      %s197 = scalar_lea.vmem %s3, %s196
      %p198 = pneg %p104
      %p199 = pneg %p101
      %p200 = pneg %p130
      %p201 = pneg %p127
      %p202 = scmp.lt.s32.totalorder %s15, 2
      %s203 = scalar_select %p202, %s15, 2
      %s204 = smul.addr %s203, 2
      %s205 = smul.addr %s204, 2
      %s206 = scalar_lea.vmem %s4, %s205
      %s207 = smul.u32 2, %s15
      %p208 = scmp.lt.s32.totalorder %s207, 5
      %s209 = scalar_select %p208, %s207, 5
      %s210 = smul.addr %s209, 2
      %s211 = smul.addr %s210, 8
      %s212 = scalar_lea.vmem %s0, %s211
      %s213 = smul.u32 2, %s15
      %s214 = smul.u32 2, %s15
      %p215 = scmp.lt.s32.totalorder %s214, 5
      %s216 = scalar_select %p215, %s214, 5
      %s217 = smul.addr %s216, 8
      %s218 = scalar_lea.vmem %s3, %s217
      %s219 = smul.u32 2, %s15
      %p220 = scmp.lt.s32.totalorder %s15, 2
      %s221 = scalar_select %p220, %s15, 2
      %s222 = smul.addr %s221, 2
      %s223 = smul.addr %s222, 2
      %s224 = scalar_lea.vmem %s4, %s223
      %v225 = vld [vmem:[%s212] sm:$0xff]
      %v226 = vld [vmem:[%s212 + $0x8] sm:$0xff]
      %v227 = vld [vmem:[%s212 + $0x10] sm:$0xff]
      %v228 = vld [vmem:[%s212 + $0x18] sm:$0xff]
      %v229 = vmax.f32 %v225, 0.0
      %v230 = vmax.f32 %v226, 0.0
      %v231 = vmax.f32 %v227, 0.0
      %v232 = vmax.f32 %v228, 0.0
      %v233 = vld [vmem:[%s1] sm:$0x3]
      %v235 = vlaneseq
      %v236 = vshrl.u32 %v235, 7
      %v237 = vsub.s32 0, %v236
      %v238 = vrot.slane %v233, %v237
      %v239 = vlaneseq
      %v240 = vshrl.u32 %v239, 7
      %v241 = vsub.s32 1, %v240
      %v242 = vrot.slane %v233, %v241
      %v245 = vmul.f32 %v229, %v238
      %v246 = vmul.f32 %v230, %v242
      %v247 = vmul.f32 %v231, %v238
      %v248 = vmul.f32 %v232, %v242
      %v249 = vld [vmem:[%s2] sm:$0x3]
      %v251 = vlaneseq
      %v252 = vshrl.u32 %v251, 7
      %v253 = vsub.s32 0, %v252
      %v254 = vrot.slane %v249, %v253
      %v255 = vlaneseq
      %v256 = vshrl.u32 %v255, 7
      %v257 = vsub.s32 1, %v256
      %v258 = vrot.slane %v249, %v257
      %v261 = vadd.f32 %v245, %v254
      %v262 = vadd.f32 %v246, %v258
      %v263 = vadd.f32 %v247, %v254
      %v264 = vadd.f32 %v248, %v258
      %v265 = vld [vmem:[%s218] sm:$0xff]
      %v266 = vld [vmem:[%s218 + $0x8] sm:$0xff]
      %vm267 = vcmp.eq.s32.totalorder %v265, 0
      %vm268 = vcmp.eq.s32.totalorder %v266, 0
      %v269 = vsel %vm267, 1, 0
      %v270 = vsel %vm268, 1, 0
      %271 = vset.pattern.permute.xlu0 0
      %272 = vperm.xlu0 %271, %v269
      %v273 = vpop.permute.xlu0 %272
      %274 = vset.pattern.permute.xlu0 0
      %275 = vperm.xlu0 %274, %v270
      %v276 = vpop.permute.xlu0 %275
      %vm277 = vcmp.eq.s32.totalorder %v273, 1
      %vm278 = vcmp.eq.s32.totalorder %v276, 1
      %v279 = vsel %vm277, %v261, 0.0
      %v280 = vsel %vm277, %v262, 0.0
      %v281 = vsel %vm278, %v263, 0.0
      %v282 = vsel %vm278, %v264, 0.0
      %v283 = vadd.f32 %v279, %v281
      %v284 = vrot.slane %v283, 4
      %v285 = vadd.f32 %v283, %v284
      %v286 = vrot.slane %v285, 2
      %v287 = vadd.f32 %v285, %v286
      %v288 = vrot.slane %v287, 1
      %v289 = vadd.f32 %v287, %v288
      %v290 = vadd.f32 %v280, %v282
      %v291 = vrot.slane %v290, 4
      %v292 = vadd.f32 %v290, %v291
      %v293 = vrot.slane %v292, 2
      %v294 = vadd.f32 %v292, %v293
      %v295 = vrot.slane %v294, 1
      %v296 = vadd.f32 %v294, %v295
      %vm297 = vcmp.eq.s32.totalorder %v265, 1
      %vm298 = vcmp.eq.s32.totalorder %v266, 1
      %v299 = vsel %vm297, 1, 0
      %v300 = vsel %vm298, 1, 0
      %301 = vset.pattern.permute.xlu0 0
      %302 = vperm.xlu0 %301, %v299
      %v303 = vpop.permute.xlu0 %302
      %304 = vset.pattern.permute.xlu0 0
      %305 = vperm.xlu0 %304, %v300
      %v306 = vpop.permute.xlu0 %305
      %vm307 = vcmp.eq.s32.totalorder %v303, 1
      %vm308 = vcmp.eq.s32.totalorder %v306, 1
      %v309 = vsel %vm307, %v261, 0.0
      %v310 = vsel %vm307, %v262, 0.0
      %v311 = vsel %vm308, %v263, 0.0
      %v312 = vsel %vm308, %v264, 0.0
      %v313 = vadd.f32 %v309, %v311
      %v314 = vrot.slane %v313, 4
      %v315 = vadd.f32 %v313, %v314
      %v316 = vrot.slane %v315, 2
      %v317 = vadd.f32 %v315, %v316
      %v318 = vrot.slane %v317, 1
      %v319 = vadd.f32 %v317, %v318
      %v320 = vadd.f32 %v310, %v312
      %v321 = vrot.slane %v320, 4
      %v322 = vadd.f32 %v320, %v321
      %v323 = vrot.slane %v322, 2
      %v324 = vadd.f32 %v322, %v323
      %v325 = vrot.slane %v324, 1
      %v326 = vadd.f32 %v324, %v325
      %vm327 = vcmask 1040384
      %v328 = vsel %vm327, %v289, %v319
      %v329 = vsel %vm327, %v296, %v326
      %v332 = vcombine.low %v328, %v329
      %v334 = vunpack.c.l.s4 1983009808
      %v335 = vunpack.c.0.s8 %v334
      %v336 = vlaneseq
      %v337 = vshrl.u32 %v336, 7
      %v338 = vsub.s32 %v335, %v337
      %v339 = vrot.slane %v332, %v338
      %341 = vst [vmem:[%s224] sm:$0xf] %v339
      %p342 = scmp.lt.s32.totalorder %s15, 2
      %s343 = scalar_select %p342, %s15, 2
      %s344 = smul.addr %s343, 2
      %s345 = smul.addr %s344, 2
      %s346 = scalar_lea.vmem %s4, %s345
      // Predicated region
      $region37: #{gin_convnet_forward.26} parent=35 // pred_check
        %p347 = pneg %p127
      $region38: #{gin_convnet_forward.26} parent=35 // pred_check_branch
        %349 = sbr.rel (%p347) target = $region40
      $region39: #{gin_convnet_forward.26} parent=35 // pred_region
        _
      $region40: #{gin_convnet_forward.26} parent=35 // pred_fallthru
        _
    $region36: #{gin_convnet_forward.26} parent=5 // pred_fallthru
      _
    %p350 = scmp.le.s32.totalorder 2, %s10
    // Predicated region
    $region41: #{gin_convnet_forward.26} parent=5 // pred_check
      %p351 = pneg %p350
    $region42: #{gin_convnet_forward.26} parent=5 // pred_check_branch
      %353 = sbr.rel (%p351) target = $region44
    $region43: #{gin_convnet_forward.26} parent=5 // pred_region
      %s354 = ssub.s32 %s10, 2
      // Predicated region
      $region45: #{gin_convnet_forward.26} parent=43 // pred_check
        %p355 = pneg %p133
      $region46: #{gin_convnet_forward.26} parent=43 // pred_check_branch
        %357 = sbr.rel (%p355) target = $region48
      $region47: #{gin_convnet_forward.26} parent=43 // pred_region
        %p358 = scmp.lt.s32.totalorder %s16, 2
        %s359 = scalar_select %p358, %s16, 2
        %s360 = smul.addr %s359, 2
        %s361 = smul.addr %s360, 2
        %s362 = scalar_lea.vmem %s4, %s361
      $region48: #{gin_convnet_forward.26} parent=43 // pred_fallthru
        _
    $region44: #{gin_convnet_forward.26} parent=5 // pred_fallthru
      _
  $region6: #{gin_convnet_forward.26} parent=0 // loop_footer
    %s14 = sadd.s32 1, %s10
  $region7: #{gin_convnet_forward.26} parent=0 // loop_footer_branch
    %9 = sbr.rel target = $region3
  $region8: #{gin_convnet_forward.26} parent=0 // loop_exit
    _

</llo_original>
